<compile_context>
chip_gen: v7x
topology: tpu7x:2x2x1
jax: 0.10.0
libtpu: 0.0.40
codegen_flags: <defaults>
</compile_context>

<pallas_src>
import math
import functools

import jax
import jax.numpy as jnp
from jax import lax
from jax.experimental import pallas as pl
from jax.experimental.pallas import tpu as pltpu


# ----------------------------------------------------------------------------
# Pallas kernel
# ----------------------------------------------------------------------------
def rel_attn_kernel(len_ref, x_ref, wq_ref, bq_ref, wkv_ref, bkv_ref,
                    wo_ref, bo_ref, ekblk_ref, embv_ref, gamma_ref, beta_ref,
                    out_ref, *, n_heads, window_size, q_tile, eps):
    f32, bf16 = jnp.float32, jnp.bfloat16
    x = x_ref[0]                                   # (T, C) full sequence
    T, C = x.shape
    TQ = q_tile
    d = C // n_heads
    w = window_size
    W = 2 * w + 1

    # query rows handled by this grid step (also the residual input)
    q_start = pl.multiple_of(pl.program_id(1) * TQ, TQ)
    xq = x_ref[0, pl.ds(q_start, TQ), :]           # (TQ, C)

    # --- projections: bf16 operands, f32 accumulation on the MXU -------------
    x16 = x.astype(bf16)
    xq16 = xq.astype(bf16)
    # Q is pre-scaled by 1/sqrt(d) (folded into wq/bq at pack_params time).
    q = jnp.dot(xq16, wq_ref[...], preferred_element_type=f32) + bq_ref[...]     # (TQ, C)
    kv = jnp.dot(x16, wkv_ref[...], preferred_element_type=f32) + bkv_ref[...]   # (T, 2C)
    q16 = q.astype(bf16)
    k16 = kv[:, :C].astype(bf16)
    v16 = kv[:, C:].astype(bf16)

    # relative-key logits for ALL heads in one MXU matmul:
    #   qe_all[:, h*W + r] = q_h[i] . emb_rel_k[r]
    qe_all = jnp.dot(q16, ekblk_ref[...], preferred_element_type=f32)            # (TQ, H*W)

    # --- head-invariant tensors (hoisted out of the head loop) ---------------
    length = len_ref[pl.program_id(0)]
    row = q_start + lax.broadcasted_iota(jnp.int32, (TQ, T), 0)   # absolute query idx
    col = lax.broadcasted_iota(jnp.int32, (TQ, T), 1)             # key idx
    diff = col - row
    valid = (row < length) & (col < length)
    # NOTE: replace-semantics masked_fill (not an additive mask) so fully
    # padded query rows keep the reference's exact uniform-1/T behaviour;
    # the expensive iota/compare work is hoisted here regardless.

    emb_v = embv_ref[...]                          # (W, d) f32
    wo = wo_ref[...]                               # (C, C) bf16

    contract_last = (((1,), (1,)), ((), ()))       # A[m,k] . B[n,k] -> (m, n)

    # lane-dense f32 accumulator for attn_out @ Wo (no VMEM scratch, no
    # per-head masked column stores).
    acc = jnp.zeros((TQ, C), dtype=f32)

    # TODO(synk): switch to lax.fori_loop + pl.ds head slices if n_heads grows.
    for h in range(n_heads):
        sl = slice(h * d, (h + 1) * d)
        qh, kh, vh = q16[:, sl], k16[:, sl], v16[:, sl]

        # content scores (no explicit transpose)
        scores = lax.dot_general(qh, kh, contract_last,
                                 preferred_element_type=f32)                     # (TQ, T)

        # scatter relative-key logits onto the +/-w band:
        #   scores[i, j] += qe[i, w + (j - i)]   for |j - i| <= w
        qe = qe_all[:, h * W:(h + 1) * W]                                        # (TQ, W)
        for r in range(W):
            scores = scores + jnp.where(diff == (r - w), qe[:, r:r + 1], 0.0)

        scores = jnp.where(valid, scores, -10000.0)

        # softmax (f32, exact divide on the (TQ,1) denominator)
        m = jnp.max(scores, axis=-1, keepdims=True)
        e = jnp.exp(scores - m)
        p = e * (1.0 / jnp.sum(e, axis=-1, keepdims=True))

        # content output
        out_h = jnp.dot(p.astype(bf16), vh, preferred_element_type=f32)          # (TQ, d)

        # relative-value term: out_h[i] += p[i, i + r - w] * emb_rel_v[r]
        for r in range(W):
            wr = jnp.sum(jnp.where(diff == (r - w), p, 0.0),
                         axis=-1, keepdims=True)                                 # (TQ, 1)
            out_h = out_h + wr * emb_v[r:r + 1, :]

        # fold this head straight into the output projection
        acc = acc + jnp.dot(out_h.astype(bf16), wo[sl, :],
                            preferred_element_type=f32)

    # --- output bias, dropout(=identity), residual, channel LayerNorm --------
    z = xq + acc + bo_ref[...]
    mu = jnp.mean(z, axis=-1, keepdims=True)
    zc = z - mu
    var = jnp.mean(zc * zc, axis=-1, keepdims=True)
    zn = zc * lax.rsqrt(var + eps)
    out_ref[0] = (zn * gamma_ref[...] + beta_ref[...]).astype(out_ref.dtype)


# ----------------------------------------------------------------------------
# Wrapper
# ----------------------------------------------------------------------------
def _vmem_limit_bytes():
    # Per-generation VMEM budget: ~96 MiB on 128-MiB parts (v5e/v6e),
    # ~48 MiB on 64-MiB parts (v7x).  Conservative fallback if the query fails.
    try:
        cap = int(pltpu.get_tpu_info().vmem_capacity_bytes)
    except Exception:
        cap = 64 * 1024 * 1024
    return int(min(96 * 1024 * 1024, (cap * 3) // 4))


def relative_attention_layer(x_btc, lengths, params, *, n_heads, window_size,
                             q_tile=None, eps=1e-5):
    """x_btc: (B, T, C) f32; lengths: (B,) int32; returns (B, T, C) f32."""
    B, T, C = x_btc.shape
    d = C // n_heads
    W = 2 * window_size + 1
    if q_tile is None:
        # flash-style query tiling keeps (TQ, T) tiles inside v7x's 64 MiB VMEM
        q_tile = T if (T <= 128 or T % 128 != 0) else 128
    assert T % q_tile == 0 and (q_tile == T or q_tile % 8 == 0)
    wq, bq, wkv, bkv, wo, bo, ekblk, embv, gamma, beta = params

    kern = functools.partial(rel_attn_kernel, n_heads=n_heads,
                             window_size=window_size, q_tile=q_tile, eps=eps)

    def rep(shape):                                # grid-invariant parameter block
        zeros = (0,) * len(shape)
        return pl.BlockSpec(shape, lambda b, qi, lens, _z=zeros: _z)

    grid_spec = pltpu.PrefetchScalarGridSpec(
        num_scalar_prefetch=1,                     # per-batch lengths -> SMEM
        grid=(B, T // q_tile),
        in_specs=[
            pl.BlockSpec((1, T, C), lambda b, qi, lens: (b, 0, 0)),  # x (full seq)
            rep((C, C)), rep((1, C)),              # Wq (1/sqrt(d) folded), bq
            rep((C, 2 * C)), rep((1, 2 * C)),      # fused Wkv, bkv
            rep((C, C)), rep((1, C)),              # Wo, bo
            rep((C, n_heads * W)),                 # block-diagonal emb_rel_k
            rep((W, d)),                           # emb_rel_v
            rep((1, C)), rep((1, C)),              # LayerNorm gamma, beta
        ],
        out_specs=pl.BlockSpec((1, q_tile, C), lambda b, qi, lens: (b, qi, 0)),
    )

    return pl.pallas_call(
        kern,
        out_shape=jax.ShapeDtypeStruct((B, T, C), jnp.float32),
        grid_spec=grid_spec,
        compiler_params=pltpu.CompilerParams(
            dimension_semantics=("parallel", "parallel"),
            vmem_limit_bytes=_vmem_limit_bytes()),
    )(lengths, x_btc, wq, bq, wkv, bkv, wo, bo, ekblk, embv, gamma, beta)


def pack_params(P, n_heads):
    """Pre-transpose / fuse / bf16-pack parameters for the kernel layout."""
    C = P['wq'].shape[0]
    d = C // n_heads
    scale = math.sqrt(d)
    bf16 = jnp.bfloat16
    f32 = jnp.float32
    wq = (P['wq'].T / scale).astype(bf16)                       # 1/sqrt(d) folded
    bq = (P['bq'] / scale).reshape(1, C).astype(f32)
    wkv = jnp.concatenate([P['wk'].T, P['wv'].T], axis=1).astype(bf16)
    bkv = jnp.concatenate([P['bk'], P['bv']]).reshape(1, 2 * C).astype(f32)
    wo = P['wo'].T.astype(bf16)
    bo = P['bo'].reshape(1, C).astype(f32)
    # block-diagonal (C, n_heads*W) relative-key table: head h block = emb_rel_k^T
    ekblk = jnp.kron(jnp.eye(n_heads, dtype=f32), P['emb_k'].T).astype(bf16)
    return (wq, bq, wkv, bkv, wo, bo, ekblk,
            P['emb_v'].astype(f32),
            P['gamma'].reshape(1, C).astype(f32),
            P['beta'].reshape(1, C).astype(f32))


# ----------------------------------------------------------------------------
# Pure-JAX reference (mirrors the PyTorch code, pad/reshape skew and all)
# ----------------------------------------------------------------------------
def ref_forward(x_bct, attn_mask, P, n_heads, window_size, eps=1e-5):
    B, C, T = x_bct.shape
    d = C // n_heads
    scale = math.sqrt(d)

    def conv1x1(x, w, b):   # w: (C_out, C_in), x: (B, C, T)
        return jnp.einsum('oc,bct->bot', w, x) + b[None, :, None]

    q = conv1x1(x_bct, P['wq'], P['bq'])
    k = conv1x1(x_bct, P['wk'], P['bk'])
    v = conv1x1(x_bct, P['wv'], P['bv'])

    def split(t):
        return t.reshape(B, n_heads, d, T).transpose(0, 1, 3, 2)

    query, key, value = split(q), split(k), split(v)
    scores = jnp.einsum('bhtd,bhsd->bhts', query / scale, key)

    pad_length = max(0, T - (window_size + 1))
    start = max(0, window_size + 1 - T)
    end = start + 2 * T - 1
    k_emb = jnp.pad(P['emb_k'], ((pad_length, pad_length), (0, 0)))[start:end]
    rel_logits = jnp.einsum('bhtd,md->bhtm', query / scale, k_emb)
    rel_logits = jnp.pad(rel_logits, ((0, 0), (0, 0), (0, 0), (0, 1)))
    rel_logits = rel_logits.reshape(B, n_heads, 2 * T * T)
    rel_logits = jnp.pad(rel_logits, ((0, 0), (0, 0), (0, T - 1)))
    scores_local = rel_logits.reshape(B, n_heads, T + 1, 2 * T - 1)[:, :, :T, T - 1:]
    scores = scores + scores_local

    scores = jnp.where(attn_mask == 0, -10000.0, scores)
    p = jax.nn.softmax(scores, axis=-1)
    output = jnp.einsum('bhts,bhsd->bhtd', p, value)

    p_pad = jnp.pad(p, ((0, 0), (0, 0), (0, 0), (0, T - 1)))
    p_pad = p_pad.reshape(B, n_heads, T * (2 * T - 1))
    p_pad = jnp.pad(p_pad, ((0, 0), (0, 0), (T, 0)))
    rel_w = p_pad.reshape(B, n_heads, T, 2 * T)[:, :, :, 1:]
    v_emb = jnp.pad(P['emb_v'], ((pad_length, pad_length), (0, 0)))[start:end]
    output = output + jnp.einsum('bhtm,md->bhtd', rel_w, v_emb)

    out_bct = output.transpose(0, 1, 3, 2).reshape(B, C, T)
    y = conv1x1(out_bct, P['wo'], P['bo'])

    z = (x_bct + y).transpose(0, 2, 1)   # (B, T, C)
    mu = z.mean(-1, keepdims=True)
    var = ((z - mu) ** 2).mean(-1, keepdims=True)
    zn = (z - mu) / jnp.sqrt(var + eps) * P['gamma'] + P['beta']
    return zn.transpose(0, 2, 1)          # (B, C, T)


# ----------------------------------------------------------------------------
if __name__ == "__main__":
    B, C, T = 2, 32, 16
    n_heads, window_size = 4, 4
    d = C // n_heads
    key = jax.random.PRNGKey(0)
    ks = jax.random.split(key, 12)

    def xavier(k, shape):
        fan_out, fan_in = shape
        a = math.sqrt(6.0 / (fan_in + fan_out))
        return jax.random.uniform(k, shape, jnp.float32, -a, a)

    P = dict(
        wq=xavier(ks[0], (C, C)), bq=0.1 * jax.random.normal(ks[1], (C,), jnp.float32),
        wk=xavier(ks[2], (C, C)), bk=0.1 * jax.random.normal(ks[3], (C,), jnp.float32),
        wv=xavier(ks[4], (C, C)), bv=0.1 * jax.random.normal(ks[5], (C,), jnp.float32),
        wo=xavier(ks[6], (C, C)), bo=0.1 * jax.random.normal(ks[7], (C,), jnp.float32),
        emb_k=(d ** -0.5) * jax.random.normal(ks[8], (2 * window_size + 1, d), jnp.float32),
        emb_v=(d ** -0.5) * jax.random.normal(ks[9], (2 * window_size + 1, d), jnp.float32),
        gamma=jnp.ones((C,), jnp.float32),
        beta=jnp.zeros((C,), jnp.float32),
    )

    x_bct = jax.random.normal(ks[10], (B, C, T), jnp.float32)      # PyTorch layout (B,C,T)
    lengths = jnp.array([T, T - 5], dtype=jnp.int32)
    key_mask = (jnp.arange(T)[None, :] < lengths[:, None]).astype(jnp.float32)   # (B, T)
    attn_mask = key_mask[:, None, None, :] * key_mask[:, None, :, None]          # (B,1,T,T)

    # kernel-side layouts
    x_btc = jnp.transpose(x_bct, (0, 2, 1))
    kernel_params = pack_params(P, n_heads)

    out_btc = relative_attention_layer(x_btc, lengths, kernel_params,
                                       n_heads=n_heads, window_size=window_size,
                                       q_tile=8)                   # 2 query tiles per batch
    out_btc = jax.block_until_ready(out_btc)
    out_bct = jnp.transpose(out_btc, (0, 2, 1))

    ref_bct = ref_forward(x_bct, attn_mask, P, n_heads, window_size)

    # Tolerance reflects bf16 MXU operands (per the performance review); the
    # softmax divide is exact and all softmax/LayerNorm math is f32, so the
    # typical error is ~1e-2 absolute on O(1)-magnitude LayerNorm outputs.
    if not jnp.allclose(out_bct, ref_bct, rtol=2e-2, atol=5e-2):
        err = float(jnp.max(jnp.abs(out_bct - ref_bct)))
        raise AssertionError(
            f"Pallas kernel output mismatch vs reference (max abs err {err})")

    print("KERNEL_OK")
</pallas_src>

<mosaic_0001>
module attributes {stable_mosaic.version = 11 : i64} {
  func.func @rel_attn_kernel(%arg0: i32, %arg1: i32, %arg2: memref<2xi32, #tpu.memory_space<smem>>, %arg3: memref<1x16x32xf32, #tpu.memory_space<vmem>>, %arg4: memref<32x32xbf16, #tpu.memory_space<vmem>>, %arg5: memref<1x32xf32, #tpu.memory_space<vmem>>, %arg6: memref<32x64xbf16, #tpu.memory_space<vmem>>, %arg7: memref<1x64xf32, #tpu.memory_space<vmem>>, %arg8: memref<32x32xbf16, #tpu.memory_space<vmem>>, %arg9: memref<1x32xf32, #tpu.memory_space<vmem>>, %arg10: memref<32x36xbf16, #tpu.memory_space<vmem>>, %arg11: memref<9x8xf32, #tpu.memory_space<vmem>>, %arg12: memref<1x32xf32, #tpu.memory_space<vmem>>, %arg13: memref<1x32xf32, #tpu.memory_space<vmem>>, %arg14: memref<1x8x32xf32, #tpu.memory_space<vmem>>) attributes {dimension_semantics = [#tpu.dimension_semantics<parallel>, #tpu.dimension_semantics<parallel>], iteration_bounds = array<i64: 2, 2>, scalar_prefetch = 1 : i64, scratch_operands = 0 : i64, tpu.core_type = #tpu.core_type<tc>, window_params = [{transform_indices = @transform_0, window_bounds = array<i64: 1, 16, 32>}, {pipeline_mode = #tpu.pipeline_mode<synchronous>, transform_indices = @transform_1, window_bounds = array<i64: 32, 32>}, {pipeline_mode = #tpu.pipeline_mode<synchronous>, transform_indices = @transform_2, window_bounds = array<i64: 1, 32>}, {pipeline_mode = #tpu.pipeline_mode<synchronous>, transform_indices = @transform_3, window_bounds = array<i64: 32, 64>}, {pipeline_mode = #tpu.pipeline_mode<synchronous>, transform_indices = @transform_4, window_bounds = array<i64: 1, 64>}, {pipeline_mode = #tpu.pipeline_mode<synchronous>, transform_indices = @transform_5, window_bounds = array<i64: 32, 32>}, {pipeline_mode = #tpu.pipeline_mode<synchronous>, transform_indices = @transform_6, window_bounds = array<i64: 1, 32>}, {pipeline_mode = #tpu.pipeline_mode<synchronous>, transform_indices = @transform_7, window_bounds = array<i64: 32, 36>}, {pipeline_mode = #tpu.pipeline_mode<synchronous>, transform_indices = @transform_8, window_bounds = array<i64: 9, 8>}, {pipeline_mode = #tpu.pipeline_mode<synchronous>, transform_indices = @transform_9, window_bounds = array<i64: 1, 32>}, {pipeline_mode = #tpu.pipeline_mode<synchronous>, transform_indices = @transform_10, window_bounds = array<i64: 1, 32>}, {transform_indices = @transform_11, window_bounds = array<i64: 1, 8, 32>}]} {
    %c0 = arith.constant 0 : index
    %c0_0 = arith.constant 0 : index
    %c0_1 = arith.constant 0 : index
    %0 = vector.load %arg3[%c0, %c0_0, %c0_1] : memref<1x16x32xf32, #tpu.memory_space<vmem>>, vector<1x16x32xf32>
    %1 = vector.shape_cast %0 : vector<1x16x32xf32> to vector<16x32xf32>
    %c8_i32 = arith.constant 8 : i32
    %2 = arith.muli %arg1, %c8_i32 : i32
    %3 = tpu.assume_multiple %2, 8 : i32
    %c0_2 = arith.constant 0 : index
    %4 = arith.index_cast %3 : i32 to index
    %c0_3 = arith.constant 0 : index
    %5 = vector.load %arg3[%c0_2, %4, %c0_3] : memref<1x16x32xf32, #tpu.memory_space<vmem>>, vector<1x8x32xf32>
    %6 = vector.shape_cast %5 : vector<1x8x32xf32> to vector<8x32xf32>
    %7 = arith.truncf %1 : vector<16x32xf32> to vector<16x32xbf16>
    %8 = arith.truncf %6 : vector<8x32xf32> to vector<8x32xbf16>
    %c0_4 = arith.constant 0 : index
    %c0_5 = arith.constant 0 : index
    %9 = vector.load %arg4[%c0_4, %c0_5] : memref<32x32xbf16, #tpu.memory_space<vmem>>, vector<32x32xbf16>
    %cst = arith.constant dense<0.000000e+00> : vector<8x32xf32>
    %10 = tpu.matmul %8, %9, %cst {dimension_numbers = #tpu.dot_dimension_numbers<[1], [0], [0], [1], [0, 0, 1, 1], [], []>} : vector<8x32xbf16>, vector<32x32xbf16>, vector<8x32xf32> -> vector<8x32xf32>
    %c0_6 = arith.constant 0 : index
    %c0_7 = arith.constant 0 : index
    %11 = vector.load %arg5[%c0_6, %c0_7] : memref<1x32xf32, #tpu.memory_space<vmem>>, vector<1x32xf32>
    %12 = vector.broadcast %11 : vector<1x32xf32> to vector<8x32xf32>
    %13 = arith.addf %10, %12 : vector<8x32xf32>
    %c0_8 = arith.constant 0 : index
    %c0_9 = arith.constant 0 : index
    %14 = vector.load %arg6[%c0_8, %c0_9] : memref<32x64xbf16, #tpu.memory_space<vmem>>, vector<32x64xbf16>
    %cst_10 = arith.constant dense<0.000000e+00> : vector<16x64xf32>
    %15 = tpu.matmul %7, %14, %cst_10 {dimension_numbers = #tpu.dot_dimension_numbers<[1], [0], [0], [1], [0, 0, 1, 1], [], []>} : vector<16x32xbf16>, vector<32x64xbf16>, vector<16x64xf32> -> vector<16x64xf32>
    %c0_11 = arith.constant 0 : index
    %c0_12 = arith.constant 0 : index
    %16 = vector.load %arg7[%c0_11, %c0_12] : memref<1x64xf32, #tpu.memory_space<vmem>>, vector<1x64xf32>
    %17 = vector.broadcast %16 : vector<1x64xf32> to vector<16x64xf32>
    %18 = arith.addf %15, %17 : vector<16x64xf32>
    %19 = arith.truncf %13 : vector<8x32xf32> to vector<8x32xbf16>
    %20 = vector.extract_strided_slice %18 {offsets = [0, 0], sizes = [16, 32], strides = [1, 1]} : vector<16x64xf32> to vector<16x32xf32>
    %21 = arith.truncf %20 : vector<16x32xf32> to vector<16x32xbf16>
    %22 = vector.extract_strided_slice %18 {offsets = [0, 32], sizes = [16, 32], strides = [1, 1]} : vector<16x64xf32> to vector<16x32xf32>
    %23 = arith.truncf %22 : vector<16x32xf32> to vector<16x32xbf16>
    %c0_13 = arith.constant 0 : index
    %c0_14 = arith.constant 0 : index
    %24 = vector.load %arg10[%c0_13, %c0_14] : memref<32x36xbf16, #tpu.memory_space<vmem>>, vector<32x36xbf16>
    %cst_15 = arith.constant dense<0.000000e+00> : vector<8x36xf32>
    %25 = tpu.matmul %19, %24, %cst_15 {dimension_numbers = #tpu.dot_dimension_numbers<[1], [0], [0], [1], [0, 0, 1, 1], [], []>} : vector<8x32xbf16>, vector<32x36xbf16>, vector<8x36xf32> -> vector<8x36xf32>
    %26 = arith.index_cast %arg0 : i32 to index
    %27 = memref.load %arg2[%26] : memref<2xi32, #tpu.memory_space<smem>>
    %28 = tpu.iota {dimensions = array<i32: 0>} : vector<8x16xi32>
    %29 = vector.broadcast %3 : i32 to vector<8x16xi32>
    %30 = arith.addi %29, %28 : vector<8x16xi32>
    %31 = tpu.iota {dimensions = array<i32: 1>} : vector<8x16xi32>
    %32 = arith.subi %31, %30 : vector<8x16xi32>
    %33 = vector.broadcast %27 : i32 to vector<8x16xi32>
    %34 = arith.cmpi slt, %30, %33 : vector<8x16xi32>
    %35 = vector.broadcast %27 : i32 to vector<8x16xi32>
    %36 = arith.cmpi slt, %31, %35 : vector<8x16xi32>
    %37 = arith.andi %34, %36 : vector<8x16xi1>
    %c0_16 = arith.constant 0 : index
    %c0_17 = arith.constant 0 : index
    %38 = vector.load %arg11[%c0_16, %c0_17] : memref<9x8xf32, #tpu.memory_space<vmem>>, vector<9x8xf32>
    %c0_18 = arith.constant 0 : index
    %c0_19 = arith.constant 0 : index
    %39 = vector.load %arg8[%c0_18, %c0_19] : memref<32x32xbf16, #tpu.memory_space<vmem>>, vector<32x32xbf16>
    %cst_20 = arith.constant 0.000000e+00 : f32
    %40 = vector.broadcast %cst_20 : f32 to vector<8x32xf32>
    %41 = vector.extract_strided_slice %19 {offsets = [0, 0], sizes = [8, 8], strides = [1, 1]} : vector<8x32xbf16> to vector<8x8xbf16>
    %42 = vector.extract_strided_slice %21 {offsets = [0, 0], sizes = [16, 8], strides = [1, 1]} : vector<16x32xbf16> to vector<16x8xbf16>
    %43 = vector.extract_strided_slice %23 {offsets = [0, 0], sizes = [16, 8], strides = [1, 1]} : vector<16x32xbf16> to vector<16x8xbf16>
    %cst_21 = arith.constant dense<0.000000e+00> : vector<8x16xf32>
    %44 = tpu.matmul %41, %42, %cst_21 {dimension_numbers = #tpu.dot_dimension_numbers<[1], [1], [0], [0], [0, 0, 1, 0], [], []>} : vector<8x8xbf16>, vector<16x8xbf16>, vector<8x16xf32> -> vector<8x16xf32>
    %45 = vector.extract_strided_slice %25 {offsets = [0, 0], sizes = [8, 9], strides = [1, 1]} : vector<8x36xf32> to vector<8x9xf32>
    %c-4_i32 = arith.constant -4 : i32
    %46 = vector.broadcast %c-4_i32 : i32 to vector<8x16xi32>
    %47 = arith.cmpi eq, %32, %46 : vector<8x16xi32>
    %48 = vector.extract_strided_slice %45 {offsets = [0, 0], sizes = [8, 1], strides = [1, 1]} : vector<8x9xf32> to vector<8x1xf32>
    %cst_22 = arith.constant 0.000000e+00 : f32
    %49 = vector.shape_cast %48 : vector<8x1xf32> to vector<8x1xf32>
    %50 = vector.broadcast %49 : vector<8x1xf32> to vector<8x16xf32>
    %51 = vector.broadcast %cst_22 : f32 to vector<8x16xf32>
    %52 = arith.select %47, %50, %51 : vector<8x16xi1>, vector<8x16xf32>
    %53 = arith.addf %44, %52 : vector<8x16xf32>
    %c-3_i32 = arith.constant -3 : i32
    %54 = vector.broadcast %c-3_i32 : i32 to vector<8x16xi32>
    %55 = arith.cmpi eq, %32, %54 : vector<8x16xi32>
    %56 = vector.extract_strided_slice %45 {offsets = [0, 1], sizes = [8, 1], strides = [1, 1]} : vector<8x9xf32> to vector<8x1xf32>
    %cst_23 = arith.constant 0.000000e+00 : f32
    %57 = vector.shape_cast %56 : vector<8x1xf32> to vector<8x1xf32>
    %58 = vector.broadcast %57 : vector<8x1xf32> to vector<8x16xf32>
    %59 = vector.broadcast %cst_23 : f32 to vector<8x16xf32>
    %60 = arith.select %55, %58, %59 : vector<8x16xi1>, vector<8x16xf32>
    %61 = arith.addf %53, %60 : vector<8x16xf32>
    %c-2_i32 = arith.constant -2 : i32
    %62 = vector.broadcast %c-2_i32 : i32 to vector<8x16xi32>
    %63 = arith.cmpi eq, %32, %62 : vector<8x16xi32>
    %64 = vector.extract_strided_slice %45 {offsets = [0, 2], sizes = [8, 1], strides = [1, 1]} : vector<8x9xf32> to vector<8x1xf32>
    %cst_24 = arith.constant 0.000000e+00 : f32
    %65 = vector.shape_cast %64 : vector<8x1xf32> to vector<8x1xf32>
    %66 = vector.broadcast %65 : vector<8x1xf32> to vector<8x16xf32>
    %67 = vector.broadcast %cst_24 : f32 to vector<8x16xf32>
    %68 = arith.select %63, %66, %67 : vector<8x16xi1>, vector<8x16xf32>
    %69 = arith.addf %61, %68 : vector<8x16xf32>
    %c-1_i32 = arith.constant -1 : i32
    %70 = vector.broadcast %c-1_i32 : i32 to vector<8x16xi32>
    %71 = arith.cmpi eq, %32, %70 : vector<8x16xi32>
    %72 = vector.extract_strided_slice %45 {offsets = [0, 3], sizes = [8, 1], strides = [1, 1]} : vector<8x9xf32> to vector<8x1xf32>
    %cst_25 = arith.constant 0.000000e+00 : f32
    %73 = vector.shape_cast %72 : vector<8x1xf32> to vector<8x1xf32>
    %74 = vector.broadcast %73 : vector<8x1xf32> to vector<8x16xf32>
    %75 = vector.broadcast %cst_25 : f32 to vector<8x16xf32>
    %76 = arith.select %71, %74, %75 : vector<8x16xi1>, vector<8x16xf32>
    %77 = arith.addf %69, %76 : vector<8x16xf32>
    %c0_i32 = arith.constant 0 : i32
    %78 = vector.broadcast %c0_i32 : i32 to vector<8x16xi32>
    %79 = arith.cmpi eq, %32, %78 : vector<8x16xi32>
    %80 = vector.extract_strided_slice %45 {offsets = [0, 4], sizes = [8, 1], strides = [1, 1]} : vector<8x9xf32> to vector<8x1xf32>
    %cst_26 = arith.constant 0.000000e+00 : f32
    %81 = vector.shape_cast %80 : vector<8x1xf32> to vector<8x1xf32>
    %82 = vector.broadcast %81 : vector<8x1xf32> to vector<8x16xf32>
    %83 = vector.broadcast %cst_26 : f32 to vector<8x16xf32>
    %84 = arith.select %79, %82, %83 : vector<8x16xi1>, vector<8x16xf32>
    %85 = arith.addf %77, %84 : vector<8x16xf32>
    %c1_i32 = arith.constant 1 : i32
    %86 = vector.broadcast %c1_i32 : i32 to vector<8x16xi32>
    %87 = arith.cmpi eq, %32, %86 : vector<8x16xi32>
    %88 = vector.extract_strided_slice %45 {offsets = [0, 5], sizes = [8, 1], strides = [1, 1]} : vector<8x9xf32> to vector<8x1xf32>
    %cst_27 = arith.constant 0.000000e+00 : f32
    %89 = vector.shape_cast %88 : vector<8x1xf32> to vector<8x1xf32>
    %90 = vector.broadcast %89 : vector<8x1xf32> to vector<8x16xf32>
    %91 = vector.broadcast %cst_27 : f32 to vector<8x16xf32>
    %92 = arith.select %87, %90, %91 : vector<8x16xi1>, vector<8x16xf32>
    %93 = arith.addf %85, %92 : vector<8x16xf32>
    %c2_i32 = arith.constant 2 : i32
    %94 = vector.broadcast %c2_i32 : i32 to vector<8x16xi32>
    %95 = arith.cmpi eq, %32, %94 : vector<8x16xi32>
    %96 = vector.extract_strided_slice %45 {offsets = [0, 6], sizes = [8, 1], strides = [1, 1]} : vector<8x9xf32> to vector<8x1xf32>
    %cst_28 = arith.constant 0.000000e+00 : f32
    %97 = vector.shape_cast %96 : vector<8x1xf32> to vector<8x1xf32>
    %98 = vector.broadcast %97 : vector<8x1xf32> to vector<8x16xf32>
    %99 = vector.broadcast %cst_28 : f32 to vector<8x16xf32>
    %100 = arith.select %95, %98, %99 : vector<8x16xi1>, vector<8x16xf32>
    %101 = arith.addf %93, %100 : vector<8x16xf32>
    %c3_i32 = arith.constant 3 : i32
    %102 = vector.broadcast %c3_i32 : i32 to vector<8x16xi32>
    %103 = arith.cmpi eq, %32, %102 : vector<8x16xi32>
    %104 = vector.extract_strided_slice %45 {offsets = [0, 7], sizes = [8, 1], strides = [1, 1]} : vector<8x9xf32> to vector<8x1xf32>
    %cst_29 = arith.constant 0.000000e+00 : f32
    %105 = vector.shape_cast %104 : vector<8x1xf32> to vector<8x1xf32>
    %106 = vector.broadcast %105 : vector<8x1xf32> to vector<8x16xf32>
    %107 = vector.broadcast %cst_29 : f32 to vector<8x16xf32>
    %108 = arith.select %103, %106, %107 : vector<8x16xi1>, vector<8x16xf32>
    %109 = arith.addf %101, %108 : vector<8x16xf32>
    %c4_i32 = arith.constant 4 : i32
    %110 = vector.broadcast %c4_i32 : i32 to vector<8x16xi32>
    %111 = arith.cmpi eq, %32, %110 : vector<8x16xi32>
    %112 = vector.extract_strided_slice %45 {offsets = [0, 8], sizes = [8, 1], strides = [1, 1]} : vector<8x9xf32> to vector<8x1xf32>
    %cst_30 = arith.constant 0.000000e+00 : f32
    %113 = vector.shape_cast %112 : vector<8x1xf32> to vector<8x1xf32>
    %114 = vector.broadcast %113 : vector<8x1xf32> to vector<8x16xf32>
    %115 = vector.broadcast %cst_30 : f32 to vector<8x16xf32>
    %116 = arith.select %111, %114, %115 : vector<8x16xi1>, vector<8x16xf32>
    %117 = arith.addf %109, %116 : vector<8x16xf32>
    %cst_31 = arith.constant -1.000000e+04 : f32
    %118 = vector.broadcast %cst_31 : f32 to vector<8x16xf32>
    %119 = arith.select %37, %117, %118 : vector<8x16xi1>, vector<8x16xf32>
    %cst_32 = arith.constant dense<0xFF800000> : vector<8xf32>
    %120 = vector.multi_reduction <maximumf>, %119, %cst_32 [1] : vector<8x16xf32> to vector<8xf32>
    %121 = vector.shape_cast %120 : vector<8xf32> to vector<8x1xf32>
    %122 = vector.broadcast %121 : vector<8x1xf32> to vector<8x16xf32>
    %123 = arith.subf %119, %122 : vector<8x16xf32>
    %124 = math.exp %123 : vector<8x16xf32>
    %cst_33 = arith.constant dense<0.000000e+00> : vector<8xf32>
    %125 = vector.multi_reduction <add>, %124, %cst_33 [1] : vector<8x16xf32> to vector<8xf32>
    %126 = vector.shape_cast %125 : vector<8xf32> to vector<8x1xf32>
    %cst_34 = arith.constant 1.000000e+00 : f32
    %127 = vector.broadcast %cst_34 : f32 to vector<8x1xf32>
    %128 = arith.divf %127, %126 : vector<8x1xf32>
    %129 = vector.broadcast %128 : vector<8x1xf32> to vector<8x16xf32>
    %130 = arith.mulf %124, %129 : vector<8x16xf32>
    %131 = arith.truncf %130 : vector<8x16xf32> to vector<8x16xbf16>
    %cst_35 = arith.constant dense<0.000000e+00> : vector<8x8xf32>
    %132 = tpu.matmul %131, %43, %cst_35 {dimension_numbers = #tpu.dot_dimension_numbers<[1], [0], [0], [1], [0, 0, 1, 1], [], []>} : vector<8x16xbf16>, vector<16x8xbf16>, vector<8x8xf32> -> vector<8x8xf32>
    %c-4_i32_36 = arith.constant -4 : i32
    %133 = vector.broadcast %c-4_i32_36 : i32 to vector<8x16xi32>
    %134 = arith.cmpi eq, %32, %133 : vector<8x16xi32>
    %cst_37 = arith.constant 0.000000e+00 : f32
    %135 = vector.broadcast %cst_37 : f32 to vector<8x16xf32>
    %136 = arith.select %134, %130, %135 : vector<8x16xi1>, vector<8x16xf32>
    %cst_38 = arith.constant dense<0.000000e+00> : vector<8xf32>
    %137 = vector.multi_reduction <add>, %136, %cst_38 [1] : vector<8x16xf32> to vector<8xf32>
    %138 = vector.shape_cast %137 : vector<8xf32> to vector<8x1xf32>
    %139 = vector.extract_strided_slice %38 {offsets = [0, 0], sizes = [1, 8], strides = [1, 1]} : vector<9x8xf32> to vector<1x8xf32>
    %140 = vector.broadcast %138 : vector<8x1xf32> to vector<8x8xf32>
    %141 = vector.broadcast %139 : vector<1x8xf32> to vector<8x8xf32>
    %142 = arith.mulf %140, %141 : vector<8x8xf32>
    %143 = arith.addf %132, %142 : vector<8x8xf32>
    %c-3_i32_39 = arith.constant -3 : i32
    %144 = vector.broadcast %c-3_i32_39 : i32 to vector<8x16xi32>
    %145 = arith.cmpi eq, %32, %144 : vector<8x16xi32>
    %cst_40 = arith.constant 0.000000e+00 : f32
    %146 = vector.broadcast %cst_40 : f32 to vector<8x16xf32>
    %147 = arith.select %145, %130, %146 : vector<8x16xi1>, vector<8x16xf32>
    %cst_41 = arith.constant dense<0.000000e+00> : vector<8xf32>
    %148 = vector.multi_reduction <add>, %147, %cst_41 [1] : vector<8x16xf32> to vector<8xf32>
    %149 = vector.shape_cast %148 : vector<8xf32> to vector<8x1xf32>
    %150 = vector.extract_strided_slice %38 {offsets = [1, 0], sizes = [1, 8], strides = [1, 1]} : vector<9x8xf32> to vector<1x8xf32>
    %151 = vector.broadcast %149 : vector<8x1xf32> to vector<8x8xf32>
    %152 = vector.broadcast %150 : vector<1x8xf32> to vector<8x8xf32>
    %153 = arith.mulf %151, %152 : vector<8x8xf32>
    %154 = arith.addf %143, %153 : vector<8x8xf32>
    %c-2_i32_42 = arith.constant -2 : i32
    %155 = vector.broadcast %c-2_i32_42 : i32 to vector<8x16xi32>
    %156 = arith.cmpi eq, %32, %155 : vector<8x16xi32>
    %cst_43 = arith.constant 0.000000e+00 : f32
    %157 = vector.broadcast %cst_43 : f32 to vector<8x16xf32>
    %158 = arith.select %156, %130, %157 : vector<8x16xi1>, vector<8x16xf32>
    %cst_44 = arith.constant dense<0.000000e+00> : vector<8xf32>
    %159 = vector.multi_reduction <add>, %158, %cst_44 [1] : vector<8x16xf32> to vector<8xf32>
    %160 = vector.shape_cast %159 : vector<8xf32> to vector<8x1xf32>
    %161 = vector.extract_strided_slice %38 {offsets = [2, 0], sizes = [1, 8], strides = [1, 1]} : vector<9x8xf32> to vector<1x8xf32>
    %162 = vector.broadcast %160 : vector<8x1xf32> to vector<8x8xf32>
    %163 = vector.broadcast %161 : vector<1x8xf32> to vector<8x8xf32>
    %164 = arith.mulf %162, %163 : vector<8x8xf32>
    %165 = arith.addf %154, %164 : vector<8x8xf32>
    %c-1_i32_45 = arith.constant -1 : i32
    %166 = vector.broadcast %c-1_i32_45 : i32 to vector<8x16xi32>
    %167 = arith.cmpi eq, %32, %166 : vector<8x16xi32>
    %cst_46 = arith.constant 0.000000e+00 : f32
    %168 = vector.broadcast %cst_46 : f32 to vector<8x16xf32>
    %169 = arith.select %167, %130, %168 : vector<8x16xi1>, vector<8x16xf32>
    %cst_47 = arith.constant dense<0.000000e+00> : vector<8xf32>
    %170 = vector.multi_reduction <add>, %169, %cst_47 [1] : vector<8x16xf32> to vector<8xf32>
    %171 = vector.shape_cast %170 : vector<8xf32> to vector<8x1xf32>
    %172 = vector.extract_strided_slice %38 {offsets = [3, 0], sizes = [1, 8], strides = [1, 1]} : vector<9x8xf32> to vector<1x8xf32>
    %173 = vector.broadcast %171 : vector<8x1xf32> to vector<8x8xf32>
    %174 = vector.broadcast %172 : vector<1x8xf32> to vector<8x8xf32>
    %175 = arith.mulf %173, %174 : vector<8x8xf32>
    %176 = arith.addf %165, %175 : vector<8x8xf32>
    %c0_i32_48 = arith.constant 0 : i32
    %177 = vector.broadcast %c0_i32_48 : i32 to vector<8x16xi32>
    %178 = arith.cmpi eq, %32, %177 : vector<8x16xi32>
    %cst_49 = arith.constant 0.000000e+00 : f32
    %179 = vector.broadcast %cst_49 : f32 to vector<8x16xf32>
    %180 = arith.select %178, %130, %179 : vector<8x16xi1>, vector<8x16xf32>
    %cst_50 = arith.constant dense<0.000000e+00> : vector<8xf32>
    %181 = vector.multi_reduction <add>, %180, %cst_50 [1] : vector<8x16xf32> to vector<8xf32>
    %182 = vector.shape_cast %181 : vector<8xf32> to vector<8x1xf32>
    %183 = vector.extract_strided_slice %38 {offsets = [4, 0], sizes = [1, 8], strides = [1, 1]} : vector<9x8xf32> to vector<1x8xf32>
    %184 = vector.broadcast %182 : vector<8x1xf32> to vector<8x8xf32>
    %185 = vector.broadcast %183 : vector<1x8xf32> to vector<8x8xf32>
    %186 = arith.mulf %184, %185 : vector<8x8xf32>
    %187 = arith.addf %176, %186 : vector<8x8xf32>
    %c1_i32_51 = arith.constant 1 : i32
    %188 = vector.broadcast %c1_i32_51 : i32 to vector<8x16xi32>
    %189 = arith.cmpi eq, %32, %188 : vector<8x16xi32>
    %cst_52 = arith.constant 0.000000e+00 : f32
    %190 = vector.broadcast %cst_52 : f32 to vector<8x16xf32>
    %191 = arith.select %189, %130, %190 : vector<8x16xi1>, vector<8x16xf32>
    %cst_53 = arith.constant dense<0.000000e+00> : vector<8xf32>
    %192 = vector.multi_reduction <add>, %191, %cst_53 [1] : vector<8x16xf32> to vector<8xf32>
    %193 = vector.shape_cast %192 : vector<8xf32> to vector<8x1xf32>
    %194 = vector.extract_strided_slice %38 {offsets = [5, 0], sizes = [1, 8], strides = [1, 1]} : vector<9x8xf32> to vector<1x8xf32>
    %195 = vector.broadcast %193 : vector<8x1xf32> to vector<8x8xf32>
    %196 = vector.broadcast %194 : vector<1x8xf32> to vector<8x8xf32>
    %197 = arith.mulf %195, %196 : vector<8x8xf32>
    %198 = arith.addf %187, %197 : vector<8x8xf32>
    %c2_i32_54 = arith.constant 2 : i32
    %199 = vector.broadcast %c2_i32_54 : i32 to vector<8x16xi32>
    %200 = arith.cmpi eq, %32, %199 : vector<8x16xi32>
    %cst_55 = arith.constant 0.000000e+00 : f32
    %201 = vector.broadcast %cst_55 : f32 to vector<8x16xf32>
    %202 = arith.select %200, %130, %201 : vector<8x16xi1>, vector<8x16xf32>
    %cst_56 = arith.constant dense<0.000000e+00> : vector<8xf32>
    %203 = vector.multi_reduction <add>, %202, %cst_56 [1] : vector<8x16xf32> to vector<8xf32>
    %204 = vector.shape_cast %203 : vector<8xf32> to vector<8x1xf32>
    %205 = vector.extract_strided_slice %38 {offsets = [6, 0], sizes = [1, 8], strides = [1, 1]} : vector<9x8xf32> to vector<1x8xf32>
    %206 = vector.broadcast %204 : vector<8x1xf32> to vector<8x8xf32>
    %207 = vector.broadcast %205 : vector<1x8xf32> to vector<8x8xf32>
    %208 = arith.mulf %206, %207 : vector<8x8xf32>
    %209 = arith.addf %198, %208 : vector<8x8xf32>
    %c3_i32_57 = arith.constant 3 : i32
    %210 = vector.broadcast %c3_i32_57 : i32 to vector<8x16xi32>
    %211 = arith.cmpi eq, %32, %210 : vector<8x16xi32>
    %cst_58 = arith.constant 0.000000e+00 : f32
    %212 = vector.broadcast %cst_58 : f32 to vector<8x16xf32>
    %213 = arith.select %211, %130, %212 : vector<8x16xi1>, vector<8x16xf32>
    %cst_59 = arith.constant dense<0.000000e+00> : vector<8xf32>
    %214 = vector.multi_reduction <add>, %213, %cst_59 [1] : vector<8x16xf32> to vector<8xf32>
    %215 = vector.shape_cast %214 : vector<8xf32> to vector<8x1xf32>
    %216 = vector.extract_strided_slice %38 {offsets = [7, 0], sizes = [1, 8], strides = [1, 1]} : vector<9x8xf32> to vector<1x8xf32>
    %217 = vector.broadcast %215 : vector<8x1xf32> to vector<8x8xf32>
    %218 = vector.broadcast %216 : vector<1x8xf32> to vector<8x8xf32>
    %219 = arith.mulf %217, %218 : vector<8x8xf32>
    %220 = arith.addf %209, %219 : vector<8x8xf32>
    %c4_i32_60 = arith.constant 4 : i32
    %221 = vector.broadcast %c4_i32_60 : i32 to vector<8x16xi32>
    %222 = arith.cmpi eq, %32, %221 : vector<8x16xi32>
    %cst_61 = arith.constant 0.000000e+00 : f32
    %223 = vector.broadcast %cst_61 : f32 to vector<8x16xf32>
    %224 = arith.select %222, %130, %223 : vector<8x16xi1>, vector<8x16xf32>
    %cst_62 = arith.constant dense<0.000000e+00> : vector<8xf32>
    %225 = vector.multi_reduction <add>, %224, %cst_62 [1] : vector<8x16xf32> to vector<8xf32>
    %226 = vector.shape_cast %225 : vector<8xf32> to vector<8x1xf32>
    %227 = vector.extract_strided_slice %38 {offsets = [8, 0], sizes = [1, 8], strides = [1, 1]} : vector<9x8xf32> to vector<1x8xf32>
    %228 = vector.broadcast %226 : vector<8x1xf32> to vector<8x8xf32>
    %229 = vector.broadcast %227 : vector<1x8xf32> to vector<8x8xf32>
    %230 = arith.mulf %228, %229 : vector<8x8xf32>
    %231 = arith.addf %220, %230 : vector<8x8xf32>
    %232 = arith.truncf %231 : vector<8x8xf32> to vector<8x8xbf16>
    %233 = vector.extract_strided_slice %39 {offsets = [0, 0], sizes = [8, 32], strides = [1, 1]} : vector<32x32xbf16> to vector<8x32xbf16>
    %cst_63 = arith.constant dense<0.000000e+00> : vector<8x32xf32>
    %234 = tpu.matmul %232, %233, %cst_63 {dimension_numbers = #tpu.dot_dimension_numbers<[1], [0], [0], [1], [0, 0, 1, 1], [], []>} : vector<8x8xbf16>, vector<8x32xbf16>, vector<8x32xf32> -> vector<8x32xf32>
    %235 = arith.addf %40, %234 : vector<8x32xf32>
    %236 = vector.extract_strided_slice %19 {offsets = [0, 8], sizes = [8, 8], strides = [1, 1]} : vector<8x32xbf16> to vector<8x8xbf16>
    %237 = vector.extract_strided_slice %21 {offsets = [0, 8], sizes = [16, 8], strides = [1, 1]} : vector<16x32xbf16> to vector<16x8xbf16>
    %238 = vector.extract_strided_slice %23 {offsets = [0, 8], sizes = [16, 8], strides = [1, 1]} : vector<16x32xbf16> to vector<16x8xbf16>
    %cst_64 = arith.constant dense<0.000000e+00> : vector<8x16xf32>
    %239 = tpu.matmul %236, %237, %cst_64 {dimension_numbers = #tpu.dot_dimension_numbers<[1], [1], [0], [0], [0, 0, 1, 0], [], []>} : vector<8x8xbf16>, vector<16x8xbf16>, vector<8x16xf32> -> vector<8x16xf32>
    %240 = vector.extract_strided_slice %25 {offsets = [0, 9], sizes = [8, 9], strides = [1, 1]} : vector<8x36xf32> to vector<8x9xf32>
    %c-4_i32_65 = arith.constant -4 : i32
    %241 = vector.broadcast %c-4_i32_65 : i32 to vector<8x16xi32>
    %242 = arith.cmpi eq, %32, %241 : vector<8x16xi32>
    %243 = vector.extract_strided_slice %240 {offsets = [0, 0], sizes = [8, 1], strides = [1, 1]} : vector<8x9xf32> to vector<8x1xf32>
    %cst_66 = arith.constant 0.000000e+00 : f32
    %244 = vector.shape_cast %243 : vector<8x1xf32> to vector<8x1xf32>
    %245 = vector.broadcast %244 : vector<8x1xf32> to vector<8x16xf32>
    %246 = vector.broadcast %cst_66 : f32 to vector<8x16xf32>
    %247 = arith.select %242, %245, %246 : vector<8x16xi1>, vector<8x16xf32>
    %248 = arith.addf %239, %247 : vector<8x16xf32>
    %c-3_i32_67 = arith.constant -3 : i32
    %249 = vector.broadcast %c-3_i32_67 : i32 to vector<8x16xi32>
    %250 = arith.cmpi eq, %32, %249 : vector<8x16xi32>
    %251 = vector.extract_strided_slice %240 {offsets = [0, 1], sizes = [8, 1], strides = [1, 1]} : vector<8x9xf32> to vector<8x1xf32>
    %cst_68 = arith.constant 0.000000e+00 : f32
    %252 = vector.shape_cast %251 : vector<8x1xf32> to vector<8x1xf32>
    %253 = vector.broadcast %252 : vector<8x1xf32> to vector<8x16xf32>
    %254 = vector.broadcast %cst_68 : f32 to vector<8x16xf32>
    %255 = arith.select %250, %253, %254 : vector<8x16xi1>, vector<8x16xf32>
    %256 = arith.addf %248, %255 : vector<8x16xf32>
    %c-2_i32_69 = arith.constant -2 : i32
    %257 = vector.broadcast %c-2_i32_69 : i32 to vector<8x16xi32>
    %258 = arith.cmpi eq, %32, %257 : vector<8x16xi32>
    %259 = vector.extract_strided_slice %240 {offsets = [0, 2], sizes = [8, 1], strides = [1, 1]} : vector<8x9xf32> to vector<8x1xf32>
    %cst_70 = arith.constant 0.000000e+00 : f32
    %260 = vector.shape_cast %259 : vector<8x1xf32> to vector<8x1xf32>
    %261 = vector.broadcast %260 : vector<8x1xf32> to vector<8x16xf32>
    %262 = vector.broadcast %cst_70 : f32 to vector<8x16xf32>
    %263 = arith.select %258, %261, %262 : vector<8x16xi1>, vector<8x16xf32>
    %264 = arith.addf %256, %263 : vector<8x16xf32>
    %c-1_i32_71 = arith.constant -1 : i32
    %265 = vector.broadcast %c-1_i32_71 : i32 to vector<8x16xi32>
    %266 = arith.cmpi eq, %32, %265 : vector<8x16xi32>
    %267 = vector.extract_strided_slice %240 {offsets = [0, 3], sizes = [8, 1], strides = [1, 1]} : vector<8x9xf32> to vector<8x1xf32>
    %cst_72 = arith.constant 0.000000e+00 : f32
    %268 = vector.shape_cast %267 : vector<8x1xf32> to vector<8x1xf32>
    %269 = vector.broadcast %268 : vector<8x1xf32> to vector<8x16xf32>
    %270 = vector.broadcast %cst_72 : f32 to vector<8x16xf32>
    %271 = arith.select %266, %269, %270 : vector<8x16xi1>, vector<8x16xf32>
    %272 = arith.addf %264, %271 : vector<8x16xf32>
    %c0_i32_73 = arith.constant 0 : i32
    %273 = vector.broadcast %c0_i32_73 : i32 to vector<8x16xi32>
    %274 = arith.cmpi eq, %32, %273 : vector<8x16xi32>
    %275 = vector.extract_strided_slice %240 {offsets = [0, 4], sizes = [8, 1], strides = [1, 1]} : vector<8x9xf32> to vector<8x1xf32>
    %cst_74 = arith.constant 0.000000e+00 : f32
    %276 = vector.shape_cast %275 : vector<8x1xf32> to vector<8x1xf32>
    %277 = vector.broadcast %276 : vector<8x1xf32> to vector<8x16xf32>
    %278 = vector.broadcast %cst_74 : f32 to vector<8x16xf32>
    %279 = arith.select %274, %277, %278 : vector<8x16xi1>, vector<8x16xf32>
    %280 = arith.addf %272, %279 : vector<8x16xf32>
    %c1_i32_75 = arith.constant 1 : i32
    %281 = vector.broadcast %c1_i32_75 : i32 to vector<8x16xi32>
    %282 = arith.cmpi eq, %32, %281 : vector<8x16xi32>
    %283 = vector.extract_strided_slice %240 {offsets = [0, 5], sizes = [8, 1], strides = [1, 1]} : vector<8x9xf32> to vector<8x1xf32>
    %cst_76 = arith.constant 0.000000e+00 : f32
    %284 = vector.shape_cast %283 : vector<8x1xf32> to vector<8x1xf32>
    %285 = vector.broadcast %284 : vector<8x1xf32> to vector<8x16xf32>
    %286 = vector.broadcast %cst_76 : f32 to vector<8x16xf32>
    %287 = arith.select %282, %285, %286 : vector<8x16xi1>, vector<8x16xf32>
    %288 = arith.addf %280, %287 : vector<8x16xf32>
    %c2_i32_77 = arith.constant 2 : i32
    %289 = vector.broadcast %c2_i32_77 : i32 to vector<8x16xi32>
    %290 = arith.cmpi eq, %32, %289 : vector<8x16xi32>
    %291 = vector.extract_strided_slice %240 {offsets = [0, 6], sizes = [8, 1], strides = [1, 1]} : vector<8x9xf32> to vector<8x1xf32>
    %cst_78 = arith.constant 0.000000e+00 : f32
    %292 = vector.shape_cast %291 : vector<8x1xf32> to vector<8x1xf32>
    %293 = vector.broadcast %292 : vector<8x1xf32> to vector<8x16xf32>
    %294 = vector.broadcast %cst_78 : f32 to vector<8x16xf32>
    %295 = arith.select %290, %293, %294 : vector<8x16xi1>, vector<8x16xf32>
    %296 = arith.addf %288, %295 : vector<8x16xf32>
    %c3_i32_79 = arith.constant 3 : i32
    %297 = vector.broadcast %c3_i32_79 : i32 to vector<8x16xi32>
    %298 = arith.cmpi eq, %32, %297 : vector<8x16xi32>
    %299 = vector.extract_strided_slice %240 {offsets = [0, 7], sizes = [8, 1], strides = [1, 1]} : vector<8x9xf32> to vector<8x1xf32>
    %cst_80 = arith.constant 0.000000e+00 : f32
    %300 = vector.shape_cast %299 : vector<8x1xf32> to vector<8x1xf32>
    %301 = vector.broadcast %300 : vector<8x1xf32> to vector<8x16xf32>
    %302 = vector.broadcast %cst_80 : f32 to vector<8x16xf32>
    %303 = arith.select %298, %301, %302 : vector<8x16xi1>, vector<8x16xf32>
    %304 = arith.addf %296, %303 : vector<8x16xf32>
    %c4_i32_81 = arith.constant 4 : i32
    %305 = vector.broadcast %c4_i32_81 : i32 to vector<8x16xi32>
    %306 = arith.cmpi eq, %32, %305 : vector<8x16xi32>
    %307 = vector.extract_strided_slice %240 {offsets = [0, 8], sizes = [8, 1], strides = [1, 1]} : vector<8x9xf32> to vector<8x1xf32>
    %cst_82 = arith.constant 0.000000e+00 : f32
    %308 = vector.shape_cast %307 : vector<8x1xf32> to vector<8x1xf32>
    %309 = vector.broadcast %308 : vector<8x1xf32> to vector<8x16xf32>
    %310 = vector.broadcast %cst_82 : f32 to vector<8x16xf32>
    %311 = arith.select %306, %309, %310 : vector<8x16xi1>, vector<8x16xf32>
    %312 = arith.addf %304, %311 : vector<8x16xf32>
    %cst_83 = arith.constant -1.000000e+04 : f32
    %313 = vector.broadcast %cst_83 : f32 to vector<8x16xf32>
    %314 = arith.select %37, %312, %313 : vector<8x16xi1>, vector<8x16xf32>
    %cst_84 = arith.constant dense<0xFF800000> : vector<8xf32>
    %315 = vector.multi_reduction <maximumf>, %314, %cst_84 [1] : vector<8x16xf32> to vector<8xf32>
    %316 = vector.shape_cast %315 : vector<8xf32> to vector<8x1xf32>
    %317 = vector.broadcast %316 : vector<8x1xf32> to vector<8x16xf32>
    %318 = arith.subf %314, %317 : vector<8x16xf32>
    %319 = math.exp %318 : vector<8x16xf32>
    %cst_85 = arith.constant dense<0.000000e+00> : vector<8xf32>
    %320 = vector.multi_reduction <add>, %319, %cst_85 [1] : vector<8x16xf32> to vector<8xf32>
    %321 = vector.shape_cast %320 : vector<8xf32> to vector<8x1xf32>
    %cst_86 = arith.constant 1.000000e+00 : f32
    %322 = vector.broadcast %cst_86 : f32 to vector<8x1xf32>
    %323 = arith.divf %322, %321 : vector<8x1xf32>
    %324 = vector.broadcast %323 : vector<8x1xf32> to vector<8x16xf32>
    %325 = arith.mulf %319, %324 : vector<8x16xf32>
    %326 = arith.truncf %325 : vector<8x16xf32> to vector<8x16xbf16>
    %cst_87 = arith.constant dense<0.000000e+00> : vector<8x8xf32>
    %327 = tpu.matmul %326, %238, %cst_87 {dimension_numbers = #tpu.dot_dimension_numbers<[1], [0], [0], [1], [0, 0, 1, 1], [], []>} : vector<8x16xbf16>, vector<16x8xbf16>, vector<8x8xf32> -> vector<8x8xf32>
    %c-4_i32_88 = arith.constant -4 : i32
    %328 = vector.broadcast %c-4_i32_88 : i32 to vector<8x16xi32>
    %329 = arith.cmpi eq, %32, %328 : vector<8x16xi32>
    %cst_89 = arith.constant 0.000000e+00 : f32
    %330 = vector.broadcast %cst_89 : f32 to vector<8x16xf32>
    %331 = arith.select %329, %325, %330 : vector<8x16xi1>, vector<8x16xf32>
    %cst_90 = arith.constant dense<0.000000e+00> : vector<8xf32>
    %332 = vector.multi_reduction <add>, %331, %cst_90 [1] : vector<8x16xf32> to vector<8xf32>
    %333 = vector.shape_cast %332 : vector<8xf32> to vector<8x1xf32>
    %334 = vector.extract_strided_slice %38 {offsets = [0, 0], sizes = [1, 8], strides = [1, 1]} : vector<9x8xf32> to vector<1x8xf32>
    %335 = vector.broadcast %333 : vector<8x1xf32> to vector<8x8xf32>
    %336 = vector.broadcast %334 : vector<1x8xf32> to vector<8x8xf32>
    %337 = arith.mulf %335, %336 : vector<8x8xf32>
    %338 = arith.addf %327, %337 : vector<8x8xf32>
    %c-3_i32_91 = arith.constant -3 : i32
    %339 = vector.broadcast %c-3_i32_91 : i32 to vector<8x16xi32>
    %340 = arith.cmpi eq, %32, %339 : vector<8x16xi32>
    %cst_92 = arith.constant 0.000000e+00 : f32
    %341 = vector.broadcast %cst_92 : f32 to vector<8x16xf32>
    %342 = arith.select %340, %325, %341 : vector<8x16xi1>, vector<8x16xf32>
    %cst_93 = arith.constant dense<0.000000e+00> : vector<8xf32>
    %343 = vector.multi_reduction <add>, %342, %cst_93 [1] : vector<8x16xf32> to vector<8xf32>
    %344 = vector.shape_cast %343 : vector<8xf32> to vector<8x1xf32>
    %345 = vector.extract_strided_slice %38 {offsets = [1, 0], sizes = [1, 8], strides = [1, 1]} : vector<9x8xf32> to vector<1x8xf32>
    %346 = vector.broadcast %344 : vector<8x1xf32> to vector<8x8xf32>
    %347 = vector.broadcast %345 : vector<1x8xf32> to vector<8x8xf32>
    %348 = arith.mulf %346, %347 : vector<8x8xf32>
    %349 = arith.addf %338, %348 : vector<8x8xf32>
    %c-2_i32_94 = arith.constant -2 : i32
    %350 = vector.broadcast %c-2_i32_94 : i32 to vector<8x16xi32>
    %351 = arith.cmpi eq, %32, %350 : vector<8x16xi32>
    %cst_95 = arith.constant 0.000000e+00 : f32
    %352 = vector.broadcast %cst_95 : f32 to vector<8x16xf32>
    %353 = arith.select %351, %325, %352 : vector<8x16xi1>, vector<8x16xf32>
    %cst_96 = arith.constant dense<0.000000e+00> : vector<8xf32>
    %354 = vector.multi_reduction <add>, %353, %cst_96 [1] : vector<8x16xf32> to vector<8xf32>
    %355 = vector.shape_cast %354 : vector<8xf32> to vector<8x1xf32>
    %356 = vector.extract_strided_slice %38 {offsets = [2, 0], sizes = [1, 8], strides = [1, 1]} : vector<9x8xf32> to vector<1x8xf32>
    %357 = vector.broadcast %355 : vector<8x1xf32> to vector<8x8xf32>
    %358 = vector.broadcast %356 : vector<1x8xf32> to vector<8x8xf32>
    %359 = arith.mulf %357, %358 : vector<8x8xf32>
    %360 = arith.addf %349, %359 : vector<8x8xf32>
    %c-1_i32_97 = arith.constant -1 : i32
    %361 = vector.broadcast %c-1_i32_97 : i32 to vector<8x16xi32>
    %362 = arith.cmpi eq, %32, %361 : vector<8x16xi32>
    %cst_98 = arith.constant 0.000000e+00 : f32
    %363 = vector.broadcast %cst_98 : f32 to vector<8x16xf32>
    %364 = arith.select %362, %325, %363 : vector<8x16xi1>, vector<8x16xf32>
    %cst_99 = arith.constant dense<0.000000e+00> : vector<8xf32>
    %365 = vector.multi_reduction <add>, %364, %cst_99 [1] : vector<8x16xf32> to vector<8xf32>
    %366 = vector.shape_cast %365 : vector<8xf32> to vector<8x1xf32>
    %367 = vector.extract_strided_slice %38 {offsets = [3, 0], sizes = [1, 8], strides = [1, 1]} : vector<9x8xf32> to vector<1x8xf32>
    %368 = vector.broadcast %366 : vector<8x1xf32> to vector<8x8xf32>
    %369 = vector.broadcast %367 : vector<1x8xf32> to vector<8x8xf32>
    %370 = arith.mulf %368, %369 : vector<8x8xf32>
    %371 = arith.addf %360, %370 : vector<8x8xf32>
    %c0_i32_100 = arith.constant 0 : i32
    %372 = vector.broadcast %c0_i32_100 : i32 to vector<8x16xi32>
    %373 = arith.cmpi eq, %32, %372 : vector<8x16xi32>
    %cst_101 = arith.constant 0.000000e+00 : f32
    %374 = vector.broadcast %cst_101 : f32 to vector<8x16xf32>
    %375 = arith.select %373, %325, %374 : vector<8x16xi1>, vector<8x16xf32>
    %cst_102 = arith.constant dense<0.000000e+00> : vector<8xf32>
    %376 = vector.multi_reduction <add>, %375, %cst_102 [1] : vector<8x16xf32> to vector<8xf32>
    %377 = vector.shape_cast %376 : vector<8xf32> to vector<8x1xf32>
    %378 = vector.extract_strided_slice %38 {offsets = [4, 0], sizes = [1, 8], strides = [1, 1]} : vector<9x8xf32> to vector<1x8xf32>
    %379 = vector.broadcast %377 : vector<8x1xf32> to vector<8x8xf32>
    %380 = vector.broadcast %378 : vector<1x8xf32> to vector<8x8xf32>
    %381 = arith.mulf %379, %380 : vector<8x8xf32>
    %382 = arith.addf %371, %381 : vector<8x8xf32>
    %c1_i32_103 = arith.constant 1 : i32
    %383 = vector.broadcast %c1_i32_103 : i32 to vector<8x16xi32>
    %384 = arith.cmpi eq, %32, %383 : vector<8x16xi32>
    %cst_104 = arith.constant 0.000000e+00 : f32
    %385 = vector.broadcast %cst_104 : f32 to vector<8x16xf32>
    %386 = arith.select %384, %325, %385 : vector<8x16xi1>, vector<8x16xf32>
    %cst_105 = arith.constant dense<0.000000e+00> : vector<8xf32>
    %387 = vector.multi_reduction <add>, %386, %cst_105 [1] : vector<8x16xf32> to vector<8xf32>
    %388 = vector.shape_cast %387 : vector<8xf32> to vector<8x1xf32>
    %389 = vector.extract_strided_slice %38 {offsets = [5, 0], sizes = [1, 8], strides = [1, 1]} : vector<9x8xf32> to vector<1x8xf32>
    %390 = vector.broadcast %388 : vector<8x1xf32> to vector<8x8xf32>
    %391 = vector.broadcast %389 : vector<1x8xf32> to vector<8x8xf32>
    %392 = arith.mulf %390, %391 : vector<8x8xf32>
    %393 = arith.addf %382, %392 : vector<8x8xf32>
    %c2_i32_106 = arith.constant 2 : i32
    %394 = vector.broadcast %c2_i32_106 : i32 to vector<8x16xi32>
    %395 = arith.cmpi eq, %32, %394 : vector<8x16xi32>
    %cst_107 = arith.constant 0.000000e+00 : f32
    %396 = vector.broadcast %cst_107 : f32 to vector<8x16xf32>
    %397 = arith.select %395, %325, %396 : vector<8x16xi1>, vector<8x16xf32>
    %cst_108 = arith.constant dense<0.000000e+00> : vector<8xf32>
    %398 = vector.multi_reduction <add>, %397, %cst_108 [1] : vector<8x16xf32> to vector<8xf32>
    %399 = vector.shape_cast %398 : vector<8xf32> to vector<8x1xf32>
    %400 = vector.extract_strided_slice %38 {offsets = [6, 0], sizes = [1, 8], strides = [1, 1]} : vector<9x8xf32> to vector<1x8xf32>
    %401 = vector.broadcast %399 : vector<8x1xf32> to vector<8x8xf32>
    %402 = vector.broadcast %400 : vector<1x8xf32> to vector<8x8xf32>
    %403 = arith.mulf %401, %402 : vector<8x8xf32>
    %404 = arith.addf %393, %403 : vector<8x8xf32>
    %c3_i32_109 = arith.constant 3 : i32
    %405 = vector.broadcast %c3_i32_109 : i32 to vector<8x16xi32>
    %406 = arith.cmpi eq, %32, %405 : vector<8x16xi32>
    %cst_110 = arith.constant 0.000000e+00 : f32
    %407 = vector.broadcast %cst_110 : f32 to vector<8x16xf32>
    %408 = arith.select %406, %325, %407 : vector<8x16xi1>, vector<8x16xf32>
    %cst_111 = arith.constant dense<0.000000e+00> : vector<8xf32>
    %409 = vector.multi_reduction <add>, %408, %cst_111 [1] : vector<8x16xf32> to vector<8xf32>
    %410 = vector.shape_cast %409 : vector<8xf32> to vector<8x1xf32>
    %411 = vector.extract_strided_slice %38 {offsets = [7, 0], sizes = [1, 8], strides = [1, 1]} : vector<9x8xf32> to vector<1x8xf32>
    %412 = vector.broadcast %410 : vector<8x1xf32> to vector<8x8xf32>
    %413 = vector.broadcast %411 : vector<1x8xf32> to vector<8x8xf32>
    %414 = arith.mulf %412, %413 : vector<8x8xf32>
    %415 = arith.addf %404, %414 : vector<8x8xf32>
    %c4_i32_112 = arith.constant 4 : i32
    %416 = vector.broadcast %c4_i32_112 : i32 to vector<8x16xi32>
    %417 = arith.cmpi eq, %32, %416 : vector<8x16xi32>
    %cst_113 = arith.constant 0.000000e+00 : f32
    %418 = vector.broadcast %cst_113 : f32 to vector<8x16xf32>
    %419 = arith.select %417, %325, %418 : vector<8x16xi1>, vector<8x16xf32>
    %cst_114 = arith.constant dense<0.000000e+00> : vector<8xf32>
    %420 = vector.multi_reduction <add>, %419, %cst_114 [1] : vector<8x16xf32> to vector<8xf32>
    %421 = vector.shape_cast %420 : vector<8xf32> to vector<8x1xf32>
    %422 = vector.extract_strided_slice %38 {offsets = [8, 0], sizes = [1, 8], strides = [1, 1]} : vector<9x8xf32> to vector<1x8xf32>
    %423 = vector.broadcast %421 : vector<8x1xf32> to vector<8x8xf32>
    %424 = vector.broadcast %422 : vector<1x8xf32> to vector<8x8xf32>
    %425 = arith.mulf %423, %424 : vector<8x8xf32>
    %426 = arith.addf %415, %425 : vector<8x8xf32>
    %427 = arith.truncf %426 : vector<8x8xf32> to vector<8x8xbf16>
    %428 = vector.extract_strided_slice %39 {offsets = [8, 0], sizes = [8, 32], strides = [1, 1]} : vector<32x32xbf16> to vector<8x32xbf16>
    %cst_115 = arith.constant dense<0.000000e+00> : vector<8x32xf32>
    %429 = tpu.matmul %427, %428, %cst_115 {dimension_numbers = #tpu.dot_dimension_numbers<[1], [0], [0], [1], [0, 0, 1, 1], [], []>} : vector<8x8xbf16>, vector<8x32xbf16>, vector<8x32xf32> -> vector<8x32xf32>
    %430 = arith.addf %235, %429 : vector<8x32xf32>
    %431 = vector.extract_strided_slice %19 {offsets = [0, 16], sizes = [8, 8], strides = [1, 1]} : vector<8x32xbf16> to vector<8x8xbf16>
    %432 = vector.extract_strided_slice %21 {offsets = [0, 16], sizes = [16, 8], strides = [1, 1]} : vector<16x32xbf16> to vector<16x8xbf16>
    %433 = vector.extract_strided_slice %23 {offsets = [0, 16], sizes = [16, 8], strides = [1, 1]} : vector<16x32xbf16> to vector<16x8xbf16>
    %cst_116 = arith.constant dense<0.000000e+00> : vector<8x16xf32>
    %434 = tpu.matmul %431, %432, %cst_116 {dimension_numbers = #tpu.dot_dimension_numbers<[1], [1], [0], [0], [0, 0, 1, 0], [], []>} : vector<8x8xbf16>, vector<16x8xbf16>, vector<8x16xf32> -> vector<8x16xf32>
    %435 = vector.extract_strided_slice %25 {offsets = [0, 18], sizes = [8, 9], strides = [1, 1]} : vector<8x36xf32> to vector<8x9xf32>
    %c-4_i32_117 = arith.constant -4 : i32
    %436 = vector.broadcast %c-4_i32_117 : i32 to vector<8x16xi32>
    %437 = arith.cmpi eq, %32, %436 : vector<8x16xi32>
    %438 = vector.extract_strided_slice %435 {offsets = [0, 0], sizes = [8, 1], strides = [1, 1]} : vector<8x9xf32> to vector<8x1xf32>
    %cst_118 = arith.constant 0.000000e+00 : f32
    %439 = vector.shape_cast %438 : vector<8x1xf32> to vector<8x1xf32>
    %440 = vector.broadcast %439 : vector<8x1xf32> to vector<8x16xf32>
    %441 = vector.broadcast %cst_118 : f32 to vector<8x16xf32>
    %442 = arith.select %437, %440, %441 : vector<8x16xi1>, vector<8x16xf32>
    %443 = arith.addf %434, %442 : vector<8x16xf32>
    %c-3_i32_119 = arith.constant -3 : i32
    %444 = vector.broadcast %c-3_i32_119 : i32 to vector<8x16xi32>
    %445 = arith.cmpi eq, %32, %444 : vector<8x16xi32>
    %446 = vector.extract_strided_slice %435 {offsets = [0, 1], sizes = [8, 1], strides = [1, 1]} : vector<8x9xf32> to vector<8x1xf32>
    %cst_120 = arith.constant 0.000000e+00 : f32
    %447 = vector.shape_cast %446 : vector<8x1xf32> to vector<8x1xf32>
    %448 = vector.broadcast %447 : vector<8x1xf32> to vector<8x16xf32>
    %449 = vector.broadcast %cst_120 : f32 to vector<8x16xf32>
    %450 = arith.select %445, %448, %449 : vector<8x16xi1>, vector<8x16xf32>
    %451 = arith.addf %443, %450 : vector<8x16xf32>
    %c-2_i32_121 = arith.constant -2 : i32
    %452 = vector.broadcast %c-2_i32_121 : i32 to vector<8x16xi32>
    %453 = arith.cmpi eq, %32, %452 : vector<8x16xi32>
    %454 = vector.extract_strided_slice %435 {offsets = [0, 2], sizes = [8, 1], strides = [1, 1]} : vector<8x9xf32> to vector<8x1xf32>
    %cst_122 = arith.constant 0.000000e+00 : f32
    %455 = vector.shape_cast %454 : vector<8x1xf32> to vector<8x1xf32>
    %456 = vector.broadcast %455 : vector<8x1xf32> to vector<8x16xf32>
    %457 = vector.broadcast %cst_122 : f32 to vector<8x16xf32>
    %458 = arith.select %453, %456, %457 : vector<8x16xi1>, vector<8x16xf32>
    %459 = arith.addf %451, %458 : vector<8x16xf32>
    %c-1_i32_123 = arith.constant -1 : i32
    %460 = vector.broadcast %c-1_i32_123 : i32 to vector<8x16xi32>
    %461 = arith.cmpi eq, %32, %460 : vector<8x16xi32>
    %462 = vector.extract_strided_slice %435 {offsets = [0, 3], sizes = [8, 1], strides = [1, 1]} : vector<8x9xf32> to vector<8x1xf32>
    %cst_124 = arith.constant 0.000000e+00 : f32
    %463 = vector.shape_cast %462 : vector<8x1xf32> to vector<8x1xf32>
    %464 = vector.broadcast %463 : vector<8x1xf32> to vector<8x16xf32>
    %465 = vector.broadcast %cst_124 : f32 to vector<8x16xf32>
    %466 = arith.select %461, %464, %465 : vector<8x16xi1>, vector<8x16xf32>
    %467 = arith.addf %459, %466 : vector<8x16xf32>
    %c0_i32_125 = arith.constant 0 : i32
    %468 = vector.broadcast %c0_i32_125 : i32 to vector<8x16xi32>
    %469 = arith.cmpi eq, %32, %468 : vector<8x16xi32>
    %470 = vector.extract_strided_slice %435 {offsets = [0, 4], sizes = [8, 1], strides = [1, 1]} : vector<8x9xf32> to vector<8x1xf32>
    %cst_126 = arith.constant 0.000000e+00 : f32
    %471 = vector.shape_cast %470 : vector<8x1xf32> to vector<8x1xf32>
    %472 = vector.broadcast %471 : vector<8x1xf32> to vector<8x16xf32>
    %473 = vector.broadcast %cst_126 : f32 to vector<8x16xf32>
    %474 = arith.select %469, %472, %473 : vector<8x16xi1>, vector<8x16xf32>
    %475 = arith.addf %467, %474 : vector<8x16xf32>
    %c1_i32_127 = arith.constant 1 : i32
    %476 = vector.broadcast %c1_i32_127 : i32 to vector<8x16xi32>
    %477 = arith.cmpi eq, %32, %476 : vector<8x16xi32>
    %478 = vector.extract_strided_slice %435 {offsets = [0, 5], sizes = [8, 1], strides = [1, 1]} : vector<8x9xf32> to vector<8x1xf32>
    %cst_128 = arith.constant 0.000000e+00 : f32
    %479 = vector.shape_cast %478 : vector<8x1xf32> to vector<8x1xf32>
    %480 = vector.broadcast %479 : vector<8x1xf32> to vector<8x16xf32>
    %481 = vector.broadcast %cst_128 : f32 to vector<8x16xf32>
    %482 = arith.select %477, %480, %481 : vector<8x16xi1>, vector<8x16xf32>
    %483 = arith.addf %475, %482 : vector<8x16xf32>
    %c2_i32_129 = arith.constant 2 : i32
    %484 = vector.broadcast %c2_i32_129 : i32 to vector<8x16xi32>
    %485 = arith.cmpi eq, %32, %484 : vector<8x16xi32>
    %486 = vector.extract_strided_slice %435 {offsets = [0, 6], sizes = [8, 1], strides = [1, 1]} : vector<8x9xf32> to vector<8x1xf32>
    %cst_130 = arith.constant 0.000000e+00 : f32
    %487 = vector.shape_cast %486 : vector<8x1xf32> to vector<8x1xf32>
    %488 = vector.broadcast %487 : vector<8x1xf32> to vector<8x16xf32>
    %489 = vector.broadcast %cst_130 : f32 to vector<8x16xf32>
    %490 = arith.select %485, %488, %489 : vector<8x16xi1>, vector<8x16xf32>
    %491 = arith.addf %483, %490 : vector<8x16xf32>
    %c3_i32_131 = arith.constant 3 : i32
    %492 = vector.broadcast %c3_i32_131 : i32 to vector<8x16xi32>
    %493 = arith.cmpi eq, %32, %492 : vector<8x16xi32>
    %494 = vector.extract_strided_slice %435 {offsets = [0, 7], sizes = [8, 1], strides = [1, 1]} : vector<8x9xf32> to vector<8x1xf32>
    %cst_132 = arith.constant 0.000000e+00 : f32
    %495 = vector.shape_cast %494 : vector<8x1xf32> to vector<8x1xf32>
    %496 = vector.broadcast %495 : vector<8x1xf32> to vector<8x16xf32>
    %497 = vector.broadcast %cst_132 : f32 to vector<8x16xf32>
    %498 = arith.select %493, %496, %497 : vector<8x16xi1>, vector<8x16xf32>
    %499 = arith.addf %491, %498 : vector<8x16xf32>
    %c4_i32_133 = arith.constant 4 : i32
    %500 = vector.broadcast %c4_i32_133 : i32 to vector<8x16xi32>
    %501 = arith.cmpi eq, %32, %500 : vector<8x16xi32>
    %502 = vector.extract_strided_slice %435 {offsets = [0, 8], sizes = [8, 1], strides = [1, 1]} : vector<8x9xf32> to vector<8x1xf32>
    %cst_134 = arith.constant 0.000000e+00 : f32
    %503 = vector.shape_cast %502 : vector<8x1xf32> to vector<8x1xf32>
    %504 = vector.broadcast %503 : vector<8x1xf32> to vector<8x16xf32>
    %505 = vector.broadcast %cst_134 : f32 to vector<8x16xf32>
    %506 = arith.select %501, %504, %505 : vector<8x16xi1>, vector<8x16xf32>
    %507 = arith.addf %499, %506 : vector<8x16xf32>
    %cst_135 = arith.constant -1.000000e+04 : f32
    %508 = vector.broadcast %cst_135 : f32 to vector<8x16xf32>
    %509 = arith.select %37, %507, %508 : vector<8x16xi1>, vector<8x16xf32>
    %cst_136 = arith.constant dense<0xFF800000> : vector<8xf32>
    %510 = vector.multi_reduction <maximumf>, %509, %cst_136 [1] : vector<8x16xf32> to vector<8xf32>
    %511 = vector.shape_cast %510 : vector<8xf32> to vector<8x1xf32>
    %512 = vector.broadcast %511 : vector<8x1xf32> to vector<8x16xf32>
    %513 = arith.subf %509, %512 : vector<8x16xf32>
    %514 = math.exp %513 : vector<8x16xf32>
    %cst_137 = arith.constant dense<0.000000e+00> : vector<8xf32>
    %515 = vector.multi_reduction <add>, %514, %cst_137 [1] : vector<8x16xf32> to vector<8xf32>
    %516 = vector.shape_cast %515 : vector<8xf32> to vector<8x1xf32>
    %cst_138 = arith.constant 1.000000e+00 : f32
    %517 = vector.broadcast %cst_138 : f32 to vector<8x1xf32>
    %518 = arith.divf %517, %516 : vector<8x1xf32>
    %519 = vector.broadcast %518 : vector<8x1xf32> to vector<8x16xf32>
    %520 = arith.mulf %514, %519 : vector<8x16xf32>
    %521 = arith.truncf %520 : vector<8x16xf32> to vector<8x16xbf16>
    %cst_139 = arith.constant dense<0.000000e+00> : vector<8x8xf32>
    %522 = tpu.matmul %521, %433, %cst_139 {dimension_numbers = #tpu.dot_dimension_numbers<[1], [0], [0], [1], [0, 0, 1, 1], [], []>} : vector<8x16xbf16>, vector<16x8xbf16>, vector<8x8xf32> -> vector<8x8xf32>
    %c-4_i32_140 = arith.constant -4 : i32
    %523 = vector.broadcast %c-4_i32_140 : i32 to vector<8x16xi32>
    %524 = arith.cmpi eq, %32, %523 : vector<8x16xi32>
    %cst_141 = arith.constant 0.000000e+00 : f32
    %525 = vector.broadcast %cst_141 : f32 to vector<8x16xf32>
    %526 = arith.select %524, %520, %525 : vector<8x16xi1>, vector<8x16xf32>
    %cst_142 = arith.constant dense<0.000000e+00> : vector<8xf32>
    %527 = vector.multi_reduction <add>, %526, %cst_142 [1] : vector<8x16xf32> to vector<8xf32>
    %528 = vector.shape_cast %527 : vector<8xf32> to vector<8x1xf32>
    %529 = vector.extract_strided_slice %38 {offsets = [0, 0], sizes = [1, 8], strides = [1, 1]} : vector<9x8xf32> to vector<1x8xf32>
    %530 = vector.broadcast %528 : vector<8x1xf32> to vector<8x8xf32>
    %531 = vector.broadcast %529 : vector<1x8xf32> to vector<8x8xf32>
    %532 = arith.mulf %530, %531 : vector<8x8xf32>
    %533 = arith.addf %522, %532 : vector<8x8xf32>
    %c-3_i32_143 = arith.constant -3 : i32
    %534 = vector.broadcast %c-3_i32_143 : i32 to vector<8x16xi32>
    %535 = arith.cmpi eq, %32, %534 : vector<8x16xi32>
    %cst_144 = arith.constant 0.000000e+00 : f32
    %536 = vector.broadcast %cst_144 : f32 to vector<8x16xf32>
    %537 = arith.select %535, %520, %536 : vector<8x16xi1>, vector<8x16xf32>
    %cst_145 = arith.constant dense<0.000000e+00> : vector<8xf32>
    %538 = vector.multi_reduction <add>, %537, %cst_145 [1] : vector<8x16xf32> to vector<8xf32>
    %539 = vector.shape_cast %538 : vector<8xf32> to vector<8x1xf32>
    %540 = vector.extract_strided_slice %38 {offsets = [1, 0], sizes = [1, 8], strides = [1, 1]} : vector<9x8xf32> to vector<1x8xf32>
    %541 = vector.broadcast %539 : vector<8x1xf32> to vector<8x8xf32>
    %542 = vector.broadcast %540 : vector<1x8xf32> to vector<8x8xf32>
    %543 = arith.mulf %541, %542 : vector<8x8xf32>
    %544 = arith.addf %533, %543 : vector<8x8xf32>
    %c-2_i32_146 = arith.constant -2 : i32
    %545 = vector.broadcast %c-2_i32_146 : i32 to vector<8x16xi32>
    %546 = arith.cmpi eq, %32, %545 : vector<8x16xi32>
    %cst_147 = arith.constant 0.000000e+00 : f32
    %547 = vector.broadcast %cst_147 : f32 to vector<8x16xf32>
    %548 = arith.select %546, %520, %547 : vector<8x16xi1>, vector<8x16xf32>
    %cst_148 = arith.constant dense<0.000000e+00> : vector<8xf32>
    %549 = vector.multi_reduction <add>, %548, %cst_148 [1] : vector<8x16xf32> to vector<8xf32>
    %550 = vector.shape_cast %549 : vector<8xf32> to vector<8x1xf32>
    %551 = vector.extract_strided_slice %38 {offsets = [2, 0], sizes = [1, 8], strides = [1, 1]} : vector<9x8xf32> to vector<1x8xf32>
    %552 = vector.broadcast %550 : vector<8x1xf32> to vector<8x8xf32>
    %553 = vector.broadcast %551 : vector<1x8xf32> to vector<8x8xf32>
    %554 = arith.mulf %552, %553 : vector<8x8xf32>
    %555 = arith.addf %544, %554 : vector<8x8xf32>
    %c-1_i32_149 = arith.constant -1 : i32
    %556 = vector.broadcast %c-1_i32_149 : i32 to vector<8x16xi32>
    %557 = arith.cmpi eq, %32, %556 : vector<8x16xi32>
    %cst_150 = arith.constant 0.000000e+00 : f32
    %558 = vector.broadcast %cst_150 : f32 to vector<8x16xf32>
    %559 = arith.select %557, %520, %558 : vector<8x16xi1>, vector<8x16xf32>
    %cst_151 = arith.constant dense<0.000000e+00> : vector<8xf32>
    %560 = vector.multi_reduction <add>, %559, %cst_151 [1] : vector<8x16xf32> to vector<8xf32>
    %561 = vector.shape_cast %560 : vector<8xf32> to vector<8x1xf32>
    %562 = vector.extract_strided_slice %38 {offsets = [3, 0], sizes = [1, 8], strides = [1, 1]} : vector<9x8xf32> to vector<1x8xf32>
    %563 = vector.broadcast %561 : vector<8x1xf32> to vector<8x8xf32>
    %564 = vector.broadcast %562 : vector<1x8xf32> to vector<8x8xf32>
    %565 = arith.mulf %563, %564 : vector<8x8xf32>
    %566 = arith.addf %555, %565 : vector<8x8xf32>
    %c0_i32_152 = arith.constant 0 : i32
    %567 = vector.broadcast %c0_i32_152 : i32 to vector<8x16xi32>
    %568 = arith.cmpi eq, %32, %567 : vector<8x16xi32>
    %cst_153 = arith.constant 0.000000e+00 : f32
    %569 = vector.broadcast %cst_153 : f32 to vector<8x16xf32>
    %570 = arith.select %568, %520, %569 : vector<8x16xi1>, vector<8x16xf32>
    %cst_154 = arith.constant dense<0.000000e+00> : vector<8xf32>
    %571 = vector.multi_reduction <add>, %570, %cst_154 [1] : vector<8x16xf32> to vector<8xf32>
    %572 = vector.shape_cast %571 : vector<8xf32> to vector<8x1xf32>
    %573 = vector.extract_strided_slice %38 {offsets = [4, 0], sizes = [1, 8], strides = [1, 1]} : vector<9x8xf32> to vector<1x8xf32>
    %574 = vector.broadcast %572 : vector<8x1xf32> to vector<8x8xf32>
    %575 = vector.broadcast %573 : vector<1x8xf32> to vector<8x8xf32>
    %576 = arith.mulf %574, %575 : vector<8x8xf32>
    %577 = arith.addf %566, %576 : vector<8x8xf32>
    %c1_i32_155 = arith.constant 1 : i32
    %578 = vector.broadcast %c1_i32_155 : i32 to vector<8x16xi32>
    %579 = arith.cmpi eq, %32, %578 : vector<8x16xi32>
    %cst_156 = arith.constant 0.000000e+00 : f32
    %580 = vector.broadcast %cst_156 : f32 to vector<8x16xf32>
    %581 = arith.select %579, %520, %580 : vector<8x16xi1>, vector<8x16xf32>
    %cst_157 = arith.constant dense<0.000000e+00> : vector<8xf32>
    %582 = vector.multi_reduction <add>, %581, %cst_157 [1] : vector<8x16xf32> to vector<8xf32>
    %583 = vector.shape_cast %582 : vector<8xf32> to vector<8x1xf32>
    %584 = vector.extract_strided_slice %38 {offsets = [5, 0], sizes = [1, 8], strides = [1, 1]} : vector<9x8xf32> to vector<1x8xf32>
    %585 = vector.broadcast %583 : vector<8x1xf32> to vector<8x8xf32>
    %586 = vector.broadcast %584 : vector<1x8xf32> to vector<8x8xf32>
    %587 = arith.mulf %585, %586 : vector<8x8xf32>
    %588 = arith.addf %577, %587 : vector<8x8xf32>
    %c2_i32_158 = arith.constant 2 : i32
    %589 = vector.broadcast %c2_i32_158 : i32 to vector<8x16xi32>
    %590 = arith.cmpi eq, %32, %589 : vector<8x16xi32>
    %cst_159 = arith.constant 0.000000e+00 : f32
    %591 = vector.broadcast %cst_159 : f32 to vector<8x16xf32>
    %592 = arith.select %590, %520, %591 : vector<8x16xi1>, vector<8x16xf32>
    %cst_160 = arith.constant dense<0.000000e+00> : vector<8xf32>
    %593 = vector.multi_reduction <add>, %592, %cst_160 [1] : vector<8x16xf32> to vector<8xf32>
    %594 = vector.shape_cast %593 : vector<8xf32> to vector<8x1xf32>
    %595 = vector.extract_strided_slice %38 {offsets = [6, 0], sizes = [1, 8], strides = [1, 1]} : vector<9x8xf32> to vector<1x8xf32>
    %596 = vector.broadcast %594 : vector<8x1xf32> to vector<8x8xf32>
    %597 = vector.broadcast %595 : vector<1x8xf32> to vector<8x8xf32>
    %598 = arith.mulf %596, %597 : vector<8x8xf32>
    %599 = arith.addf %588, %598 : vector<8x8xf32>
    %c3_i32_161 = arith.constant 3 : i32
    %600 = vector.broadcast %c3_i32_161 : i32 to vector<8x16xi32>
    %601 = arith.cmpi eq, %32, %600 : vector<8x16xi32>
    %cst_162 = arith.constant 0.000000e+00 : f32
    %602 = vector.broadcast %cst_162 : f32 to vector<8x16xf32>
    %603 = arith.select %601, %520, %602 : vector<8x16xi1>, vector<8x16xf32>
    %cst_163 = arith.constant dense<0.000000e+00> : vector<8xf32>
    %604 = vector.multi_reduction <add>, %603, %cst_163 [1] : vector<8x16xf32> to vector<8xf32>
    %605 = vector.shape_cast %604 : vector<8xf32> to vector<8x1xf32>
    %606 = vector.extract_strided_slice %38 {offsets = [7, 0], sizes = [1, 8], strides = [1, 1]} : vector<9x8xf32> to vector<1x8xf32>
    %607 = vector.broadcast %605 : vector<8x1xf32> to vector<8x8xf32>
    %608 = vector.broadcast %606 : vector<1x8xf32> to vector<8x8xf32>
    %609 = arith.mulf %607, %608 : vector<8x8xf32>
    %610 = arith.addf %599, %609 : vector<8x8xf32>
    %c4_i32_164 = arith.constant 4 : i32
    %611 = vector.broadcast %c4_i32_164 : i32 to vector<8x16xi32>
    %612 = arith.cmpi eq, %32, %611 : vector<8x16xi32>
    %cst_165 = arith.constant 0.000000e+00 : f32
    %613 = vector.broadcast %cst_165 : f32 to vector<8x16xf32>
    %614 = arith.select %612, %520, %613 : vector<8x16xi1>, vector<8x16xf32>
    %cst_166 = arith.constant dense<0.000000e+00> : vector<8xf32>
    %615 = vector.multi_reduction <add>, %614, %cst_166 [1] : vector<8x16xf32> to vector<8xf32>
    %616 = vector.shape_cast %615 : vector<8xf32> to vector<8x1xf32>
    %617 = vector.extract_strided_slice %38 {offsets = [8, 0], sizes = [1, 8], strides = [1, 1]} : vector<9x8xf32> to vector<1x8xf32>
    %618 = vector.broadcast %616 : vector<8x1xf32> to vector<8x8xf32>
    %619 = vector.broadcast %617 : vector<1x8xf32> to vector<8x8xf32>
    %620 = arith.mulf %618, %619 : vector<8x8xf32>
    %621 = arith.addf %610, %620 : vector<8x8xf32>
    %622 = arith.truncf %621 : vector<8x8xf32> to vector<8x8xbf16>
    %623 = vector.extract_strided_slice %39 {offsets = [16, 0], sizes = [8, 32], strides = [1, 1]} : vector<32x32xbf16> to vector<8x32xbf16>
    %cst_167 = arith.constant dense<0.000000e+00> : vector<8x32xf32>
    %624 = tpu.matmul %622, %623, %cst_167 {dimension_numbers = #tpu.dot_dimension_numbers<[1], [0], [0], [1], [0, 0, 1, 1], [], []>} : vector<8x8xbf16>, vector<8x32xbf16>, vector<8x32xf32> -> vector<8x32xf32>
    %625 = arith.addf %430, %624 : vector<8x32xf32>
    %626 = vector.extract_strided_slice %19 {offsets = [0, 24], sizes = [8, 8], strides = [1, 1]} : vector<8x32xbf16> to vector<8x8xbf16>
    %627 = vector.extract_strided_slice %21 {offsets = [0, 24], sizes = [16, 8], strides = [1, 1]} : vector<16x32xbf16> to vector<16x8xbf16>
    %628 = vector.extract_strided_slice %23 {offsets = [0, 24], sizes = [16, 8], strides = [1, 1]} : vector<16x32xbf16> to vector<16x8xbf16>
    %cst_168 = arith.constant dense<0.000000e+00> : vector<8x16xf32>
    %629 = tpu.matmul %626, %627, %cst_168 {dimension_numbers = #tpu.dot_dimension_numbers<[1], [1], [0], [0], [0, 0, 1, 0], [], []>} : vector<8x8xbf16>, vector<16x8xbf16>, vector<8x16xf32> -> vector<8x16xf32>
    %630 = vector.extract_strided_slice %25 {offsets = [0, 27], sizes = [8, 9], strides = [1, 1]} : vector<8x36xf32> to vector<8x9xf32>
    %c-4_i32_169 = arith.constant -4 : i32
    %631 = vector.broadcast %c-4_i32_169 : i32 to vector<8x16xi32>
    %632 = arith.cmpi eq, %32, %631 : vector<8x16xi32>
    %633 = vector.extract_strided_slice %630 {offsets = [0, 0], sizes = [8, 1], strides = [1, 1]} : vector<8x9xf32> to vector<8x1xf32>
    %cst_170 = arith.constant 0.000000e+00 : f32
    %634 = vector.shape_cast %633 : vector<8x1xf32> to vector<8x1xf32>
    %635 = vector.broadcast %634 : vector<8x1xf32> to vector<8x16xf32>
    %636 = vector.broadcast %cst_170 : f32 to vector<8x16xf32>
    %637 = arith.select %632, %635, %636 : vector<8x16xi1>, vector<8x16xf32>
    %638 = arith.addf %629, %637 : vector<8x16xf32>
    %c-3_i32_171 = arith.constant -3 : i32
    %639 = vector.broadcast %c-3_i32_171 : i32 to vector<8x16xi32>
    %640 = arith.cmpi eq, %32, %639 : vector<8x16xi32>
    %641 = vector.extract_strided_slice %630 {offsets = [0, 1], sizes = [8, 1], strides = [1, 1]} : vector<8x9xf32> to vector<8x1xf32>
    %cst_172 = arith.constant 0.000000e+00 : f32
    %642 = vector.shape_cast %641 : vector<8x1xf32> to vector<8x1xf32>
    %643 = vector.broadcast %642 : vector<8x1xf32> to vector<8x16xf32>
    %644 = vector.broadcast %cst_172 : f32 to vector<8x16xf32>
    %645 = arith.select %640, %643, %644 : vector<8x16xi1>, vector<8x16xf32>
    %646 = arith.addf %638, %645 : vector<8x16xf32>
    %c-2_i32_173 = arith.constant -2 : i32
    %647 = vector.broadcast %c-2_i32_173 : i32 to vector<8x16xi32>
    %648 = arith.cmpi eq, %32, %647 : vector<8x16xi32>
    %649 = vector.extract_strided_slice %630 {offsets = [0, 2], sizes = [8, 1], strides = [1, 1]} : vector<8x9xf32> to vector<8x1xf32>
    %cst_174 = arith.constant 0.000000e+00 : f32
    %650 = vector.shape_cast %649 : vector<8x1xf32> to vector<8x1xf32>
    %651 = vector.broadcast %650 : vector<8x1xf32> to vector<8x16xf32>
    %652 = vector.broadcast %cst_174 : f32 to vector<8x16xf32>
    %653 = arith.select %648, %651, %652 : vector<8x16xi1>, vector<8x16xf32>
    %654 = arith.addf %646, %653 : vector<8x16xf32>
    %c-1_i32_175 = arith.constant -1 : i32
    %655 = vector.broadcast %c-1_i32_175 : i32 to vector<8x16xi32>
    %656 = arith.cmpi eq, %32, %655 : vector<8x16xi32>
    %657 = vector.extract_strided_slice %630 {offsets = [0, 3], sizes = [8, 1], strides = [1, 1]} : vector<8x9xf32> to vector<8x1xf32>
    %cst_176 = arith.constant 0.000000e+00 : f32
    %658 = vector.shape_cast %657 : vector<8x1xf32> to vector<8x1xf32>
    %659 = vector.broadcast %658 : vector<8x1xf32> to vector<8x16xf32>
    %660 = vector.broadcast %cst_176 : f32 to vector<8x16xf32>
    %661 = arith.select %656, %659, %660 : vector<8x16xi1>, vector<8x16xf32>
    %662 = arith.addf %654, %661 : vector<8x16xf32>
    %c0_i32_177 = arith.constant 0 : i32
    %663 = vector.broadcast %c0_i32_177 : i32 to vector<8x16xi32>
    %664 = arith.cmpi eq, %32, %663 : vector<8x16xi32>
    %665 = vector.extract_strided_slice %630 {offsets = [0, 4], sizes = [8, 1], strides = [1, 1]} : vector<8x9xf32> to vector<8x1xf32>
    %cst_178 = arith.constant 0.000000e+00 : f32
    %666 = vector.shape_cast %665 : vector<8x1xf32> to vector<8x1xf32>
    %667 = vector.broadcast %666 : vector<8x1xf32> to vector<8x16xf32>
    %668 = vector.broadcast %cst_178 : f32 to vector<8x16xf32>
    %669 = arith.select %664, %667, %668 : vector<8x16xi1>, vector<8x16xf32>
    %670 = arith.addf %662, %669 : vector<8x16xf32>
    %c1_i32_179 = arith.constant 1 : i32
    %671 = vector.broadcast %c1_i32_179 : i32 to vector<8x16xi32>
    %672 = arith.cmpi eq, %32, %671 : vector<8x16xi32>
    %673 = vector.extract_strided_slice %630 {offsets = [0, 5], sizes = [8, 1], strides = [1, 1]} : vector<8x9xf32> to vector<8x1xf32>
    %cst_180 = arith.constant 0.000000e+00 : f32
    %674 = vector.shape_cast %673 : vector<8x1xf32> to vector<8x1xf32>
    %675 = vector.broadcast %674 : vector<8x1xf32> to vector<8x16xf32>
    %676 = vector.broadcast %cst_180 : f32 to vector<8x16xf32>
    %677 = arith.select %672, %675, %676 : vector<8x16xi1>, vector<8x16xf32>
    %678 = arith.addf %670, %677 : vector<8x16xf32>
    %c2_i32_181 = arith.constant 2 : i32
    %679 = vector.broadcast %c2_i32_181 : i32 to vector<8x16xi32>
    %680 = arith.cmpi eq, %32, %679 : vector<8x16xi32>
    %681 = vector.extract_strided_slice %630 {offsets = [0, 6], sizes = [8, 1], strides = [1, 1]} : vector<8x9xf32> to vector<8x1xf32>
    %cst_182 = arith.constant 0.000000e+00 : f32
    %682 = vector.shape_cast %681 : vector<8x1xf32> to vector<8x1xf32>
    %683 = vector.broadcast %682 : vector<8x1xf32> to vector<8x16xf32>
    %684 = vector.broadcast %cst_182 : f32 to vector<8x16xf32>
    %685 = arith.select %680, %683, %684 : vector<8x16xi1>, vector<8x16xf32>
    %686 = arith.addf %678, %685 : vector<8x16xf32>
    %c3_i32_183 = arith.constant 3 : i32
    %687 = vector.broadcast %c3_i32_183 : i32 to vector<8x16xi32>
    %688 = arith.cmpi eq, %32, %687 : vector<8x16xi32>
    %689 = vector.extract_strided_slice %630 {offsets = [0, 7], sizes = [8, 1], strides = [1, 1]} : vector<8x9xf32> to vector<8x1xf32>
    %cst_184 = arith.constant 0.000000e+00 : f32
    %690 = vector.shape_cast %689 : vector<8x1xf32> to vector<8x1xf32>
    %691 = vector.broadcast %690 : vector<8x1xf32> to vector<8x16xf32>
    %692 = vector.broadcast %cst_184 : f32 to vector<8x16xf32>
    %693 = arith.select %688, %691, %692 : vector<8x16xi1>, vector<8x16xf32>
    %694 = arith.addf %686, %693 : vector<8x16xf32>
    %c4_i32_185 = arith.constant 4 : i32
    %695 = vector.broadcast %c4_i32_185 : i32 to vector<8x16xi32>
    %696 = arith.cmpi eq, %32, %695 : vector<8x16xi32>
    %697 = vector.extract_strided_slice %630 {offsets = [0, 8], sizes = [8, 1], strides = [1, 1]} : vector<8x9xf32> to vector<8x1xf32>
    %cst_186 = arith.constant 0.000000e+00 : f32
    %698 = vector.shape_cast %697 : vector<8x1xf32> to vector<8x1xf32>
    %699 = vector.broadcast %698 : vector<8x1xf32> to vector<8x16xf32>
    %700 = vector.broadcast %cst_186 : f32 to vector<8x16xf32>
    %701 = arith.select %696, %699, %700 : vector<8x16xi1>, vector<8x16xf32>
    %702 = arith.addf %694, %701 : vector<8x16xf32>
    %cst_187 = arith.constant -1.000000e+04 : f32
    %703 = vector.broadcast %cst_187 : f32 to vector<8x16xf32>
    %704 = arith.select %37, %702, %703 : vector<8x16xi1>, vector<8x16xf32>
    %cst_188 = arith.constant dense<0xFF800000> : vector<8xf32>
    %705 = vector.multi_reduction <maximumf>, %704, %cst_188 [1] : vector<8x16xf32> to vector<8xf32>
    %706 = vector.shape_cast %705 : vector<8xf32> to vector<8x1xf32>
    %707 = vector.broadcast %706 : vector<8x1xf32> to vector<8x16xf32>
    %708 = arith.subf %704, %707 : vector<8x16xf32>
    %709 = math.exp %708 : vector<8x16xf32>
    %cst_189 = arith.constant dense<0.000000e+00> : vector<8xf32>
    %710 = vector.multi_reduction <add>, %709, %cst_189 [1] : vector<8x16xf32> to vector<8xf32>
    %711 = vector.shape_cast %710 : vector<8xf32> to vector<8x1xf32>
    %cst_190 = arith.constant 1.000000e+00 : f32
    %712 = vector.broadcast %cst_190 : f32 to vector<8x1xf32>
    %713 = arith.divf %712, %711 : vector<8x1xf32>
    %714 = vector.broadcast %713 : vector<8x1xf32> to vector<8x16xf32>
    %715 = arith.mulf %709, %714 : vector<8x16xf32>
    %716 = arith.truncf %715 : vector<8x16xf32> to vector<8x16xbf16>
    %cst_191 = arith.constant dense<0.000000e+00> : vector<8x8xf32>
    %717 = tpu.matmul %716, %628, %cst_191 {dimension_numbers = #tpu.dot_dimension_numbers<[1], [0], [0], [1], [0, 0, 1, 1], [], []>} : vector<8x16xbf16>, vector<16x8xbf16>, vector<8x8xf32> -> vector<8x8xf32>
    %c-4_i32_192 = arith.constant -4 : i32
    %718 = vector.broadcast %c-4_i32_192 : i32 to vector<8x16xi32>
    %719 = arith.cmpi eq, %32, %718 : vector<8x16xi32>
    %cst_193 = arith.constant 0.000000e+00 : f32
    %720 = vector.broadcast %cst_193 : f32 to vector<8x16xf32>
    %721 = arith.select %719, %715, %720 : vector<8x16xi1>, vector<8x16xf32>
    %cst_194 = arith.constant dense<0.000000e+00> : vector<8xf32>
    %722 = vector.multi_reduction <add>, %721, %cst_194 [1] : vector<8x16xf32> to vector<8xf32>
    %723 = vector.shape_cast %722 : vector<8xf32> to vector<8x1xf32>
    %724 = vector.extract_strided_slice %38 {offsets = [0, 0], sizes = [1, 8], strides = [1, 1]} : vector<9x8xf32> to vector<1x8xf32>
    %725 = vector.broadcast %723 : vector<8x1xf32> to vector<8x8xf32>
    %726 = vector.broadcast %724 : vector<1x8xf32> to vector<8x8xf32>
    %727 = arith.mulf %725, %726 : vector<8x8xf32>
    %728 = arith.addf %717, %727 : vector<8x8xf32>
    %c-3_i32_195 = arith.constant -3 : i32
    %729 = vector.broadcast %c-3_i32_195 : i32 to vector<8x16xi32>
    %730 = arith.cmpi eq, %32, %729 : vector<8x16xi32>
    %cst_196 = arith.constant 0.000000e+00 : f32
    %731 = vector.broadcast %cst_196 : f32 to vector<8x16xf32>
    %732 = arith.select %730, %715, %731 : vector<8x16xi1>, vector<8x16xf32>
    %cst_197 = arith.constant dense<0.000000e+00> : vector<8xf32>
    %733 = vector.multi_reduction <add>, %732, %cst_197 [1] : vector<8x16xf32> to vector<8xf32>
    %734 = vector.shape_cast %733 : vector<8xf32> to vector<8x1xf32>
    %735 = vector.extract_strided_slice %38 {offsets = [1, 0], sizes = [1, 8], strides = [1, 1]} : vector<9x8xf32> to vector<1x8xf32>
    %736 = vector.broadcast %734 : vector<8x1xf32> to vector<8x8xf32>
    %737 = vector.broadcast %735 : vector<1x8xf32> to vector<8x8xf32>
    %738 = arith.mulf %736, %737 : vector<8x8xf32>
    %739 = arith.addf %728, %738 : vector<8x8xf32>
    %c-2_i32_198 = arith.constant -2 : i32
    %740 = vector.broadcast %c-2_i32_198 : i32 to vector<8x16xi32>
    %741 = arith.cmpi eq, %32, %740 : vector<8x16xi32>
    %cst_199 = arith.constant 0.000000e+00 : f32
    %742 = vector.broadcast %cst_199 : f32 to vector<8x16xf32>
    %743 = arith.select %741, %715, %742 : vector<8x16xi1>, vector<8x16xf32>
    %cst_200 = arith.constant dense<0.000000e+00> : vector<8xf32>
    %744 = vector.multi_reduction <add>, %743, %cst_200 [1] : vector<8x16xf32> to vector<8xf32>
    %745 = vector.shape_cast %744 : vector<8xf32> to vector<8x1xf32>
    %746 = vector.extract_strided_slice %38 {offsets = [2, 0], sizes = [1, 8], strides = [1, 1]} : vector<9x8xf32> to vector<1x8xf32>
    %747 = vector.broadcast %745 : vector<8x1xf32> to vector<8x8xf32>
    %748 = vector.broadcast %746 : vector<1x8xf32> to vector<8x8xf32>
    %749 = arith.mulf %747, %748 : vector<8x8xf32>
    %750 = arith.addf %739, %749 : vector<8x8xf32>
    %c-1_i32_201 = arith.constant -1 : i32
    %751 = vector.broadcast %c-1_i32_201 : i32 to vector<8x16xi32>
    %752 = arith.cmpi eq, %32, %751 : vector<8x16xi32>
    %cst_202 = arith.constant 0.000000e+00 : f32
    %753 = vector.broadcast %cst_202 : f32 to vector<8x16xf32>
    %754 = arith.select %752, %715, %753 : vector<8x16xi1>, vector<8x16xf32>
    %cst_203 = arith.constant dense<0.000000e+00> : vector<8xf32>
    %755 = vector.multi_reduction <add>, %754, %cst_203 [1] : vector<8x16xf32> to vector<8xf32>
    %756 = vector.shape_cast %755 : vector<8xf32> to vector<8x1xf32>
    %757 = vector.extract_strided_slice %38 {offsets = [3, 0], sizes = [1, 8], strides = [1, 1]} : vector<9x8xf32> to vector<1x8xf32>
    %758 = vector.broadcast %756 : vector<8x1xf32> to vector<8x8xf32>
    %759 = vector.broadcast %757 : vector<1x8xf32> to vector<8x8xf32>
    %760 = arith.mulf %758, %759 : vector<8x8xf32>
    %761 = arith.addf %750, %760 : vector<8x8xf32>
    %c0_i32_204 = arith.constant 0 : i32
    %762 = vector.broadcast %c0_i32_204 : i32 to vector<8x16xi32>
    %763 = arith.cmpi eq, %32, %762 : vector<8x16xi32>
    %cst_205 = arith.constant 0.000000e+00 : f32
    %764 = vector.broadcast %cst_205 : f32 to vector<8x16xf32>
    %765 = arith.select %763, %715, %764 : vector<8x16xi1>, vector<8x16xf32>
    %cst_206 = arith.constant dense<0.000000e+00> : vector<8xf32>
    %766 = vector.multi_reduction <add>, %765, %cst_206 [1] : vector<8x16xf32> to vector<8xf32>
    %767 = vector.shape_cast %766 : vector<8xf32> to vector<8x1xf32>
    %768 = vector.extract_strided_slice %38 {offsets = [4, 0], sizes = [1, 8], strides = [1, 1]} : vector<9x8xf32> to vector<1x8xf32>
    %769 = vector.broadcast %767 : vector<8x1xf32> to vector<8x8xf32>
    %770 = vector.broadcast %768 : vector<1x8xf32> to vector<8x8xf32>
    %771 = arith.mulf %769, %770 : vector<8x8xf32>
    %772 = arith.addf %761, %771 : vector<8x8xf32>
    %c1_i32_207 = arith.constant 1 : i32
    %773 = vector.broadcast %c1_i32_207 : i32 to vector<8x16xi32>
    %774 = arith.cmpi eq, %32, %773 : vector<8x16xi32>
    %cst_208 = arith.constant 0.000000e+00 : f32
    %775 = vector.broadcast %cst_208 : f32 to vector<8x16xf32>
    %776 = arith.select %774, %715, %775 : vector<8x16xi1>, vector<8x16xf32>
    %cst_209 = arith.constant dense<0.000000e+00> : vector<8xf32>
    %777 = vector.multi_reduction <add>, %776, %cst_209 [1] : vector<8x16xf32> to vector<8xf32>
    %778 = vector.shape_cast %777 : vector<8xf32> to vector<8x1xf32>
    %779 = vector.extract_strided_slice %38 {offsets = [5, 0], sizes = [1, 8], strides = [1, 1]} : vector<9x8xf32> to vector<1x8xf32>
    %780 = vector.broadcast %778 : vector<8x1xf32> to vector<8x8xf32>
    %781 = vector.broadcast %779 : vector<1x8xf32> to vector<8x8xf32>
    %782 = arith.mulf %780, %781 : vector<8x8xf32>
    %783 = arith.addf %772, %782 : vector<8x8xf32>
    %c2_i32_210 = arith.constant 2 : i32
    %784 = vector.broadcast %c2_i32_210 : i32 to vector<8x16xi32>
    %785 = arith.cmpi eq, %32, %784 : vector<8x16xi32>
    %cst_211 = arith.constant 0.000000e+00 : f32
    %786 = vector.broadcast %cst_211 : f32 to vector<8x16xf32>
    %787 = arith.select %785, %715, %786 : vector<8x16xi1>, vector<8x16xf32>
    %cst_212 = arith.constant dense<0.000000e+00> : vector<8xf32>
    %788 = vector.multi_reduction <add>, %787, %cst_212 [1] : vector<8x16xf32> to vector<8xf32>
    %789 = vector.shape_cast %788 : vector<8xf32> to vector<8x1xf32>
    %790 = vector.extract_strided_slice %38 {offsets = [6, 0], sizes = [1, 8], strides = [1, 1]} : vector<9x8xf32> to vector<1x8xf32>
    %791 = vector.broadcast %789 : vector<8x1xf32> to vector<8x8xf32>
    %792 = vector.broadcast %790 : vector<1x8xf32> to vector<8x8xf32>
    %793 = arith.mulf %791, %792 : vector<8x8xf32>
    %794 = arith.addf %783, %793 : vector<8x8xf32>
    %c3_i32_213 = arith.constant 3 : i32
    %795 = vector.broadcast %c3_i32_213 : i32 to vector<8x16xi32>
    %796 = arith.cmpi eq, %32, %795 : vector<8x16xi32>
    %cst_214 = arith.constant 0.000000e+00 : f32
    %797 = vector.broadcast %cst_214 : f32 to vector<8x16xf32>
    %798 = arith.select %796, %715, %797 : vector<8x16xi1>, vector<8x16xf32>
    %cst_215 = arith.constant dense<0.000000e+00> : vector<8xf32>
    %799 = vector.multi_reduction <add>, %798, %cst_215 [1] : vector<8x16xf32> to vector<8xf32>
    %800 = vector.shape_cast %799 : vector<8xf32> to vector<8x1xf32>
    %801 = vector.extract_strided_slice %38 {offsets = [7, 0], sizes = [1, 8], strides = [1, 1]} : vector<9x8xf32> to vector<1x8xf32>
    %802 = vector.broadcast %800 : vector<8x1xf32> to vector<8x8xf32>
    %803 = vector.broadcast %801 : vector<1x8xf32> to vector<8x8xf32>
    %804 = arith.mulf %802, %803 : vector<8x8xf32>
    %805 = arith.addf %794, %804 : vector<8x8xf32>
    %c4_i32_216 = arith.constant 4 : i32
    %806 = vector.broadcast %c4_i32_216 : i32 to vector<8x16xi32>
    %807 = arith.cmpi eq, %32, %806 : vector<8x16xi32>
    %cst_217 = arith.constant 0.000000e+00 : f32
    %808 = vector.broadcast %cst_217 : f32 to vector<8x16xf32>
    %809 = arith.select %807, %715, %808 : vector<8x16xi1>, vector<8x16xf32>
    %cst_218 = arith.constant dense<0.000000e+00> : vector<8xf32>
    %810 = vector.multi_reduction <add>, %809, %cst_218 [1] : vector<8x16xf32> to vector<8xf32>
    %811 = vector.shape_cast %810 : vector<8xf32> to vector<8x1xf32>
    %812 = vector.extract_strided_slice %38 {offsets = [8, 0], sizes = [1, 8], strides = [1, 1]} : vector<9x8xf32> to vector<1x8xf32>
    %813 = vector.broadcast %811 : vector<8x1xf32> to vector<8x8xf32>
    %814 = vector.broadcast %812 : vector<1x8xf32> to vector<8x8xf32>
    %815 = arith.mulf %813, %814 : vector<8x8xf32>
    %816 = arith.addf %805, %815 : vector<8x8xf32>
    %817 = arith.truncf %816 : vector<8x8xf32> to vector<8x8xbf16>
    %818 = vector.extract_strided_slice %39 {offsets = [24, 0], sizes = [8, 32], strides = [1, 1]} : vector<32x32xbf16> to vector<8x32xbf16>
    %cst_219 = arith.constant dense<0.000000e+00> : vector<8x32xf32>
    %819 = tpu.matmul %817, %818, %cst_219 {dimension_numbers = #tpu.dot_dimension_numbers<[1], [0], [0], [1], [0, 0, 1, 1], [], []>} : vector<8x8xbf16>, vector<8x32xbf16>, vector<8x32xf32> -> vector<8x32xf32>
    %820 = arith.addf %625, %819 : vector<8x32xf32>
    %821 = arith.addf %6, %820 : vector<8x32xf32>
    %c0_220 = arith.constant 0 : index
    %c0_221 = arith.constant 0 : index
    %822 = vector.load %arg9[%c0_220, %c0_221] : memref<1x32xf32, #tpu.memory_space<vmem>>, vector<1x32xf32>
    %823 = vector.broadcast %822 : vector<1x32xf32> to vector<8x32xf32>
    %824 = arith.addf %821, %823 : vector<8x32xf32>
    %cst_222 = arith.constant dense<0.000000e+00> : vector<8xf32>
    %825 = vector.multi_reduction <add>, %824, %cst_222 [1] : vector<8x32xf32> to vector<8xf32>
    %826 = vector.shape_cast %825 : vector<8xf32> to vector<8x1xf32>
    %cst_223 = arith.constant 3.200000e+01 : f32
    %827 = vector.broadcast %cst_223 : f32 to vector<8x1xf32>
    %828 = arith.divf %826, %827 : vector<8x1xf32>
    %829 = vector.broadcast %828 : vector<8x1xf32> to vector<8x32xf32>
    %830 = arith.subf %824, %829 : vector<8x32xf32>
    %831 = arith.mulf %830, %830 : vector<8x32xf32>
    %cst_224 = arith.constant dense<0.000000e+00> : vector<8xf32>
    %832 = vector.multi_reduction <add>, %831, %cst_224 [1] : vector<8x32xf32> to vector<8xf32>
    %833 = vector.shape_cast %832 : vector<8xf32> to vector<8x1xf32>
    %cst_225 = arith.constant 3.200000e+01 : f32
    %834 = vector.broadcast %cst_225 : f32 to vector<8x1xf32>
    %835 = arith.divf %833, %834 : vector<8x1xf32>
    %cst_226 = arith.constant 9.99999974E-6 : f32
    %836 = vector.broadcast %cst_226 : f32 to vector<8x1xf32>
    %837 = arith.addf %835, %836 : vector<8x1xf32>
    %838 = math.rsqrt %837 : vector<8x1xf32>
    %839 = vector.broadcast %838 : vector<8x1xf32> to vector<8x32xf32>
    %840 = arith.mulf %830, %839 : vector<8x32xf32>
    %c0_227 = arith.constant 0 : index
    %c0_228 = arith.constant 0 : index
    %841 = vector.load %arg12[%c0_227, %c0_228] : memref<1x32xf32, #tpu.memory_space<vmem>>, vector<1x32xf32>
    %842 = vector.broadcast %841 : vector<1x32xf32> to vector<8x32xf32>
    %843 = arith.mulf %840, %842 : vector<8x32xf32>
    %c0_229 = arith.constant 0 : index
    %c0_230 = arith.constant 0 : index
    %844 = vector.load %arg13[%c0_229, %c0_230] : memref<1x32xf32, #tpu.memory_space<vmem>>, vector<1x32xf32>
    %845 = vector.broadcast %844 : vector<1x32xf32> to vector<8x32xf32>
    %846 = arith.addf %843, %845 : vector<8x32xf32>
    %c0_231 = arith.constant 0 : index
    %c0_232 = arith.constant 0 : index
    %c0_233 = arith.constant 0 : index
    %847 = vector.load %arg14[%c0_231, %c0_232, %c0_233] : memref<1x8x32xf32, #tpu.memory_space<vmem>>, vector<1x8x32xf32>
    %848 = vector.shape_cast %847 : vector<1x8x32xf32> to vector<8x32xf32>
    %849 = vector.shape_cast %846 : vector<8x32xf32> to vector<1x8x32xf32>
    tpu.vector_store %arg14[%c0_231, %c0_232, %c0_233], %849 {strides = array<i32>} : memref<1x8x32xf32, #tpu.memory_space<vmem>>, vector<1x8x32xf32>,
    return
  }
  func.func @transform_0(%arg0: i32, %arg1: i32, %arg2: memref<2xi32, #tpu.memory_space<smem>>) -> (i32, i32, i32) {
    %c0_i32 = arith.constant 0 : i32
    %c0_i32_0 = arith.constant 0 : i32
    %c0_i32_1 = arith.constant 0 : i32
    return %arg0, %c0_i32, %c0_i32_0 : i32, i32, i32
  }
  func.func @transform_1(%arg0: i32, %arg1: i32, %arg2: memref<2xi32, #tpu.memory_space<smem>>) -> (i32, i32) {
    %c0_i32 = arith.constant 0 : i32
    %c0_i32_0 = arith.constant 0 : i32
    %c0_i32_1 = arith.constant 0 : i32
    return %c0_i32, %c0_i32_0 : i32, i32
  }
  func.func @transform_2(%arg0: i32, %arg1: i32, %arg2: memref<2xi32, #tpu.memory_space<smem>>) -> (i32, i32) {
    %c0_i32 = arith.constant 0 : i32
    %c0_i32_0 = arith.constant 0 : i32
    %c0_i32_1 = arith.constant 0 : i32
    return %c0_i32, %c0_i32_0 : i32, i32
  }
  func.func @transform_3(%arg0: i32, %arg1: i32, %arg2: memref<2xi32, #tpu.memory_space<smem>>) -> (i32, i32) {
    %c0_i32 = arith.constant 0 : i32
    %c0_i32_0 = arith.constant 0 : i32
    %c0_i32_1 = arith.constant 0 : i32
    return %c0_i32, %c0_i32_0 : i32, i32
  }
  func.func @transform_4(%arg0: i32, %arg1: i32, %arg2: memref<2xi32, #tpu.memory_space<smem>>) -> (i32, i32) {
    %c0_i32 = arith.constant 0 : i32
    %c0_i32_0 = arith.constant 0 : i32
    %c0_i32_1 = arith.constant 0 : i32
    return %c0_i32, %c0_i32_0 : i32, i32
  }
  func.func @transform_5(%arg0: i32, %arg1: i32, %arg2: memref<2xi32, #tpu.memory_space<smem>>) -> (i32, i32) {
    %c0_i32 = arith.constant 0 : i32
    %c0_i32_0 = arith.constant 0 : i32
    %c0_i32_1 = arith.constant 0 : i32
    return %c0_i32, %c0_i32_0 : i32, i32
  }
  func.func @transform_6(%arg0: i32, %arg1: i32, %arg2: memref<2xi32, #tpu.memory_space<smem>>) -> (i32, i32) {
    %c0_i32 = arith.constant 0 : i32
    %c0_i32_0 = arith.constant 0 : i32
    %c0_i32_1 = arith.constant 0 : i32
    return %c0_i32, %c0_i32_0 : i32, i32
  }
  func.func @transform_7(%arg0: i32, %arg1: i32, %arg2: memref<2xi32, #tpu.memory_space<smem>>) -> (i32, i32) {
    %c0_i32 = arith.constant 0 : i32
    %c0_i32_0 = arith.constant 0 : i32
    %c0_i32_1 = arith.constant 0 : i32
    return %c0_i32, %c0_i32_0 : i32, i32
  }
  func.func @transform_8(%arg0: i32, %arg1: i32, %arg2: memref<2xi32, #tpu.memory_space<smem>>) -> (i32, i32) {
    %c0_i32 = arith.constant 0 : i32
    %c0_i32_0 = arith.constant 0 : i32
    %c0_i32_1 = arith.constant 0 : i32
    return %c0_i32, %c0_i32_0 : i32, i32
  }
  func.func @transform_9(%arg0: i32, %arg1: i32, %arg2: memref<2xi32, #tpu.memory_space<smem>>) -> (i32, i32) {
    %c0_i32 = arith.constant 0 : i32
    %c0_i32_0 = arith.constant 0 : i32
    %c0_i32_1 = arith.constant 0 : i32
    return %c0_i32, %c0_i32_0 : i32, i32
  }
  func.func @transform_10(%arg0: i32, %arg1: i32, %arg2: memref<2xi32, #tpu.memory_space<smem>>) -> (i32, i32) {
    %c0_i32 = arith.constant 0 : i32
    %c0_i32_0 = arith.constant 0 : i32
    %c0_i32_1 = arith.constant 0 : i32
    return %c0_i32, %c0_i32_0 : i32, i32
  }
  func.func @transform_11(%arg0: i32, %arg1: i32, %arg2: memref<2xi32, #tpu.memory_space<smem>>) -> (i32, i32, i32) {
    %c0_i32 = arith.constant 0 : i32
    %c0_i32_0 = arith.constant 0 : i32
    return %arg0, %arg1, %c0_i32 : i32, i32, i32
  }
}

</mosaic_0001>

<llo_original>
// kernel: tpu_custom_call.1
$region0: #{tpu_custom_call.1}
  #allocation0 [shape = 'u32[]', space=smem, size = 0x4, offset = 0x4, fixed_abs, tag = 'smem constant byte address 0x4 - core index']
  #allocation1 [shape = 'u32[144,128]{1,0:T(1,128)}', space=vmem, size = 0x12000, scoped, tag = 'internal scratch']
  #allocation2 [shape = 's32[1]{0}', space=sflag, size = 0x4, scoped, tag = 'scoped memory for tpu_custom_call.1']
  #allocation3 [shape = 'u8[512]{0}', space=smem, size = 0x200, scoped, tag = 'prefetched SMEM operand 0']
  %s0 = inlined_call_operand.vmem [shape: s32[2], index: 0, kind: input, shape index: {}]
  %s1 = inlined_call_operand.hbm [shape: f32[2,16,32], index: 1, kind: input, shape index: {}]
  %s2 = inlined_call_operand.vmem [shape: bf16[32,32], index: 2, kind: input, shape index: {}]
  %s3 = inlined_call_operand.vmem [shape: f32[1,32], index: 3, kind: input, shape index: {}]
  %s4 = inlined_call_operand.vmem [shape: bf16[32,64], index: 4, kind: input, shape index: {}]
  %s5 = inlined_call_operand.hbm [shape: f32[1,64], index: 5, kind: input, shape index: {}]
  %s6 = inlined_call_operand.hbm [shape: bf16[32,32], index: 6, kind: input, shape index: {}]
  %s7 = inlined_call_operand.hbm [shape: f32[1,32], index: 7, kind: input, shape index: {}]
  %s8 = inlined_call_operand.vmem [shape: bf16[32,36], index: 8, kind: input, shape index: {}]
  %s9 = inlined_call_operand.vmem [shape: f32[9,8], index: 9, kind: input, shape index: {}]
  %s10 = inlined_call_operand.vmem [shape: f32[1,32], index: 10, kind: input, shape index: {}]
  %s11 = inlined_call_operand.vmem [shape: f32[1,32], index: 11, kind: input, shape index: {}]
  %s12 = inlined_call_operand.hbm [shape: f32[2,16,32], index: 12, kind: output, shape index: {}]
  %s13 = sld [smem:[#allocation0]]
  $region93: #{tpu_custom_call.1} parent=0
    _
  %s15 = ssub.s32 1, %s13
  %s16 = scalar_select 0, %s15, %s13
  %s17 = sshll.u32 %s0, 4
  %s18 = int_to_ptr.vmem [resolvable:$true] %s17
  %20 = dma.vmem_to_smem %s18, 16, [#allocation3], [#allocation2]
  %21 = dma.done [#allocation2], 16
  %22 = sfence
  $region1: #{tpu_custom_call.1} parent=0
    #allocation4 [shape = 'u8[16384]{0}', space=vmem, size = 0x4000, scoped, tag = 'input window, operand 1']
    #allocation5 [shape = 's32[2]{0}', space=sflag, size = 0x8, scoped, tag = 'scoped memory for tpu_custom_call.1']
    #allocation6 [shape = 's32[2]{0}', space=sflag, size = 0x8, scoped, tag = 'scoped memory for tpu_custom_call.1']
    #allocation7 [shape = 'u8[512]{0}', space=vmem, size = 0x400, scoped, tag = 'input window, operand 5, single buffered']
    #allocation8 [shape = 's32[1]{0}', space=sflag, size = 0x4, scoped, tag = 'scoped memory for tpu_custom_call.1']
    #allocation9 [shape = 'u8[8192]{0}', space=vmem, size = 0x2000, scoped, tag = 'input window, operand 6, single buffered']
    #allocation10 [shape = 'u8[512]{0}', space=vmem, size = 0x400, scoped, tag = 'input window, operand 7, single buffered']
    #allocation11 [shape = 's32[1]{0}', space=sflag, size = 0x4, scoped, tag = 'scoped memory for tpu_custom_call.1']
    #allocation12 [shape = 'u8[8192]{0}', space=vmem, size = 0x2000, scoped, tag = 'output window, operand 0']
    %23 = vsyncpa [#allocation5], 0
    %s24 = scalar_lea.sflag [#allocation5], 1
    %25 = vsyncpa %s24, 0
    %26 = vsyncpa [#allocation8], 0
    %27 = vsyncpa [#allocation11], 0
    %28 = vsyncpa [#allocation6], 0
    %s29 = scalar_lea.sflag [#allocation6], 1
    %30 = vsyncpa %s29, 0
    loop: start=0, step=1, limit=6
    $region2: #{tpu_custom_call.1} parent=1 // loop_pre_header
      _
    $region3: #{tpu_custom_call.1} parent=1 // loop_header
      %s32 = sphi 0, %s36
      %p33 = scmp.ge.s32.totalorder %s32, 6
      %s39 = sphi 0, %s51
      %s40 = sphi 0, %s47
      %s41 = sphi 0, %s39
      %s42 = sphi 0, %s40
      %s43 = sphi 0, %s41
      %s44 = sphi 0, %s42
      %s54 = sphi 0, %s56
      %s57 = sphi 0, %s54
      %s58 = sphi 0, %s57
      %s74 = sphi 0, %s58
      %s78 = sphi 0, %s78
      %s80 = sphi 0, %s78
      %s81 = sphi 0, %s80
      %s95 = sphi 0, %s81
      %s99 = sphi 0, %s99
      %s101 = sphi 0, %s99
      %s102 = sphi 0, %s101
      %s116 = sphi 0, %s102
      %s120 = sphi 0, %s120
      %s122 = sphi 0, %s120
      %s123 = sphi 0, %s122
      %s137 = sphi 0, %s123
      %s141 = sphi 0, %s141
      %s143 = sphi 0, %s141
      %s144 = sphi 0, %s143
      %s158 = sphi 0, %s144
      %s162 = sphi 0, %s162
      %s164 = sphi 0, %s162
      %s165 = sphi 0, %s164
      %s179 = sphi 0, %s165
      %s183 = sphi 0, %s183
      %s185 = sphi 0, %s183
      %s186 = sphi 0, %s185
      %s200 = sphi 0, %s186
      %s204 = sphi 0, %s204
      %s206 = sphi 0, %s204
      %s207 = sphi 0, %s206
      %s221 = sphi 0, %s207
      %s225 = sphi 0, %s225
      %s227 = sphi 0, %s225
      %s228 = sphi 0, %s227
      %s242 = sphi 0, %s228
      %s246 = sphi 0, %s246
      %s248 = sphi 0, %s246
      %s249 = sphi 0, %s248
      %s263 = sphi 0, %s249
      %s267 = sphi 0, %s267
      %s269 = sphi 0, %s267
      %s270 = sphi 0, %s269
      %s284 = sphi 0, %s270
      %s292 = sphi 0, %s294
      %s295 = sphi 0, %s292
      %s296 = sphi 0, %s295
      %s312 = sphi 0, %s296
    $region4: #{tpu_custom_call.1} parent=1 // loop_header_branch
      %35 = sbr.rel (%p33) target = $region8
    $region5: #{tpu_custom_call.1} parent=1 // loop_body
      %s37 = ssub.s32 %s32, 1
      %s38 = ssub.s32 %s32, 2
      %s45 = sadd.s32 1, %s40
      %p46 = scmp.ge.s32.totalorder %s45, 2
      %s47 = scalar_select %p46, 0, %s45
      %s48 = sadd.s32 1, %s39
      %s49 = scalar_select %p46, %s48, %s39
      %p50 = scmp.ge.s32.totalorder %s49, 2
      %s51 = scalar_select %p50, 0, %s49
      %s52 = ssub.s32 %s39, %s51
      %p53 = scmp.eq.s32.totalorder %s52, 0
      %s55 = sadd.s32 %s54, 1
      %s56 = scalar_select %p53, %s54, %s55
      %p59 = pneg %p53
      %p60 = scmp.eq.s32.totalorder %s32, 3
      %p61 = por %p59, %p60
      %p62 = scmp.ne.s32.totalorder %s54, %s57
      %p63 = scmp.eq.s32.totalorder %s32, 0
      %p64 = por %p62, %p63
      %p65 = scmp.ne.s32.totalorder %s54, %s57
      %p66 = scmp.eq.s32.totalorder %s37, 3
      %p67 = por %p65, %p66
      %p68 = scmp.ne.s32.totalorder %s57, %s58
      %p69 = scmp.eq.s32.totalorder %s37, 0
      %p70 = por %p68, %p69
      %p71 = scmp.ne.s32.totalorder %s57, %s58
      %p72 = scmp.eq.s32.totalorder %s38, 3
      %p73 = por %p71, %p72
      %p75 = scmp.ne.s32.totalorder %s58, %s74
      %p76 = scmp.eq.s32.totalorder %s38, 0
      %p77 = por %p75, %p76
      %s79 = sadd.s32 %s78, 1
      %p82 = scmp.eq.s32.totalorder %s32, 3
      %p83 = scmp.ne.s32.totalorder %s78, %s80
      %p84 = scmp.eq.s32.totalorder %s32, 0
      %p85 = por %p83, %p84
      %p86 = scmp.ne.s32.totalorder %s78, %s80
      %p87 = scmp.eq.s32.totalorder %s37, 3
      %p88 = por %p86, %p87
      %p89 = scmp.ne.s32.totalorder %s80, %s81
      %p90 = scmp.eq.s32.totalorder %s37, 0
      %p91 = por %p89, %p90
      %p92 = scmp.ne.s32.totalorder %s80, %s81
      %p93 = scmp.eq.s32.totalorder %s38, 3
      %p94 = por %p92, %p93
      %p96 = scmp.ne.s32.totalorder %s81, %s95
      %p97 = scmp.eq.s32.totalorder %s38, 0
      %p98 = por %p96, %p97
      %s100 = sadd.s32 %s99, 1
      %p103 = scmp.eq.s32.totalorder %s32, 3
      %p104 = scmp.ne.s32.totalorder %s99, %s101
      %p105 = scmp.eq.s32.totalorder %s32, 0
      %p106 = por %p104, %p105
      %p107 = scmp.ne.s32.totalorder %s99, %s101
      %p108 = scmp.eq.s32.totalorder %s37, 3
      %p109 = por %p107, %p108
      %p110 = scmp.ne.s32.totalorder %s101, %s102
      %p111 = scmp.eq.s32.totalorder %s37, 0
      %p112 = por %p110, %p111
      %p113 = scmp.ne.s32.totalorder %s101, %s102
      %p114 = scmp.eq.s32.totalorder %s38, 3
      %p115 = por %p113, %p114
      %p117 = scmp.ne.s32.totalorder %s102, %s116
      %p118 = scmp.eq.s32.totalorder %s38, 0
      %p119 = por %p117, %p118
      %s121 = sadd.s32 %s120, 1
      %p124 = scmp.eq.s32.totalorder %s32, 3
      %p125 = scmp.ne.s32.totalorder %s120, %s122
      %p126 = scmp.eq.s32.totalorder %s32, 0
      %p127 = por %p125, %p126
      %p128 = scmp.ne.s32.totalorder %s120, %s122
      %p129 = scmp.eq.s32.totalorder %s37, 3
      %p130 = por %p128, %p129
      %p131 = scmp.ne.s32.totalorder %s122, %s123
      %p132 = scmp.eq.s32.totalorder %s37, 0
      %p133 = por %p131, %p132
      %p134 = scmp.ne.s32.totalorder %s122, %s123
      %p135 = scmp.eq.s32.totalorder %s38, 3
      %p136 = por %p134, %p135
      %p138 = scmp.ne.s32.totalorder %s123, %s137
      %p139 = scmp.eq.s32.totalorder %s38, 0
      %p140 = por %p138, %p139
      %s142 = sadd.s32 %s141, 1
      %p145 = scmp.eq.s32.totalorder %s32, 3
      %p146 = scmp.ne.s32.totalorder %s141, %s143
      %p147 = scmp.eq.s32.totalorder %s32, 0
      %p148 = por %p146, %p147
      %p149 = scmp.ne.s32.totalorder %s141, %s143
      %p150 = scmp.eq.s32.totalorder %s37, 3
      %p151 = por %p149, %p150
      %p152 = scmp.ne.s32.totalorder %s143, %s144
      %p153 = scmp.eq.s32.totalorder %s37, 0
      %p154 = por %p152, %p153
      %p155 = scmp.ne.s32.totalorder %s143, %s144
      %p156 = scmp.eq.s32.totalorder %s38, 3
      %p157 = por %p155, %p156
      %p159 = scmp.ne.s32.totalorder %s144, %s158
      %p160 = scmp.eq.s32.totalorder %s38, 0
      %p161 = por %p159, %p160
      %s163 = sadd.s32 %s162, 1
      %p166 = scmp.eq.s32.totalorder %s32, 3
      %p167 = scmp.ne.s32.totalorder %s162, %s164
      %p168 = scmp.eq.s32.totalorder %s32, 0
      %p169 = por %p167, %p168
      %p170 = scmp.ne.s32.totalorder %s162, %s164
      %p171 = scmp.eq.s32.totalorder %s37, 3
      %p172 = por %p170, %p171
      %p173 = scmp.ne.s32.totalorder %s164, %s165
      %p174 = scmp.eq.s32.totalorder %s37, 0
      %p175 = por %p173, %p174
      %p176 = scmp.ne.s32.totalorder %s164, %s165
      %p177 = scmp.eq.s32.totalorder %s38, 3
      %p178 = por %p176, %p177
      %p180 = scmp.ne.s32.totalorder %s165, %s179
      %p181 = scmp.eq.s32.totalorder %s38, 0
      %p182 = por %p180, %p181
      %s184 = sadd.s32 %s183, 1
      %p187 = scmp.eq.s32.totalorder %s32, 3
      %p188 = scmp.ne.s32.totalorder %s183, %s185
      %p189 = scmp.eq.s32.totalorder %s32, 0
      %p190 = por %p188, %p189
      %p191 = scmp.ne.s32.totalorder %s183, %s185
      %p192 = scmp.eq.s32.totalorder %s37, 3
      %p193 = por %p191, %p192
      %p194 = scmp.ne.s32.totalorder %s185, %s186
      %p195 = scmp.eq.s32.totalorder %s37, 0
      %p196 = por %p194, %p195
      %p197 = scmp.ne.s32.totalorder %s185, %s186
      %p198 = scmp.eq.s32.totalorder %s38, 3
      %p199 = por %p197, %p198
      %p201 = scmp.ne.s32.totalorder %s186, %s200
      %p202 = scmp.eq.s32.totalorder %s38, 0
      %p203 = por %p201, %p202
      %s205 = sadd.s32 %s204, 1
      %p208 = scmp.eq.s32.totalorder %s32, 3
      %p209 = scmp.ne.s32.totalorder %s204, %s206
      %p210 = scmp.eq.s32.totalorder %s32, 0
      %p211 = por %p209, %p210
      %p212 = scmp.ne.s32.totalorder %s204, %s206
      %p213 = scmp.eq.s32.totalorder %s37, 3
      %p214 = por %p212, %p213
      %p215 = scmp.ne.s32.totalorder %s206, %s207
      %p216 = scmp.eq.s32.totalorder %s37, 0
      %p217 = por %p215, %p216
      %p218 = scmp.ne.s32.totalorder %s206, %s207
      %p219 = scmp.eq.s32.totalorder %s38, 3
      %p220 = por %p218, %p219
      %p222 = scmp.ne.s32.totalorder %s207, %s221
      %p223 = scmp.eq.s32.totalorder %s38, 0
      %p224 = por %p222, %p223
      %s226 = sadd.s32 %s225, 1
      %p229 = scmp.eq.s32.totalorder %s32, 3
      %p230 = scmp.ne.s32.totalorder %s225, %s227
      %p231 = scmp.eq.s32.totalorder %s32, 0
      %p232 = por %p230, %p231
      %p233 = scmp.ne.s32.totalorder %s225, %s227
      %p234 = scmp.eq.s32.totalorder %s37, 3
      %p235 = por %p233, %p234
      %p236 = scmp.ne.s32.totalorder %s227, %s228
      %p237 = scmp.eq.s32.totalorder %s37, 0
      %p238 = por %p236, %p237
      %p239 = scmp.ne.s32.totalorder %s227, %s228
      %p240 = scmp.eq.s32.totalorder %s38, 3
      %p241 = por %p239, %p240
      %p243 = scmp.ne.s32.totalorder %s228, %s242
      %p244 = scmp.eq.s32.totalorder %s38, 0
      %p245 = por %p243, %p244
      %s247 = sadd.s32 %s246, 1
      %p250 = scmp.eq.s32.totalorder %s32, 3
      %p251 = scmp.ne.s32.totalorder %s246, %s248
      %p252 = scmp.eq.s32.totalorder %s32, 0
      %p253 = por %p251, %p252
      %p254 = scmp.ne.s32.totalorder %s246, %s248
      %p255 = scmp.eq.s32.totalorder %s37, 3
      %p256 = por %p254, %p255
      %p257 = scmp.ne.s32.totalorder %s248, %s249
      %p258 = scmp.eq.s32.totalorder %s37, 0
      %p259 = por %p257, %p258
      %p260 = scmp.ne.s32.totalorder %s248, %s249
      %p261 = scmp.eq.s32.totalorder %s38, 3
      %p262 = por %p260, %p261
      %p264 = scmp.ne.s32.totalorder %s249, %s263
      %p265 = scmp.eq.s32.totalorder %s38, 0
      %p266 = por %p264, %p265
      %s268 = sadd.s32 %s267, 1
      %p271 = scmp.eq.s32.totalorder %s32, 3
      %p272 = scmp.ne.s32.totalorder %s267, %s269
      %p273 = scmp.eq.s32.totalorder %s32, 0
      %p274 = por %p272, %p273
      %p275 = scmp.ne.s32.totalorder %s267, %s269
      %p276 = scmp.eq.s32.totalorder %s37, 3
      %p277 = por %p275, %p276
      %p278 = scmp.ne.s32.totalorder %s269, %s270
      %p279 = scmp.eq.s32.totalorder %s37, 0
      %p280 = por %p278, %p279
      %p281 = scmp.ne.s32.totalorder %s269, %s270
      %p282 = scmp.eq.s32.totalorder %s38, 3
      %p283 = por %p281, %p282
      %p285 = scmp.ne.s32.totalorder %s270, %s284
      %p286 = scmp.eq.s32.totalorder %s38, 0
      %p287 = por %p285, %p286
      %s288 = ssub.s32 %s39, %s51
      %s289 = ssub.s32 %s40, %s47
      %s290 = sor.u32 %s288, %s289
      %p291 = scmp.eq.s32.totalorder %s290, 0
      %s293 = sadd.s32 %s292, 1
      %s294 = scalar_select %p291, %s292, %s293
      %p297 = pneg %p291
      %p298 = scmp.eq.s32.totalorder %s32, 3
      %p299 = por %p297, %p298
      %p300 = scmp.ne.s32.totalorder %s292, %s295
      %p301 = scmp.eq.s32.totalorder %s32, 0
      %p302 = por %p300, %p301
      %p303 = scmp.ne.s32.totalorder %s292, %s295
      %p304 = scmp.eq.s32.totalorder %s37, 3
      %p305 = por %p303, %p304
      %p306 = scmp.ne.s32.totalorder %s295, %s296
      %p307 = scmp.eq.s32.totalorder %s37, 0
      %p308 = por %p306, %p307
      %p309 = scmp.ne.s32.totalorder %s295, %s296
      %p310 = scmp.eq.s32.totalorder %s38, 3
      %p311 = por %p309, %p310
      %p313 = scmp.ne.s32.totalorder %s296, %s312
      %p314 = scmp.eq.s32.totalorder %s38, 0
      %p315 = por %p313, %p314
      %p316 = scmp.le.s32.totalorder 1, %s32
      %p317 = scmp.lt.s32.totalorder %s32, 5
      %p318 = pnand %p316, %p317
      %p319 = pneg %p318
      // Predicated region
      $region9: #{tpu_custom_call.1} parent=5 // pred_check
        _
      $region10: #{tpu_custom_call.1} parent=5 // pred_check_branch
        %321 = sbr.rel (%p318) target = $region12
      $region11: #{tpu_custom_call.1} parent=5 // pred_region
        %s322 = ssub.s32 %s32, 1
        // Predicated region
        $region13: #{tpu_custom_call.1} parent=11 // pred_check
          %p323 = pneg %p91
        $region14: #{tpu_custom_call.1} parent=11 // pred_check_branch
          %325 = sbr.rel (%p323) target = $region16
        $region15: #{tpu_custom_call.1} parent=11 // pred_region
          _
        $region16: #{tpu_custom_call.1} parent=11 // pred_fallthru
          _
        // Predicated region
        $region17: #{tpu_custom_call.1} parent=11 // pred_check
          %p326 = pneg %p112
        $region18: #{tpu_custom_call.1} parent=11 // pred_check_branch
          %328 = sbr.rel (%p326) target = $region20
        $region19: #{tpu_custom_call.1} parent=11 // pred_region
          _
        $region20: #{tpu_custom_call.1} parent=11 // pred_fallthru
          _
        // Predicated region
        $region21: #{tpu_custom_call.1} parent=11 // pred_check
          %p329 = pneg %p133
        $region22: #{tpu_custom_call.1} parent=11 // pred_check_branch
          %331 = sbr.rel (%p329) target = $region24
        $region23: #{tpu_custom_call.1} parent=11 // pred_region
          _
        $region24: #{tpu_custom_call.1} parent=11 // pred_fallthru
          _
        // Predicated region
        $region25: #{tpu_custom_call.1} parent=11 // pred_check
          %p332 = pneg %p154
        $region26: #{tpu_custom_call.1} parent=11 // pred_check_branch
          %334 = sbr.rel (%p332) target = $region28
        $region27: #{tpu_custom_call.1} parent=11 // pred_region
          %s336 = ssub.s32 16, 16
          %337 = vsyncadd [#allocation8], %s336
          %s339 = sshll.u32 [#allocation7], 4
          %s340 = int_to_ptr.vmem [resolvable:$true] %s339
          %342 = dma.hbm_to_vmem [thread:$0]  %s5, 16, %s340, [#allocation8]
        $region28: #{tpu_custom_call.1} parent=11 // pred_fallthru
          _
        // Predicated region
        $region29: #{tpu_custom_call.1} parent=11 // pred_check
          %p343 = pneg %p175
        $region30: #{tpu_custom_call.1} parent=11 // pred_check_branch
          %345 = sbr.rel (%p343) target = $region32
        $region31: #{tpu_custom_call.1} parent=11 // pred_region
          %s347 = ssub.s32 256, 256
          %348 = vsyncadd [#allocation8], %s347
          %s349 = sshll.u32 [#allocation9], 4
          %s350 = int_to_ptr.vmem [resolvable:$true] %s349
          %355 = dma.hbm_to_vmem [thread:$0]  %s6, 256, %s350, [#allocation8], 64, 64, 4
        $region32: #{tpu_custom_call.1} parent=11 // pred_fallthru
          _
        // Predicated region
        $region33: #{tpu_custom_call.1} parent=11 // pred_check
          %p356 = pneg %p196
        $region34: #{tpu_custom_call.1} parent=11 // pred_check_branch
          %358 = sbr.rel (%p356) target = $region36
        $region35: #{tpu_custom_call.1} parent=11 // pred_region
          %s360 = ssub.s32 16, 16
          %361 = vsyncadd [#allocation11], %s360
          %s363 = sshll.u32 [#allocation10], 4
          %s364 = int_to_ptr.vmem [resolvable:$true] %s363
          %366 = dma.hbm_to_vmem [thread:$0]  %s7, 16, %s364, [#allocation11]
        $region36: #{tpu_custom_call.1} parent=11 // pred_fallthru
          _
        // Predicated region
        $region37: #{tpu_custom_call.1} parent=11 // pred_check
          %p367 = pneg %p217
        $region38: #{tpu_custom_call.1} parent=11 // pred_check_branch
          %369 = sbr.rel (%p367) target = $region40
        $region39: #{tpu_custom_call.1} parent=11 // pred_region
          _
        $region40: #{tpu_custom_call.1} parent=11 // pred_fallthru
          _
        // Predicated region
        $region41: #{tpu_custom_call.1} parent=11 // pred_check
          %p370 = pneg %p238
        $region42: #{tpu_custom_call.1} parent=11 // pred_check_branch
          %372 = sbr.rel (%p370) target = $region44
        $region43: #{tpu_custom_call.1} parent=11 // pred_region
          _
        $region44: #{tpu_custom_call.1} parent=11 // pred_fallthru
          _
        // Predicated region
        $region45: #{tpu_custom_call.1} parent=11 // pred_check
          %p373 = pneg %p259
        $region46: #{tpu_custom_call.1} parent=11 // pred_check_branch
          %375 = sbr.rel (%p373) target = $region48
        $region47: #{tpu_custom_call.1} parent=11 // pred_region
          _
        $region48: #{tpu_custom_call.1} parent=11 // pred_fallthru
          _
        // Predicated region
        $region49: #{tpu_custom_call.1} parent=11 // pred_check
          %p376 = pneg %p280
        $region50: #{tpu_custom_call.1} parent=11 // pred_check_branch
          %378 = sbr.rel (%p376) target = $region52
        $region51: #{tpu_custom_call.1} parent=11 // pred_region
          _
        $region52: #{tpu_custom_call.1} parent=11 // pred_fallthru
          _
      $region12: #{tpu_custom_call.1} parent=5 // pred_fallthru
        _
      %p379 = scmp.lt.s32.totalorder %s32, 4
      // Predicated region
      $region53: #{tpu_custom_call.1} parent=5 // pred_check
        %p380 = pneg %p379
      $region54: #{tpu_custom_call.1} parent=5 // pred_check_branch
        %382 = sbr.rel (%p380) target = $region56
      $region55: #{tpu_custom_call.1} parent=5 // pred_region
        // Predicated region
        $region57: #{tpu_custom_call.1} parent=55 // pred_check
          %p383 = pneg %p64
        $region58: #{tpu_custom_call.1} parent=55 // pred_check_branch
          %385 = sbr.rel (%p383) target = $region60
        $region59: #{tpu_custom_call.1} parent=55 // pred_region
          %s386 = sand.u32 %s54, 1
          %s387 = scalar_lea.sflag [#allocation5], %s386
          %s388 = sand.u32 %s54, 1
          %s389 = smul.addr %s388, 16
          %s390 = scalar_lea.vmem [#allocation4], %s389
          %s392 = ssub.s32 256, 256
          %393 = vsyncadd %s387, %s392
          %s394 = smul.addr %s39, 2
          %s395 = smul.addr %s394, 128
          %s396 = scalar_lea.hbm %s1, %s395
          %s397 = sshll.u32 %s390, 4
          %s398 = int_to_ptr.vmem [resolvable:$true] %s397
          %403 = dma.hbm_to_vmem [thread:$0]  %s396, 256, %s398, %s387, 128, 128, 8
        $region60: #{tpu_custom_call.1} parent=55 // pred_fallthru
          _
      $region56: #{tpu_custom_call.1} parent=5 // pred_fallthru
        _
      %p404 = scmp.le.s32.totalorder 1, %s32
      %p405 = scmp.lt.s32.totalorder %s32, 5
      %p406 = pnand %p404, %p405
      %p407 = pneg %p406
      // Predicated region
      $region61: #{tpu_custom_call.1} parent=5 // pred_check
        _
      $region62: #{tpu_custom_call.1} parent=5 // pred_check_branch
        %409 = sbr.rel (%p406) target = $region64
      $region63: #{tpu_custom_call.1} parent=5 // pred_region
        %s410 = ssub.s32 %s32, 1
        %s411 = sand.u32 %s57, 1
        %s412 = scalar_lea.sflag [#allocation5], %s411
        %s413 = sand.u32 %s57, 1
        %s414 = smul.addr %s413, 16
        %s415 = scalar_lea.vmem [#allocation4], %s414
        // Predicated region
        $region65: #{tpu_custom_call.1} parent=63 // pred_check
          %p416 = pneg %p70
        $region66: #{tpu_custom_call.1} parent=63 // pred_check_branch
          %418 = sbr.rel (%p416) target = $region68
        $region67: #{tpu_custom_call.1} parent=63 // pred_region
          %419 = dma.done %s412, 256
        $region68: #{tpu_custom_call.1} parent=63 // pred_fallthru
          _
        // Predicated region
        $region69: #{tpu_custom_call.1} parent=63 // pred_check
          %p420 = pneg %p154
        $region70: #{tpu_custom_call.1} parent=63 // pred_check_branch
          %422 = sbr.rel (%p420) target = $region72
        $region71: #{tpu_custom_call.1} parent=63 // pred_region
          %423 = dma.done [#allocation8], 16
        $region72: #{tpu_custom_call.1} parent=63 // pred_fallthru
          _
        // Predicated region
        $region73: #{tpu_custom_call.1} parent=63 // pred_check
          %p424 = pneg %p175
        $region74: #{tpu_custom_call.1} parent=63 // pred_check_branch
          %426 = sbr.rel (%p424) target = $region76
        $region75: #{tpu_custom_call.1} parent=63 // pred_region
          %427 = dma.done [#allocation8], 256
        $region76: #{tpu_custom_call.1} parent=63 // pred_fallthru
          _
        // Predicated region
        $region77: #{tpu_custom_call.1} parent=63 // pred_check
          %p428 = pneg %p196
        $region78: #{tpu_custom_call.1} parent=63 // pred_check_branch
          %430 = sbr.rel (%p428) target = $region80
        $region79: #{tpu_custom_call.1} parent=63 // pred_region
          %431 = dma.done [#allocation11], 16
        $region80: #{tpu_custom_call.1} parent=63 // pred_fallthru
          _
        %s432 = sand.u32 %s57, 1
        %s433 = scalar_lea.sflag [#allocation5], %s432
        %s434 = sand.u32 %s57, 1
        %s435 = smul.addr %s434, 16
        %s436 = scalar_lea.vmem [#allocation4], %s435
        %p437 = pneg %p70
        %p438 = pneg %p67
        %p439 = pneg %p91
        %p440 = pneg %p88
        %p441 = pneg %p112
        %p442 = pneg %p109
        %p443 = pneg %p133
        %p444 = pneg %p130
        %p445 = pneg %p154
        %p446 = pneg %p151
        %p447 = pneg %p175
        %p448 = pneg %p172
        %p449 = pneg %p196
        %p450 = pneg %p193
        %p451 = pneg %p217
        %p452 = pneg %p214
        %p453 = pneg %p238
        %p454 = pneg %p235
        %p455 = pneg %p259
        %p456 = pneg %p256
        %p457 = pneg %p280
        %p458 = pneg %p277
        %p459 = pneg %p308
        %p460 = pneg %p305
        %s461 = sand.u32 %s295, 1
        %s462 = scalar_lea.sflag [#allocation6], %s461
        %s463 = sand.u32 %s295, 1
        %s464 = smul.addr %s463, 8
        %s465 = scalar_lea.vmem [#allocation12], %s464
        %v467 = vld [vmem:[%s415] sm:$0xff]
        %v468 = vld [vmem:[%s415 + $0x8] sm:$0xff]
        %s469 = smul.u32 %s42, 8
        %s470 = scalar_lea.vmem %s415, %s469 [#allocation4]
        %v471 = vld [vmem:[%s470] sm:$0xff]
        %v472 = vpack.c.bf16 %v468, %v467
        %v473 = vpack.c.bf16 %v471, %v471
        %v474 = vld [vmem:[%s2] sm:$0xf]
        %v475 = vld [vmem:[%s2 + $0x4] sm:$0xf]
        %v476 = vld [vmem:[%s2 + $0x8] sm:$0xf]
        %v477 = vld [vmem:[%s2 + $0xc] sm:$0xf]
        %v478 = vld [vmem:[%s3] sm:$0x1]
        %v480 = vlaneseq
        %v481 = vshrl.u32 %v480, 7
        %v482 = vsub.s32 0, %v481
        %v483 = vrot.slane %v478, %v482
        %v489 = vunpack.c.l.b16 %v474
        %v490 = vunpack.c.l.b16 %v475
        %v491 = vunpack.c.l.b16 %v476
        %v492 = vunpack.c.l.b16 %v477
        %v493 = vpack.c.b16 %v490, %v489
        %v494 = vpack.c.b16 %v492, %v491
        %vm497 = vcmask 261120
        %v499 = vsel %vm497, %v473, 0
        %501 = vmatprep.subr.bf16.mxu0 0
        %502 = vmatpush1.bf16.msra.mxu0 %v493
        %503 = vmatprep.subr.bf16.mxu0 0
        %504 = vmatpush1.bf16.msra.mxu0 %v494
        %505 = vmatprep.subr.bf16.mxu0 0
        %506 = vmatpush1.bf16.msra.mxu0 0
        %507 = vmatprep.subr.bf16.mxu0 0
        %508 = vmatpush1.bf16.msra.mxu0 0
        %509 = vmatprep.subr.bf16.mxu0 0
        %510 = vmatpush1.bf16.msra.mxu0 0
        %511 = vmatprep.subr.bf16.mxu0 0
        %512 = vmatpush1.bf16.msra.mxu0 0
        %513 = vmatprep.subr.bf16.mxu0 0
        %514 = vmatpush1.bf16.msra.mxu0 0
        %515 = vmatprep.subr.bf16.mxu0 0
        %516 = vmatpush1.bf16.msra.mxu0 0
        %517 = vmatprep.subr.bf16.mxu0 0
        %518 = vmatpush1.bf16.msra.mxu0 0
        %519 = vmatprep.subr.bf16.mxu0 0
        %520 = vmatpush1.bf16.msra.mxu0 0
        %521 = vmatprep.subr.bf16.mxu0 0
        %522 = vmatpush1.bf16.msra.mxu0 0
        %523 = vmatprep.subr.bf16.mxu0 0
        %524 = vmatpush1.bf16.msra.mxu0 0
        %525 = vmatprep.subr.bf16.mxu0 0
        %526 = vmatpush1.bf16.msra.mxu0 0
        %527 = vmatprep.subr.bf16.mxu0 0
        %528 = vmatpush1.bf16.msra.mxu0 0
        %529 = vmatprep.subr.bf16.mxu0 0
        %530 = vmatpush1.bf16.msra.mxu0 0
        %531 = vmatprep.subr.bf16.mxu0 0
        %532 = vmatpush1.bf16.msra.mxu0 0
        %533 = vmatprep.mubr.bf16.mxu0 0
        %534 = vmatmul.mubr.bf16.gmra.mrb[0].mxu0 %v499
        %v535 = vpop.f32.mrb[0].mxu0
        %v536 = vadd.f32 %v483, %v535
        %v537 = vpop.f32.mrb[0].mxu0
        %v538 = vpop.f32.mrb[0].mxu0
        %v539 = vpop.f32.mrb[0].mxu0
        %540 = vdwg.mxu0
        %v541 = vld [vmem:[%s4] sm:$0xf]
        %v542 = vld [vmem:[%s4 + $0x4] sm:$0xf]
        %v543 = vld [vmem:[%s4 + $0x8] sm:$0xf]
        %v544 = vld [vmem:[%s4 + $0xc] sm:$0xf]
        %v545 = vld [vmem:[#allocation7] sm:$0x1]
        %v547 = vlaneseq
        %v548 = vshrl.u32 %v547, 7
        %v549 = vsub.s32 0, %v548
        %v550 = vrot.slane %v545, %v549
        %v556 = vunpack.c.l.b16 %v541
        %v557 = vunpack.c.l.b16 %v542
        %v558 = vunpack.c.l.b16 %v543
        %v559 = vunpack.c.l.b16 %v544
        %v560 = vpack.c.b16 %v557, %v556
        %v561 = vpack.c.b16 %v559, %v558
        %v565 = vsel %vm497, %v472, 0
        %567 = vmatprep.subr.bf16.mxu0 0
        %568 = vmatpush1.bf16.msra.mxu0 %v560
        %569 = vmatprep.subr.bf16.mxu0 0
        %570 = vmatpush1.bf16.msra.mxu0 %v561
        %571 = vmatprep.subr.bf16.mxu0 0
        %572 = vmatpush1.bf16.msra.mxu0 0
        %573 = vmatprep.subr.bf16.mxu0 0
        %574 = vmatpush1.bf16.msra.mxu0 0
        %575 = vmatprep.subr.bf16.mxu0 0
        %576 = vmatpush1.bf16.msra.mxu0 0
        %577 = vmatprep.subr.bf16.mxu0 0
        %578 = vmatpush1.bf16.msra.mxu0 0
        %579 = vmatprep.subr.bf16.mxu0 0
        %580 = vmatpush1.bf16.msra.mxu0 0
        %581 = vmatprep.subr.bf16.mxu0 0
        %582 = vmatpush1.bf16.msra.mxu0 0
        %583 = vmatprep.subr.bf16.mxu0 0
        %584 = vmatpush1.bf16.msra.mxu0 0
        %585 = vmatprep.subr.bf16.mxu0 0
        %586 = vmatpush1.bf16.msra.mxu0 0
        %587 = vmatprep.subr.bf16.mxu0 0
        %588 = vmatpush1.bf16.msra.mxu0 0
        %589 = vmatprep.subr.bf16.mxu0 0
        %590 = vmatpush1.bf16.msra.mxu0 0
        %591 = vmatprep.subr.bf16.mxu0 0
        %592 = vmatpush1.bf16.msra.mxu0 0
        %593 = vmatprep.subr.bf16.mxu0 0
        %594 = vmatpush1.bf16.msra.mxu0 0
        %595 = vmatprep.subr.bf16.mxu0 0
        %596 = vmatpush1.bf16.msra.mxu0 0
        %597 = vmatprep.subr.bf16.mxu0 0
        %598 = vmatpush1.bf16.msra.mxu0 0
        %599 = vmatprep.mubr.bf16.mxu0 0
        %600 = vmatmul.mubr.bf16.gmra.mrb[0].mxu0 %v565
        %v601 = vpop.f32.mrb[0].mxu0
        %v602 = vadd.f32 %v550, %v601
        %v603 = vpop.f32.mrb[0].mxu0
        %v604 = vpop.f32.mrb[0].mxu0
        %v605 = vadd.f32 %v550, %v604
        %v606 = vpop.f32.mrb[0].mxu0
        %607 = vdwg.mxu0
        %v608 = vpack.c.bf16 %v536, %v536
        %v609 = vpack.c.bf16 %v605, %v602
        %v610 = vld [vmem:[%s8] sm:$0xf]
        %v611 = vld [vmem:[%s8 + $0x4] sm:$0xf]
        %v612 = vld [vmem:[%s8 + $0x8] sm:$0xf]
        %v613 = vld [vmem:[%s8 + $0xc] sm:$0xf]
        %v618 = vunpack.c.l.b16 %v610
        %v619 = vunpack.c.l.b16 %v611
        %v620 = vunpack.c.l.b16 %v612
        %v621 = vunpack.c.l.b16 %v613
        %v622 = vpack.c.b16 %v619, %v618
        %v623 = vpack.c.b16 %v621, %v620
        %v627 = vsel %vm497, %v608, 0
        %629 = vmatprep.subr.bf16.mxu0 0
        %630 = vmatpush1.bf16.msra.mxu0 %v622
        %631 = vmatprep.subr.bf16.mxu0 0
        %632 = vmatpush1.bf16.msra.mxu0 %v623
        %633 = vmatprep.subr.bf16.mxu0 0
        %634 = vmatpush1.bf16.msra.mxu0 0
        %635 = vmatprep.subr.bf16.mxu0 0
        %636 = vmatpush1.bf16.msra.mxu0 0
        %637 = vmatprep.subr.bf16.mxu0 0
        %638 = vmatpush1.bf16.msra.mxu0 0
        %639 = vmatprep.subr.bf16.mxu0 0
        %640 = vmatpush1.bf16.msra.mxu0 0
        %641 = vmatprep.subr.bf16.mxu0 0
        %642 = vmatpush1.bf16.msra.mxu0 0
        %643 = vmatprep.subr.bf16.mxu0 0
        %644 = vmatpush1.bf16.msra.mxu0 0
        %645 = vmatprep.subr.bf16.mxu0 0
        %646 = vmatpush1.bf16.msra.mxu0 0
        %647 = vmatprep.subr.bf16.mxu0 0
        %648 = vmatpush1.bf16.msra.mxu0 0
        %649 = vmatprep.subr.bf16.mxu0 0
        %650 = vmatpush1.bf16.msra.mxu0 0
        %651 = vmatprep.subr.bf16.mxu0 0
        %652 = vmatpush1.bf16.msra.mxu0 0
        %653 = vmatprep.subr.bf16.mxu0 0
        %654 = vmatpush1.bf16.msra.mxu0 0
        %655 = vmatprep.subr.bf16.mxu0 0
        %656 = vmatpush1.bf16.msra.mxu0 0
        %657 = vmatprep.subr.bf16.mxu0 0
        %658 = vmatpush1.bf16.msra.mxu0 0
        %659 = vmatprep.subr.bf16.mxu0 0
        %660 = vmatpush1.bf16.msra.mxu0 0
        %661 = vmatprep.mubr.bf16.mxu0 0
        %662 = vmatmul.mubr.bf16.gmra.mrb[0].mxu0 %v627
        %v663 = vpop.f32.mrb[0].mxu0
        %v664 = vadd.f32 0.0, %v663
        %v665 = vpop.f32.mrb[0].mxu0
        %v666 = vpop.f32.mrb[0].mxu0
        %v667 = vpop.f32.mrb[0].mxu0
        %668 = vdwg.mxu0
        %s669 = sld [smem:[#allocation3 + %s41]]
        %v670 = vlaneseq
        %v671 = vshrl.u32 %v670, 7
        %v672 = vstv %s469
        %v673 = vadd.s32 %v672, %v671
        %v674 = vlaneseq
        %v675 = vand.u32 %v674, 127
        %v676 = vsub.s32 %v675, %v673
        %v677 = vstv %s669
        %vm678 = vcmp.lt.s32.totalorder %v673, %v677
        %vm679 = vcmp.lt.s32.totalorder %v675, %v677
        %vm680 = vmand %vm678, %vm679
        %v681 = vld [vmem:[%s9] sm:$0xff]
        %v682 = vld [vmem:[%s9 + $0x8] sm:$0x1]
        %v683 = vld [vmem:[#allocation9] sm:$0xf]
        %v684 = vld [vmem:[#allocation9 + $0x4] sm:$0xf]
        %v685 = vld [vmem:[#allocation9 + $0x8] sm:$0xf]
        %v686 = vld [vmem:[#allocation9 + $0xc] sm:$0xf]
        %vm687 = vcmp.eq.s32.totalorder %v676, 4294967292
        %689 = vset.pattern.permute.xlu0 0
        %690 = vperm.xlu0 %689, %v664
        %v691 = vpop.permute.xlu0 %690
        %v693 = vsel %vm687, %v691, 0.0
        %vm694 = vcmask 64512
        %v695 = vsel %vm694, %v608, 0
        %v698 = vsel %vm694, %v609, 0
        %700 = vmatprep.subr.bf16.mxu0 0
        %701 = vmatpush1.bf16.xpose.msra.mxu0 %v698
        %702 = vmatprep.subr.bf16.mxu0 0
        %703 = vmatpush1.bf16.xpose.msra.mxu0 0
        %704 = vmatprep.subr.bf16.mxu0 0
        %705 = vmatpush1.bf16.xpose.msra.mxu0 0
        %706 = vmatprep.subr.bf16.mxu0 0
        %707 = vmatpush1.bf16.xpose.msra.mxu0 0
        %708 = vmatprep.subr.bf16.mxu0 0
        %709 = vmatpush1.bf16.xpose.msra.mxu0 0
        %710 = vmatprep.subr.bf16.mxu0 0
        %711 = vmatpush1.bf16.xpose.msra.mxu0 0
        %712 = vmatprep.subr.bf16.mxu0 0
        %713 = vmatpush1.bf16.xpose.msra.mxu0 0
        %714 = vmatprep.subr.bf16.mxu0 0
        %715 = vmatpush1.bf16.xpose.msra.mxu0 0
        %716 = vmatprep.subr.bf16.mxu0 0
        %717 = vmatpush1.bf16.xpose.msra.mxu0 0
        %718 = vmatprep.subr.bf16.mxu0 0
        %719 = vmatpush1.bf16.xpose.msra.mxu0 0
        %720 = vmatprep.subr.bf16.mxu0 0
        %721 = vmatpush1.bf16.xpose.msra.mxu0 0
        %722 = vmatprep.subr.bf16.mxu0 0
        %723 = vmatpush1.bf16.xpose.msra.mxu0 0
        %724 = vmatprep.subr.bf16.mxu0 0
        %725 = vmatpush1.bf16.xpose.msra.mxu0 0
        %726 = vmatprep.subr.bf16.mxu0 0
        %727 = vmatpush1.bf16.xpose.msra.mxu0 0
        %728 = vmatprep.subr.bf16.mxu0 0
        %729 = vmatpush1.bf16.xpose.msra.mxu0 0
        %730 = vmatprep.subr.bf16.mxu0 0
        %731 = vmatpush1.bf16.xpose.msra.mxu0 0
        %732 = vmatprep.mubr.bf16.mxu0 0
        %733 = vmatmul.mubr.bf16.gmra.mrb[0].mxu0 %v695
        %v734 = vpop.f32.mrb[0].mxu0
        %v735 = vadd.f32 %v693, %v734
        %v736 = vpop.f32.mrb[0].mxu0
        %v737 = vpop.f32.mrb[0].mxu0
        %v738 = vpop.f32.mrb[0].mxu0
        %739 = vdwg.mxu0
        %vm740 = vcmp.eq.s32.totalorder %v676, 4294967293
        %741 = vset.pattern.permute.xlu0 1
        %742 = vperm.xlu0 %741, %v664
        %v743 = vpop.permute.xlu0 %742
        %v745 = vsel %vm740, %v743, 0.0
        %v746 = vadd.f32 %v735, %v745
        %vm747 = vcmp.eq.s32.totalorder %v676, 4294967294
        %748 = vset.pattern.permute.xlu0 2
        %749 = vperm.xlu0 %748, %v664
        %v750 = vpop.permute.xlu0 %749
        %v752 = vsel %vm747, %v750, 0.0
        %v753 = vadd.f32 %v746, %v752
        %vm754 = vcmp.eq.s32.totalorder %v676, 4294967295
        %755 = vset.pattern.permute.xlu0 3
        %756 = vperm.xlu0 %755, %v664
        %v757 = vpop.permute.xlu0 %756
        %v759 = vsel %vm754, %v757, 0.0
        %v760 = vadd.f32 %v753, %v759
        %vm761 = vcmp.eq.s32.totalorder %v676, 0
        %762 = vset.pattern.permute.xlu0 4
        %763 = vperm.xlu0 %762, %v664
        %v764 = vpop.permute.xlu0 %763
        %v766 = vsel %vm761, %v764, 0.0
        %v767 = vadd.f32 %v760, %v766
        %vm768 = vcmp.eq.s32.totalorder %v676, 1
        %769 = vset.pattern.permute.xlu0 5
        %770 = vperm.xlu0 %769, %v664
        %v771 = vpop.permute.xlu0 %770
        %v773 = vsel %vm768, %v771, 0.0
        %v774 = vadd.f32 %v767, %v773
        %vm775 = vcmp.eq.s32.totalorder %v676, 2
        %776 = vset.pattern.permute.xlu0 6
        %777 = vperm.xlu0 %776, %v664
        %v778 = vpop.permute.xlu0 %777
        %v780 = vsel %vm775, %v778, 0.0
        %v781 = vadd.f32 %v774, %v780
        %vm782 = vcmp.eq.s32.totalorder %v676, 3
        %783 = vset.pattern.permute.xlu0 7
        %784 = vperm.xlu0 %783, %v664
        %v785 = vpop.permute.xlu0 %784
        %v787 = vsel %vm782, %v785, 0.0
        %v788 = vadd.f32 %v781, %v787
        %vm789 = vcmp.eq.s32.totalorder %v676, 4
        %790 = vset.pattern.permute.xlu0 8
        %791 = vperm.xlu0 %790, %v664
        %v792 = vpop.permute.xlu0 %791
        %v794 = vsel %vm789, %v792, 0.0
        %v795 = vadd.f32 %v788, %v794
        %v796 = vsel %vm680, %v795, -10000.0
        %vm797 = vcmask 130048
        %v798 = vsel %vm797, %v796, -inf
        %799 = vmax.xlane.f32.xlu0 %v798
        %v800 = vpop.xlane.xlu0 %799
        %v801 = vsub.f32 %v796, %v800
        %v802 = vmul.f32 %v801, 1.442695
        %v803 = vpow.pop %v802
        %v804 = vsel %vm797, %v803, 0.0
        %805 = vadd.xlane.f32.xlu0 %v804
        %v806 = vpop.xlane.xlu0 %805
        %v807 = vrcp.pop %v806
        %v808 = vmul.f32 1.0, %v807
        %v809 = vmul.f32 %v803, %v808
        %v810 = vpack.c.bf16 %v809, %v809
        %v811 = vsel %vm687, %v809, 0.0
        %v812 = vsel %vm797, %v811, 0.0
        %813 = vadd.xlane.f32.xlu0 %v812
        %v814 = vpop.xlane.xlu0 %813
        %v815 = vlaneseq
        %v816 = vshrl.u32 %v815, 7
        %v817 = vsub.s32 0, %v816
        %v818 = vrot.slane %v681, %v817
        %v819 = vmul.f32 %v814, %v818
        %821 = vrot.lane.b32.xlu0 %v609, 96
        %v822 = vpop.permute.xlu0 %821
        %v825 = vsel %vm797, %v810, 0
        %827 = vmatprep.subr.bf16.mxu0 0
        %828 = vmatpush1.bf16.msra.mxu0 %v822
        %829 = vmatprep.subr.bf16.mxu0 0
        %830 = vmatpush1.bf16.msra.mxu0 0
        %831 = vmatprep.subr.bf16.mxu0 0
        %832 = vmatpush1.bf16.msra.mxu0 0
        %833 = vmatprep.subr.bf16.mxu0 0
        %834 = vmatpush1.bf16.msra.mxu0 0
        %835 = vmatprep.subr.bf16.mxu0 0
        %836 = vmatpush1.bf16.msra.mxu0 0
        %837 = vmatprep.subr.bf16.mxu0 0
        %838 = vmatpush1.bf16.msra.mxu0 0
        %839 = vmatprep.subr.bf16.mxu0 0
        %840 = vmatpush1.bf16.msra.mxu0 0
        %841 = vmatprep.subr.bf16.mxu0 0
        %842 = vmatpush1.bf16.msra.mxu0 0
        %843 = vmatprep.subr.bf16.mxu0 0
        %844 = vmatpush1.bf16.msra.mxu0 0
        %845 = vmatprep.subr.bf16.mxu0 0
        %846 = vmatpush1.bf16.msra.mxu0 0
        %847 = vmatprep.subr.bf16.mxu0 0
        %848 = vmatpush1.bf16.msra.mxu0 0
        %849 = vmatprep.subr.bf16.mxu0 0
        %850 = vmatpush1.bf16.msra.mxu0 0
        %851 = vmatprep.subr.bf16.mxu0 0
        %852 = vmatpush1.bf16.msra.mxu0 0
        %853 = vmatprep.subr.bf16.mxu0 0
        %854 = vmatpush1.bf16.msra.mxu0 0
        %855 = vmatprep.subr.bf16.mxu0 0
        %856 = vmatpush1.bf16.msra.mxu0 0
        %857 = vmatprep.subr.bf16.mxu0 0
        %858 = vmatpush1.bf16.msra.mxu0 0
        %859 = vmatprep.mubr.bf16.mxu0 0
        %860 = vmatmul.mubr.bf16.gmra.mrb[0].mxu0 %v825
        %v861 = vpop.f32.mrb[0].mxu0
        %v862 = vadd.f32 %v819, %v861
        %v863 = vpop.f32.mrb[0].mxu0
        %v864 = vpop.f32.mrb[0].mxu0
        %v865 = vpop.f32.mrb[0].mxu0
        %866 = vdwg.mxu0
        %v867 = vsel %vm740, %v809, 0.0
        %v868 = vsel %vm797, %v867, 0.0
        %869 = vadd.xlane.f32.xlu0 %v868
        %v870 = vpop.xlane.xlu0 %869
        %v871 = vlaneseq
        %v872 = vshrl.u32 %v871, 7
        %v873 = vsub.s32 1, %v872
        %v874 = vrot.slane %v681, %v873
        %v875 = vmul.f32 %v870, %v874
        %v876 = vadd.f32 %v862, %v875
        %v877 = vsel %vm747, %v809, 0.0
        %v878 = vsel %vm797, %v877, 0.0
        %879 = vadd.xlane.f32.xlu0 %v878
        %v880 = vpop.xlane.xlu0 %879
        %v881 = vlaneseq
        %v882 = vshrl.u32 %v881, 7
        %v883 = vsub.s32 2, %v882
        %v884 = vrot.slane %v681, %v883
        %v885 = vmul.f32 %v880, %v884
        %v886 = vadd.f32 %v876, %v885
        %v887 = vsel %vm754, %v809, 0.0
        %v888 = vsel %vm797, %v887, 0.0
        %889 = vadd.xlane.f32.xlu0 %v888
        %v890 = vpop.xlane.xlu0 %889
        %v891 = vlaneseq
        %v892 = vshrl.u32 %v891, 7
        %v893 = vsub.s32 3, %v892
        %v894 = vrot.slane %v681, %v893
        %v895 = vmul.f32 %v890, %v894
        %v896 = vadd.f32 %v886, %v895
        %v897 = vsel %vm761, %v809, 0.0
        %v898 = vsel %vm797, %v897, 0.0
        %899 = vadd.xlane.f32.xlu0 %v898
        %v900 = vpop.xlane.xlu0 %899
        %v901 = vlaneseq
        %v902 = vshrl.u32 %v901, 7
        %v903 = vsub.s32 4, %v902
        %v904 = vrot.slane %v681, %v903
        %v905 = vmul.f32 %v900, %v904
        %v906 = vadd.f32 %v896, %v905
        %v907 = vsel %vm768, %v809, 0.0
        %v908 = vsel %vm797, %v907, 0.0
        %909 = vadd.xlane.f32.xlu0 %v908
        %v910 = vpop.xlane.xlu0 %909
        %v911 = vlaneseq
        %v912 = vshrl.u32 %v911, 7
        %v913 = vsub.s32 5, %v912
        %v914 = vrot.slane %v681, %v913
        %v915 = vmul.f32 %v910, %v914
        %v916 = vadd.f32 %v906, %v915
        %v917 = vsel %vm775, %v809, 0.0
        %v918 = vsel %vm797, %v917, 0.0
        %919 = vadd.xlane.f32.xlu0 %v918
        %v920 = vpop.xlane.xlu0 %919
        %v921 = vlaneseq
        %v922 = vshrl.u32 %v921, 7
        %v923 = vsub.s32 6, %v922
        %v924 = vrot.slane %v681, %v923
        %v925 = vmul.f32 %v920, %v924
        %v926 = vadd.f32 %v916, %v925
        %v927 = vsel %vm782, %v809, 0.0
        %v928 = vsel %vm797, %v927, 0.0
        %929 = vadd.xlane.f32.xlu0 %v928
        %v930 = vpop.xlane.xlu0 %929
        %v931 = vlaneseq
        %v932 = vshrl.u32 %v931, 7
        %v933 = vsub.s32 7, %v932
        %v934 = vrot.slane %v681, %v933
        %v935 = vmul.f32 %v930, %v934
        %v936 = vadd.f32 %v926, %v935
        %v937 = vsel %vm789, %v809, 0.0
        %v938 = vsel %vm797, %v937, 0.0
        %939 = vadd.xlane.f32.xlu0 %v938
        %v940 = vpop.xlane.xlu0 %939
        %v941 = vlaneseq
        %v942 = vshrl.u32 %v941, 7
        %v943 = vsub.s32 0, %v942
        %v944 = vrot.slane %v682, %v943
        %v945 = vmul.f32 %v940, %v944
        %v946 = vadd.f32 %v936, %v945
        %v947 = vpack.c.bf16 %v946, %v946
        %948 = vset.pattern.permute.xlu0 9
        %949 = vperm.xlu0 %948, %v664
        %v950 = vpop.permute.xlu0 %949
        %v952 = vsel %vm687, %v950, 0.0
        %954 = vrot.lane.b32.xlu0 %v608, 120
        %v955 = vpop.permute.xlu0 %954
        %956 = vrot.lane.b32.xlu0 %v609, 120
        %v957 = vpop.permute.xlu0 %956
        %v959 = vsel %vm694, %v955, 0
        %v962 = vsel %vm694, %v957, 0
        %964 = vmatprep.subr.bf16.mxu0 0
        %965 = vmatpush1.bf16.xpose.msra.mxu0 %v962
        %966 = vmatprep.subr.bf16.mxu0 0
        %967 = vmatpush1.bf16.xpose.msra.mxu0 0
        %968 = vmatprep.subr.bf16.mxu0 0
        %969 = vmatpush1.bf16.xpose.msra.mxu0 0
        %970 = vmatprep.subr.bf16.mxu0 0
        %971 = vmatpush1.bf16.xpose.msra.mxu0 0
        %972 = vmatprep.subr.bf16.mxu0 0
        %973 = vmatpush1.bf16.xpose.msra.mxu0 0
        %974 = vmatprep.subr.bf16.mxu0 0
        %975 = vmatpush1.bf16.xpose.msra.mxu0 0
        %976 = vmatprep.subr.bf16.mxu0 0
        %977 = vmatpush1.bf16.xpose.msra.mxu0 0
        %978 = vmatprep.subr.bf16.mxu0 0
        %979 = vmatpush1.bf16.xpose.msra.mxu0 0
        %980 = vmatprep.subr.bf16.mxu0 0
        %981 = vmatpush1.bf16.xpose.msra.mxu0 0
        %982 = vmatprep.subr.bf16.mxu0 0
        %983 = vmatpush1.bf16.xpose.msra.mxu0 0
        %984 = vmatprep.subr.bf16.mxu0 0
        %985 = vmatpush1.bf16.xpose.msra.mxu0 0
        %986 = vmatprep.subr.bf16.mxu0 0
        %987 = vmatpush1.bf16.xpose.msra.mxu0 0
        %988 = vmatprep.subr.bf16.mxu0 0
        %989 = vmatpush1.bf16.xpose.msra.mxu0 0
        %990 = vmatprep.subr.bf16.mxu0 0
        %991 = vmatpush1.bf16.xpose.msra.mxu0 0
        %992 = vmatprep.subr.bf16.mxu0 0
        %993 = vmatpush1.bf16.xpose.msra.mxu0 0
        %994 = vmatprep.subr.bf16.mxu0 0
        %995 = vmatpush1.bf16.xpose.msra.mxu0 0
        %996 = vmatprep.mubr.bf16.mxu0 0
        %997 = vmatmul.mubr.bf16.gmra.mrb[0].mxu0 %v959
        %v998 = vpop.f32.mrb[0].mxu0
        %v999 = vadd.f32 %v952, %v998
        %v1000 = vpop.f32.mrb[0].mxu0
        %v1001 = vpop.f32.mrb[0].mxu0
        %v1002 = vpop.f32.mrb[0].mxu0
        %1003 = vdwg.mxu0
        %1004 = vset.pattern.permute.xlu0 10
        %1005 = vperm.xlu0 %1004, %v664
        %v1006 = vpop.permute.xlu0 %1005
        %v1008 = vsel %vm740, %v1006, 0.0
        %v1009 = vadd.f32 %v999, %v1008
        %1010 = vset.pattern.permute.xlu0 11
        %1011 = vperm.xlu0 %1010, %v664
        %v1012 = vpop.permute.xlu0 %1011
        %v1014 = vsel %vm747, %v1012, 0.0
        %v1015 = vadd.f32 %v1009, %v1014
        %1016 = vset.pattern.permute.xlu0 12
        %1017 = vperm.xlu0 %1016, %v664
        %v1018 = vpop.permute.xlu0 %1017
        %v1020 = vsel %vm754, %v1018, 0.0
        %v1021 = vadd.f32 %v1015, %v1020
        %1022 = vset.pattern.permute.xlu0 13
        %1023 = vperm.xlu0 %1022, %v664
        %v1024 = vpop.permute.xlu0 %1023
        %v1026 = vsel %vm761, %v1024, 0.0
        %v1027 = vadd.f32 %v1021, %v1026
        %1028 = vset.pattern.permute.xlu0 14
        %1029 = vperm.xlu0 %1028, %v664
        %v1030 = vpop.permute.xlu0 %1029
        %v1032 = vsel %vm768, %v1030, 0.0
        %v1033 = vadd.f32 %v1027, %v1032
        %1034 = vset.pattern.permute.xlu0 15
        %1035 = vperm.xlu0 %1034, %v664
        %v1036 = vpop.permute.xlu0 %1035
        %v1038 = vsel %vm775, %v1036, 0.0
        %v1039 = vadd.f32 %v1033, %v1038
        %1040 = vset.pattern.permute.xlu0 16
        %1041 = vperm.xlu0 %1040, %v664
        %v1042 = vpop.permute.xlu0 %1041
        %v1044 = vsel %vm782, %v1042, 0.0
        %v1045 = vadd.f32 %v1039, %v1044
        %1046 = vset.pattern.permute.xlu0 17
        %1047 = vperm.xlu0 %1046, %v664
        %v1048 = vpop.permute.xlu0 %1047
        %v1050 = vsel %vm789, %v1048, 0.0
        %v1051 = vadd.f32 %v1045, %v1050
        %v1052 = vsel %vm680, %v1051, -10000.0
        %v1053 = vsel %vm797, %v1052, -inf
        %1054 = vmax.xlane.f32.xlu0 %v1053
        %v1055 = vpop.xlane.xlu0 %1054
        %v1056 = vsub.f32 %v1052, %v1055
        %v1057 = vmul.f32 %v1056, 1.442695
        %v1058 = vpow.pop %v1057
        %v1059 = vsel %vm797, %v1058, 0.0
        %1060 = vadd.xlane.f32.xlu0 %v1059
        %v1061 = vpop.xlane.xlu0 %1060
        %v1062 = vrcp.pop %v1061
        %v1063 = vmul.f32 1.0, %v1062
        %v1064 = vmul.f32 %v1058, %v1063
        %v1065 = vpack.c.bf16 %v1064, %v1064
        %v1066 = vsel %vm687, %v1064, 0.0
        %v1067 = vsel %vm797, %v1066, 0.0
        %1068 = vadd.xlane.f32.xlu0 %v1067
        %v1069 = vpop.xlane.xlu0 %1068
        %v1070 = vmul.f32 %v1069, %v818
        %1071 = vrot.lane.b32.xlu0 %v609, 88
        %v1072 = vpop.permute.xlu0 %1071
        %v1075 = vsel %vm797, %v1065, 0
        %1077 = vmatprep.subr.bf16.mxu0 0
        %1078 = vmatpush1.bf16.msra.mxu0 %v1072
        %1079 = vmatprep.subr.bf16.mxu0 0
        %1080 = vmatpush1.bf16.msra.mxu0 0
        %1081 = vmatprep.subr.bf16.mxu0 0
        %1082 = vmatpush1.bf16.msra.mxu0 0
        %1083 = vmatprep.subr.bf16.mxu0 0
        %1084 = vmatpush1.bf16.msra.mxu0 0
        %1085 = vmatprep.subr.bf16.mxu0 0
        %1086 = vmatpush1.bf16.msra.mxu0 0
        %1087 = vmatprep.subr.bf16.mxu0 0
        %1088 = vmatpush1.bf16.msra.mxu0 0
        %1089 = vmatprep.subr.bf16.mxu0 0
        %1090 = vmatpush1.bf16.msra.mxu0 0
        %1091 = vmatprep.subr.bf16.mxu0 0
        %1092 = vmatpush1.bf16.msra.mxu0 0
        %1093 = vmatprep.subr.bf16.mxu0 0
        %1094 = vmatpush1.bf16.msra.mxu0 0
        %1095 = vmatprep.subr.bf16.mxu0 0
        %1096 = vmatpush1.bf16.msra.mxu0 0
        %1097 = vmatprep.subr.bf16.mxu0 0
        %1098 = vmatpush1.bf16.msra.mxu0 0
        %1099 = vmatprep.subr.bf16.mxu0 0
        %1100 = vmatpush1.bf16.msra.mxu0 0
        %1101 = vmatprep.subr.bf16.mxu0 0
        %1102 = vmatpush1.bf16.msra.mxu0 0
        %1103 = vmatprep.subr.bf16.mxu0 0
        %1104 = vmatpush1.bf16.msra.mxu0 0
        %1105 = vmatprep.subr.bf16.mxu0 0
        %1106 = vmatpush1.bf16.msra.mxu0 0
        %1107 = vmatprep.subr.bf16.mxu0 0
        %1108 = vmatpush1.bf16.msra.mxu0 0
        %1109 = vmatprep.mubr.bf16.mxu0 0
        %1110 = vmatmul.mubr.bf16.gmra.mrb[0].mxu0 %v1075
        %v1111 = vpop.f32.mrb[0].mxu0
        %v1112 = vadd.f32 %v1070, %v1111
        %v1113 = vpop.f32.mrb[0].mxu0
        %v1114 = vpop.f32.mrb[0].mxu0
        %v1115 = vpop.f32.mrb[0].mxu0
        %1116 = vdwg.mxu0
        %v1117 = vsel %vm740, %v1064, 0.0
        %v1118 = vsel %vm797, %v1117, 0.0
        %1119 = vadd.xlane.f32.xlu0 %v1118
        %v1120 = vpop.xlane.xlu0 %1119
        %v1121 = vmul.f32 %v1120, %v874
        %v1122 = vadd.f32 %v1112, %v1121
        %v1123 = vsel %vm747, %v1064, 0.0
        %v1124 = vsel %vm797, %v1123, 0.0
        %1125 = vadd.xlane.f32.xlu0 %v1124
        %v1126 = vpop.xlane.xlu0 %1125
        %v1127 = vmul.f32 %v1126, %v884
        %v1128 = vadd.f32 %v1122, %v1127
        %v1129 = vsel %vm754, %v1064, 0.0
        %v1130 = vsel %vm797, %v1129, 0.0
        %1131 = vadd.xlane.f32.xlu0 %v1130
        %v1132 = vpop.xlane.xlu0 %1131
        %v1133 = vmul.f32 %v1132, %v894
        %v1134 = vadd.f32 %v1128, %v1133
        %v1135 = vsel %vm761, %v1064, 0.0
        %v1136 = vsel %vm797, %v1135, 0.0
        %1137 = vadd.xlane.f32.xlu0 %v1136
        %v1138 = vpop.xlane.xlu0 %1137
        %v1139 = vmul.f32 %v1138, %v904
        %v1140 = vadd.f32 %v1134, %v1139
        %v1141 = vsel %vm768, %v1064, 0.0
        %v1142 = vsel %vm797, %v1141, 0.0
        %1143 = vadd.xlane.f32.xlu0 %v1142
        %v1144 = vpop.xlane.xlu0 %1143
        %v1145 = vmul.f32 %v1144, %v914
        %v1146 = vadd.f32 %v1140, %v1145
        %v1147 = vsel %vm775, %v1064, 0.0
        %v1148 = vsel %vm797, %v1147, 0.0
        %1149 = vadd.xlane.f32.xlu0 %v1148
        %v1150 = vpop.xlane.xlu0 %1149
        %v1151 = vmul.f32 %v1150, %v924
        %v1152 = vadd.f32 %v1146, %v1151
        %v1153 = vsel %vm782, %v1064, 0.0
        %v1154 = vsel %vm797, %v1153, 0.0
        %1155 = vadd.xlane.f32.xlu0 %v1154
        %v1156 = vpop.xlane.xlu0 %1155
        %v1157 = vmul.f32 %v1156, %v934
        %v1158 = vadd.f32 %v1152, %v1157
        %v1159 = vsel %vm789, %v1064, 0.0
        %v1160 = vsel %vm797, %v1159, 0.0
        %1161 = vadd.xlane.f32.xlu0 %v1160
        %v1162 = vpop.xlane.xlu0 %1161
        %v1163 = vmul.f32 %v1162, %v944
        %v1164 = vadd.f32 %v1158, %v1163
        %v1165 = vpack.c.bf16 %v1164, %v1164
        %v1167 = vsel %vm694, %v1165, 0
        %vm1169 = vcmask 1043456
        %v1171 = vsel %vm1169, %v684, 0
        %1173 = vmatprep.subr.bf16.mxu0 0
        %1174 = vmatpush1.bf16.msra.mxu0 %v1171
        %1175 = vmatprep.subr.bf16.mxu0 0
        %1176 = vmatpush1.bf16.msra.mxu0 0
        %1177 = vmatprep.subr.bf16.mxu0 0
        %1178 = vmatpush1.bf16.msra.mxu0 0
        %1179 = vmatprep.subr.bf16.mxu0 0
        %1180 = vmatpush1.bf16.msra.mxu0 0
        %1181 = vmatprep.subr.bf16.mxu0 0
        %1182 = vmatpush1.bf16.msra.mxu0 0
        %1183 = vmatprep.subr.bf16.mxu0 0
        %1184 = vmatpush1.bf16.msra.mxu0 0
        %1185 = vmatprep.subr.bf16.mxu0 0
        %1186 = vmatpush1.bf16.msra.mxu0 0
        %1187 = vmatprep.subr.bf16.mxu0 0
        %1188 = vmatpush1.bf16.msra.mxu0 0
        %1189 = vmatprep.subr.bf16.mxu0 0
        %1190 = vmatpush1.bf16.msra.mxu0 0
        %1191 = vmatprep.subr.bf16.mxu0 0
        %1192 = vmatpush1.bf16.msra.mxu0 0
        %1193 = vmatprep.subr.bf16.mxu0 0
        %1194 = vmatpush1.bf16.msra.mxu0 0
        %1195 = vmatprep.subr.bf16.mxu0 0
        %1196 = vmatpush1.bf16.msra.mxu0 0
        %1197 = vmatprep.subr.bf16.mxu0 0
        %1198 = vmatpush1.bf16.msra.mxu0 0
        %1199 = vmatprep.subr.bf16.mxu0 0
        %1200 = vmatpush1.bf16.msra.mxu0 0
        %1201 = vmatprep.subr.bf16.mxu0 0
        %1202 = vmatpush1.bf16.msra.mxu0 0
        %1203 = vmatprep.subr.bf16.mxu0 0
        %1204 = vmatpush1.bf16.msra.mxu0 0
        %1205 = vmatprep.mubr.bf16.mxu0 0
        %1206 = vmatmul.mubr.bf16.gmra.mrb[0].mxu0 %v1167
        %v1207 = vpop.f32.mrb[0].mxu0
        %v1208 = vadd.f32 0.0, %v1207
        %v1209 = vpop.f32.mrb[0].mxu0
        %v1210 = vpop.f32.mrb[0].mxu0
        %v1211 = vpop.f32.mrb[0].mxu0
        %1212 = vdwg.mxu0
        %v1214 = vsel %vm694, %v947, 0
        %v1217 = vsel %vm1169, %v683, 0
        %1219 = vmatprep.subr.bf16.mxu0 0
        %1220 = vmatpush1.bf16.msra.mxu0 %v1217
        %1221 = vmatprep.subr.bf16.mxu0 0
        %1222 = vmatpush1.bf16.msra.mxu0 0
        %1223 = vmatprep.subr.bf16.mxu0 0
        %1224 = vmatpush1.bf16.msra.mxu0 0
        %1225 = vmatprep.subr.bf16.mxu0 0
        %1226 = vmatpush1.bf16.msra.mxu0 0
        %1227 = vmatprep.subr.bf16.mxu0 0
        %1228 = vmatpush1.bf16.msra.mxu0 0
        %1229 = vmatprep.subr.bf16.mxu0 0
        %1230 = vmatpush1.bf16.msra.mxu0 0
        %1231 = vmatprep.subr.bf16.mxu0 0
        %1232 = vmatpush1.bf16.msra.mxu0 0
        %1233 = vmatprep.subr.bf16.mxu0 0
        %1234 = vmatpush1.bf16.msra.mxu0 0
        %1235 = vmatprep.subr.bf16.mxu0 0
        %1236 = vmatpush1.bf16.msra.mxu0 0
        %1237 = vmatprep.subr.bf16.mxu0 0
        %1238 = vmatpush1.bf16.msra.mxu0 0
        %1239 = vmatprep.subr.bf16.mxu0 0
        %1240 = vmatpush1.bf16.msra.mxu0 0
        %1241 = vmatprep.subr.bf16.mxu0 0
        %1242 = vmatpush1.bf16.msra.mxu0 0
        %1243 = vmatprep.subr.bf16.mxu0 0
        %1244 = vmatpush1.bf16.msra.mxu0 0
        %1245 = vmatprep.subr.bf16.mxu0 0
        %1246 = vmatpush1.bf16.msra.mxu0 0
        %1247 = vmatprep.subr.bf16.mxu0 0
        %1248 = vmatpush1.bf16.msra.mxu0 0
        %1249 = vmatprep.subr.bf16.mxu0 0
        %1250 = vmatpush1.bf16.msra.mxu0 0
        %1251 = vmatprep.mubr.bf16.mxu0 0
        %1252 = vmatmul.mubr.bf16.gmra.mrb[0].mxu0 %v1214
        %v1253 = vpop.f32.mrb[0].mxu0
        %v1254 = vadd.f32 %v1208, %v1253
        %v1255 = vpop.f32.mrb[0].mxu0
        %v1256 = vpop.f32.mrb[0].mxu0
        %v1257 = vpop.f32.mrb[0].mxu0
        %1258 = vdwg.mxu0
        %1259 = vset.pattern.permute.xlu0 18
        %1260 = vperm.xlu0 %1259, %v664
        %v1261 = vpop.permute.xlu0 %1260
        %v1263 = vsel %vm687, %v1261, 0.0
        %1264 = vrot.lane.b32.xlu0 %v608, 112
        %v1265 = vpop.permute.xlu0 %1264
        %1266 = vrot.lane.b32.xlu0 %v609, 112
        %v1267 = vpop.permute.xlu0 %1266
        %v1269 = vsel %vm694, %v1265, 0
        %v1272 = vsel %vm694, %v1267, 0
        %1274 = vmatprep.subr.bf16.mxu0 0
        %1275 = vmatpush1.bf16.xpose.msra.mxu0 %v1272
        %1276 = vmatprep.subr.bf16.mxu0 0
        %1277 = vmatpush1.bf16.xpose.msra.mxu0 0
        %1278 = vmatprep.subr.bf16.mxu0 0
        %1279 = vmatpush1.bf16.xpose.msra.mxu0 0
        %1280 = vmatprep.subr.bf16.mxu0 0
        %1281 = vmatpush1.bf16.xpose.msra.mxu0 0
        %1282 = vmatprep.subr.bf16.mxu0 0
        %1283 = vmatpush1.bf16.xpose.msra.mxu0 0
        %1284 = vmatprep.subr.bf16.mxu0 0
        %1285 = vmatpush1.bf16.xpose.msra.mxu0 0
        %1286 = vmatprep.subr.bf16.mxu0 0
        %1287 = vmatpush1.bf16.xpose.msra.mxu0 0
        %1288 = vmatprep.subr.bf16.mxu0 0
        %1289 = vmatpush1.bf16.xpose.msra.mxu0 0
        %1290 = vmatprep.subr.bf16.mxu0 0
        %1291 = vmatpush1.bf16.xpose.msra.mxu0 0
        %1292 = vmatprep.subr.bf16.mxu0 0
        %1293 = vmatpush1.bf16.xpose.msra.mxu0 0
        %1294 = vmatprep.subr.bf16.mxu0 0
        %1295 = vmatpush1.bf16.xpose.msra.mxu0 0
        %1296 = vmatprep.subr.bf16.mxu0 0
        %1297 = vmatpush1.bf16.xpose.msra.mxu0 0
        %1298 = vmatprep.subr.bf16.mxu0 0
        %1299 = vmatpush1.bf16.xpose.msra.mxu0 0
        %1300 = vmatprep.subr.bf16.mxu0 0
        %1301 = vmatpush1.bf16.xpose.msra.mxu0 0
        %1302 = vmatprep.subr.bf16.mxu0 0
        %1303 = vmatpush1.bf16.xpose.msra.mxu0 0
        %1304 = vmatprep.subr.bf16.mxu0 0
        %1305 = vmatpush1.bf16.xpose.msra.mxu0 0
        %1306 = vmatprep.mubr.bf16.mxu0 0
        %1307 = vmatmul.mubr.bf16.gmra.mrb[0].mxu0 %v1269
        %v1308 = vpop.f32.mrb[0].mxu0
        %v1309 = vadd.f32 %v1263, %v1308
        %v1310 = vpop.f32.mrb[0].mxu0
        %v1311 = vpop.f32.mrb[0].mxu0
        %v1312 = vpop.f32.mrb[0].mxu0
        %1313 = vdwg.mxu0
        %1314 = vset.pattern.permute.xlu0 19
        %1315 = vperm.xlu0 %1314, %v664
        %v1316 = vpop.permute.xlu0 %1315
        %v1318 = vsel %vm740, %v1316, 0.0
        %v1319 = vadd.f32 %v1309, %v1318
        %1320 = vset.pattern.permute.xlu0 20
        %1321 = vperm.xlu0 %1320, %v664
        %v1322 = vpop.permute.xlu0 %1321
        %v1324 = vsel %vm747, %v1322, 0.0
        %v1325 = vadd.f32 %v1319, %v1324
        %1326 = vset.pattern.permute.xlu0 21
        %1327 = vperm.xlu0 %1326, %v664
        %v1328 = vpop.permute.xlu0 %1327
        %v1330 = vsel %vm754, %v1328, 0.0
        %v1331 = vadd.f32 %v1325, %v1330
        %1332 = vset.pattern.permute.xlu0 22
        %1333 = vperm.xlu0 %1332, %v664
        %v1334 = vpop.permute.xlu0 %1333
        %v1336 = vsel %vm761, %v1334, 0.0
        %v1337 = vadd.f32 %v1331, %v1336
        %1338 = vset.pattern.permute.xlu0 23
        %1339 = vperm.xlu0 %1338, %v664
        %v1340 = vpop.permute.xlu0 %1339
        %v1342 = vsel %vm768, %v1340, 0.0
        %v1343 = vadd.f32 %v1337, %v1342
        %1344 = vset.pattern.permute.xlu0 24
        %1345 = vperm.xlu0 %1344, %v664
        %v1346 = vpop.permute.xlu0 %1345
        %v1348 = vsel %vm775, %v1346, 0.0
        %v1349 = vadd.f32 %v1343, %v1348
        %1350 = vset.pattern.permute.xlu0 25
        %1351 = vperm.xlu0 %1350, %v664
        %v1352 = vpop.permute.xlu0 %1351
        %v1354 = vsel %vm782, %v1352, 0.0
        %v1355 = vadd.f32 %v1349, %v1354
        %1356 = vset.pattern.permute.xlu0 26
        %1357 = vperm.xlu0 %1356, %v664
        %v1358 = vpop.permute.xlu0 %1357
        %v1360 = vsel %vm789, %v1358, 0.0
        %v1361 = vadd.f32 %v1355, %v1360
        %v1362 = vsel %vm680, %v1361, -10000.0
        %v1363 = vsel %vm797, %v1362, -inf
        %1364 = vmax.xlane.f32.xlu0 %v1363
        %v1365 = vpop.xlane.xlu0 %1364
        %v1366 = vsub.f32 %v1362, %v1365
        %v1367 = vmul.f32 %v1366, 1.442695
        %v1368 = vpow.pop %v1367
        %v1369 = vsel %vm797, %v1368, 0.0
        %1370 = vadd.xlane.f32.xlu0 %v1369
        %v1371 = vpop.xlane.xlu0 %1370
        %v1372 = vrcp.pop %v1371
        %v1373 = vmul.f32 1.0, %v1372
        %v1374 = vmul.f32 %v1368, %v1373
        %v1375 = vpack.c.bf16 %v1374, %v1374
        %v1376 = vsel %vm687, %v1374, 0.0
        %v1377 = vsel %vm797, %v1376, 0.0
        %1378 = vadd.xlane.f32.xlu0 %v1377
        %v1379 = vpop.xlane.xlu0 %1378
        %v1380 = vmul.f32 %v1379, %v818
        %1381 = vrot.lane.b32.xlu0 %v609, 80
        %v1382 = vpop.permute.xlu0 %1381
        %v1385 = vsel %vm797, %v1375, 0
        %1387 = vmatprep.subr.bf16.mxu0 0
        %1388 = vmatpush1.bf16.msra.mxu0 %v1382
        %1389 = vmatprep.subr.bf16.mxu0 0
        %1390 = vmatpush1.bf16.msra.mxu0 0
        %1391 = vmatprep.subr.bf16.mxu0 0
        %1392 = vmatpush1.bf16.msra.mxu0 0
        %1393 = vmatprep.subr.bf16.mxu0 0
        %1394 = vmatpush1.bf16.msra.mxu0 0
        %1395 = vmatprep.subr.bf16.mxu0 0
        %1396 = vmatpush1.bf16.msra.mxu0 0
        %1397 = vmatprep.subr.bf16.mxu0 0
        %1398 = vmatpush1.bf16.msra.mxu0 0
        %1399 = vmatprep.subr.bf16.mxu0 0
        %1400 = vmatpush1.bf16.msra.mxu0 0
        %1401 = vmatprep.subr.bf16.mxu0 0
        %1402 = vmatpush1.bf16.msra.mxu0 0
        %1403 = vmatprep.subr.bf16.mxu0 0
        %1404 = vmatpush1.bf16.msra.mxu0 0
        %1405 = vmatprep.subr.bf16.mxu0 0
        %1406 = vmatpush1.bf16.msra.mxu0 0
        %1407 = vmatprep.subr.bf16.mxu0 0
        %1408 = vmatpush1.bf16.msra.mxu0 0
        %1409 = vmatprep.subr.bf16.mxu0 0
        %1410 = vmatpush1.bf16.msra.mxu0 0
        %1411 = vmatprep.subr.bf16.mxu0 0
        %1412 = vmatpush1.bf16.msra.mxu0 0
        %1413 = vmatprep.subr.bf16.mxu0 0
        %1414 = vmatpush1.bf16.msra.mxu0 0
        %1415 = vmatprep.subr.bf16.mxu0 0
        %1416 = vmatpush1.bf16.msra.mxu0 0
        %1417 = vmatprep.subr.bf16.mxu0 0
        %1418 = vmatpush1.bf16.msra.mxu0 0
        %1419 = vmatprep.mubr.bf16.mxu0 0
        %1420 = vmatmul.mubr.bf16.gmra.mrb[0].mxu0 %v1385
        %v1421 = vpop.f32.mrb[0].mxu0
        %v1422 = vadd.f32 %v1380, %v1421
        %v1423 = vpop.f32.mrb[0].mxu0
        %v1424 = vpop.f32.mrb[0].mxu0
        %v1425 = vpop.f32.mrb[0].mxu0
        %1426 = vdwg.mxu0
        %v1427 = vsel %vm740, %v1374, 0.0
        %v1428 = vsel %vm797, %v1427, 0.0
        %1429 = vadd.xlane.f32.xlu0 %v1428
        %v1430 = vpop.xlane.xlu0 %1429
        %v1431 = vmul.f32 %v1430, %v874
        %v1432 = vadd.f32 %v1422, %v1431
        %v1433 = vsel %vm747, %v1374, 0.0
        %v1434 = vsel %vm797, %v1433, 0.0
        %1435 = vadd.xlane.f32.xlu0 %v1434
        %v1436 = vpop.xlane.xlu0 %1435
        %v1437 = vmul.f32 %v1436, %v884
        %v1438 = vadd.f32 %v1432, %v1437
        %v1439 = vsel %vm754, %v1374, 0.0
        %v1440 = vsel %vm797, %v1439, 0.0
        %1441 = vadd.xlane.f32.xlu0 %v1440
        %v1442 = vpop.xlane.xlu0 %1441
        %v1443 = vmul.f32 %v1442, %v894
        %v1444 = vadd.f32 %v1438, %v1443
        %v1445 = vsel %vm761, %v1374, 0.0
        %v1446 = vsel %vm797, %v1445, 0.0
        %1447 = vadd.xlane.f32.xlu0 %v1446
        %v1448 = vpop.xlane.xlu0 %1447
        %v1449 = vmul.f32 %v1448, %v904
        %v1450 = vadd.f32 %v1444, %v1449
        %v1451 = vsel %vm768, %v1374, 0.0
        %v1452 = vsel %vm797, %v1451, 0.0
        %1453 = vadd.xlane.f32.xlu0 %v1452
        %v1454 = vpop.xlane.xlu0 %1453
        %v1455 = vmul.f32 %v1454, %v914
        %v1456 = vadd.f32 %v1450, %v1455
        %v1457 = vsel %vm775, %v1374, 0.0
        %v1458 = vsel %vm797, %v1457, 0.0
        %1459 = vadd.xlane.f32.xlu0 %v1458
        %v1460 = vpop.xlane.xlu0 %1459
        %v1461 = vmul.f32 %v1460, %v924
        %v1462 = vadd.f32 %v1456, %v1461
        %v1463 = vsel %vm782, %v1374, 0.0
        %v1464 = vsel %vm797, %v1463, 0.0
        %1465 = vadd.xlane.f32.xlu0 %v1464
        %v1466 = vpop.xlane.xlu0 %1465
        %v1467 = vmul.f32 %v1466, %v934
        %v1468 = vadd.f32 %v1462, %v1467
        %v1469 = vsel %vm789, %v1374, 0.0
        %v1470 = vsel %vm797, %v1469, 0.0
        %1471 = vadd.xlane.f32.xlu0 %v1470
        %v1472 = vpop.xlane.xlu0 %1471
        %v1473 = vmul.f32 %v1472, %v944
        %v1474 = vadd.f32 %v1468, %v1473
        %v1475 = vpack.c.bf16 %v1474, %v1474
        %v1477 = vsel %vm694, %v1475, 0
        %v1480 = vsel %vm1169, %v685, 0
        %1482 = vmatprep.subr.bf16.mxu0 0
        %1483 = vmatpush1.bf16.msra.mxu0 %v1480
        %1484 = vmatprep.subr.bf16.mxu0 0
        %1485 = vmatpush1.bf16.msra.mxu0 0
        %1486 = vmatprep.subr.bf16.mxu0 0
        %1487 = vmatpush1.bf16.msra.mxu0 0
        %1488 = vmatprep.subr.bf16.mxu0 0
        %1489 = vmatpush1.bf16.msra.mxu0 0
        %1490 = vmatprep.subr.bf16.mxu0 0
        %1491 = vmatpush1.bf16.msra.mxu0 0
        %1492 = vmatprep.subr.bf16.mxu0 0
        %1493 = vmatpush1.bf16.msra.mxu0 0
        %1494 = vmatprep.subr.bf16.mxu0 0
        %1495 = vmatpush1.bf16.msra.mxu0 0
        %1496 = vmatprep.subr.bf16.mxu0 0
        %1497 = vmatpush1.bf16.msra.mxu0 0
        %1498 = vmatprep.subr.bf16.mxu0 0
        %1499 = vmatpush1.bf16.msra.mxu0 0
        %1500 = vmatprep.subr.bf16.mxu0 0
        %1501 = vmatpush1.bf16.msra.mxu0 0
        %1502 = vmatprep.subr.bf16.mxu0 0
        %1503 = vmatpush1.bf16.msra.mxu0 0
        %1504 = vmatprep.subr.bf16.mxu0 0
        %1505 = vmatpush1.bf16.msra.mxu0 0
        %1506 = vmatprep.subr.bf16.mxu0 0
        %1507 = vmatpush1.bf16.msra.mxu0 0
        %1508 = vmatprep.subr.bf16.mxu0 0
        %1509 = vmatpush1.bf16.msra.mxu0 0
        %1510 = vmatprep.subr.bf16.mxu0 0
        %1511 = vmatpush1.bf16.msra.mxu0 0
        %1512 = vmatprep.subr.bf16.mxu0 0
        %1513 = vmatpush1.bf16.msra.mxu0 0
        %1514 = vmatprep.mubr.bf16.mxu0 0
        %1515 = vmatmul.mubr.bf16.gmra.mrb[0].mxu0 %v1477
        %v1516 = vpop.f32.mrb[0].mxu0
        %v1517 = vadd.f32 0.0, %v1516
        %v1518 = vpop.f32.mrb[0].mxu0
        %v1519 = vpop.f32.mrb[0].mxu0
        %v1520 = vpop.f32.mrb[0].mxu0
        %1521 = vdwg.mxu0
        %v1522 = vadd.f32 %v1254, %v1517
        %1523 = vset.pattern.permute.xlu0 27
        %1524 = vperm.xlu0 %1523, %v664
        %v1525 = vpop.permute.xlu0 %1524
        %v1527 = vsel %vm687, %v1525, 0.0
        %1528 = vrot.lane.b32.xlu0 %v608, 104
        %v1529 = vpop.permute.xlu0 %1528
        %1530 = vrot.lane.b32.xlu0 %v609, 104
        %v1531 = vpop.permute.xlu0 %1530
        %v1533 = vsel %vm694, %v1529, 0
        %v1536 = vsel %vm694, %v1531, 0
        %1538 = vmatprep.subr.bf16.mxu0 0
        %1539 = vmatpush1.bf16.xpose.msra.mxu0 %v1536
        %1540 = vmatprep.subr.bf16.mxu0 0
        %1541 = vmatpush1.bf16.xpose.msra.mxu0 0
        %1542 = vmatprep.subr.bf16.mxu0 0
        %1543 = vmatpush1.bf16.xpose.msra.mxu0 0
        %1544 = vmatprep.subr.bf16.mxu0 0
        %1545 = vmatpush1.bf16.xpose.msra.mxu0 0
        %1546 = vmatprep.subr.bf16.mxu0 0
        %1547 = vmatpush1.bf16.xpose.msra.mxu0 0
        %1548 = vmatprep.subr.bf16.mxu0 0
        %1549 = vmatpush1.bf16.xpose.msra.mxu0 0
        %1550 = vmatprep.subr.bf16.mxu0 0
        %1551 = vmatpush1.bf16.xpose.msra.mxu0 0
        %1552 = vmatprep.subr.bf16.mxu0 0
        %1553 = vmatpush1.bf16.xpose.msra.mxu0 0
        %1554 = vmatprep.subr.bf16.mxu0 0
        %1555 = vmatpush1.bf16.xpose.msra.mxu0 0
        %1556 = vmatprep.subr.bf16.mxu0 0
        %1557 = vmatpush1.bf16.xpose.msra.mxu0 0
        %1558 = vmatprep.subr.bf16.mxu0 0
        %1559 = vmatpush1.bf16.xpose.msra.mxu0 0
        %1560 = vmatprep.subr.bf16.mxu0 0
        %1561 = vmatpush1.bf16.xpose.msra.mxu0 0
        %1562 = vmatprep.subr.bf16.mxu0 0
        %1563 = vmatpush1.bf16.xpose.msra.mxu0 0
        %1564 = vmatprep.subr.bf16.mxu0 0
        %1565 = vmatpush1.bf16.xpose.msra.mxu0 0
        %1566 = vmatprep.subr.bf16.mxu0 0
        %1567 = vmatpush1.bf16.xpose.msra.mxu0 0
        %1568 = vmatprep.subr.bf16.mxu0 0
        %1569 = vmatpush1.bf16.xpose.msra.mxu0 0
        %1570 = vmatprep.mubr.bf16.mxu0 0
        %1571 = vmatmul.mubr.bf16.gmra.mrb[0].mxu0 %v1533
        %v1572 = vpop.f32.mrb[0].mxu0
        %v1573 = vadd.f32 %v1527, %v1572
        %v1574 = vpop.f32.mrb[0].mxu0
        %v1575 = vpop.f32.mrb[0].mxu0
        %v1576 = vpop.f32.mrb[0].mxu0
        %1577 = vdwg.mxu0
        %1578 = vset.pattern.permute.xlu0 28
        %1579 = vperm.xlu0 %1578, %v664
        %v1580 = vpop.permute.xlu0 %1579
        %v1582 = vsel %vm740, %v1580, 0.0
        %v1583 = vadd.f32 %v1573, %v1582
        %1584 = vset.pattern.permute.xlu0 29
        %1585 = vperm.xlu0 %1584, %v664
        %v1586 = vpop.permute.xlu0 %1585
        %v1588 = vsel %vm747, %v1586, 0.0
        %v1589 = vadd.f32 %v1583, %v1588
        %1590 = vset.pattern.permute.xlu0 30
        %1591 = vperm.xlu0 %1590, %v664
        %v1592 = vpop.permute.xlu0 %1591
        %v1594 = vsel %vm754, %v1592, 0.0
        %v1595 = vadd.f32 %v1589, %v1594
        %1596 = vset.pattern.permute.xlu0 31
        %1597 = vperm.xlu0 %1596, %v664
        %v1598 = vpop.permute.xlu0 %1597
        %v1600 = vsel %vm761, %v1598, 0.0
        %v1601 = vadd.f32 %v1595, %v1600
        %1602 = vset.pattern.permute.xlu0 32
        %1603 = vperm.xlu0 %1602, %v664
        %v1604 = vpop.permute.xlu0 %1603
        %v1606 = vsel %vm768, %v1604, 0.0
        %v1607 = vadd.f32 %v1601, %v1606
        %1608 = vset.pattern.permute.xlu0 33
        %1609 = vperm.xlu0 %1608, %v664
        %v1610 = vpop.permute.xlu0 %1609
        %v1612 = vsel %vm775, %v1610, 0.0
        %v1613 = vadd.f32 %v1607, %v1612
        %1614 = vset.pattern.permute.xlu0 34
        %1615 = vperm.xlu0 %1614, %v664
        %v1616 = vpop.permute.xlu0 %1615
        %v1618 = vsel %vm782, %v1616, 0.0
        %v1619 = vadd.f32 %v1613, %v1618
        %1620 = vset.pattern.permute.xlu0 35
        %1621 = vperm.xlu0 %1620, %v664
        %v1622 = vpop.permute.xlu0 %1621
        %v1624 = vsel %vm789, %v1622, 0.0
        %v1625 = vadd.f32 %v1619, %v1624
        %v1626 = vsel %vm680, %v1625, -10000.0
        %v1627 = vsel %vm797, %v1626, -inf
        %1628 = vmax.xlane.f32.xlu0 %v1627
        %v1629 = vpop.xlane.xlu0 %1628
        %v1630 = vsub.f32 %v1626, %v1629
        %v1631 = vmul.f32 %v1630, 1.442695
        %v1632 = vpow.pop %v1631
        %v1633 = vsel %vm797, %v1632, 0.0
        %1634 = vadd.xlane.f32.xlu0 %v1633
        %v1635 = vpop.xlane.xlu0 %1634
        %v1636 = vrcp.pop %v1635
        %v1637 = vmul.f32 1.0, %v1636
        %v1638 = vmul.f32 %v1632, %v1637
        %v1639 = vpack.c.bf16 %v1638, %v1638
        %v1640 = vsel %vm687, %v1638, 0.0
        %v1641 = vsel %vm797, %v1640, 0.0
        %1642 = vadd.xlane.f32.xlu0 %v1641
        %v1643 = vpop.xlane.xlu0 %1642
        %v1644 = vmul.f32 %v1643, %v818
        %1645 = vrot.lane.b32.xlu0 %v609, 72
        %v1646 = vpop.permute.xlu0 %1645
        %v1649 = vsel %vm797, %v1639, 0
        %1651 = vmatprep.subr.bf16.mxu0 0
        %1652 = vmatpush1.bf16.msra.mxu0 %v1646
        %1653 = vmatprep.subr.bf16.mxu0 0
        %1654 = vmatpush1.bf16.msra.mxu0 0
        %1655 = vmatprep.subr.bf16.mxu0 0
        %1656 = vmatpush1.bf16.msra.mxu0 0
        %1657 = vmatprep.subr.bf16.mxu0 0
        %1658 = vmatpush1.bf16.msra.mxu0 0
        %1659 = vmatprep.subr.bf16.mxu0 0
        %1660 = vmatpush1.bf16.msra.mxu0 0
        %1661 = vmatprep.subr.bf16.mxu0 0
        %1662 = vmatpush1.bf16.msra.mxu0 0
        %1663 = vmatprep.subr.bf16.mxu0 0
        %1664 = vmatpush1.bf16.msra.mxu0 0
        %1665 = vmatprep.subr.bf16.mxu0 0
        %1666 = vmatpush1.bf16.msra.mxu0 0
        %1667 = vmatprep.subr.bf16.mxu0 0
        %1668 = vmatpush1.bf16.msra.mxu0 0
        %1669 = vmatprep.subr.bf16.mxu0 0
        %1670 = vmatpush1.bf16.msra.mxu0 0
        %1671 = vmatprep.subr.bf16.mxu0 0
        %1672 = vmatpush1.bf16.msra.mxu0 0
        %1673 = vmatprep.subr.bf16.mxu0 0
        %1674 = vmatpush1.bf16.msra.mxu0 0
        %1675 = vmatprep.subr.bf16.mxu0 0
        %1676 = vmatpush1.bf16.msra.mxu0 0
        %1677 = vmatprep.subr.bf16.mxu0 0
        %1678 = vmatpush1.bf16.msra.mxu0 0
        %1679 = vmatprep.subr.bf16.mxu0 0
        %1680 = vmatpush1.bf16.msra.mxu0 0
        %1681 = vmatprep.subr.bf16.mxu0 0
        %1682 = vmatpush1.bf16.msra.mxu0 0
        %1683 = vmatprep.mubr.bf16.mxu0 0
        %1684 = vmatmul.mubr.bf16.gmra.mrb[0].mxu0 %v1649
        %v1685 = vpop.f32.mrb[0].mxu0
        %v1686 = vadd.f32 %v1644, %v1685
        %v1687 = vpop.f32.mrb[0].mxu0
        %v1688 = vpop.f32.mrb[0].mxu0
        %v1689 = vpop.f32.mrb[0].mxu0
        %1690 = vdwg.mxu0
        %v1691 = vsel %vm740, %v1638, 0.0
        %v1692 = vsel %vm797, %v1691, 0.0
        %1693 = vadd.xlane.f32.xlu0 %v1692
        %v1694 = vpop.xlane.xlu0 %1693
        %v1695 = vmul.f32 %v1694, %v874
        %v1696 = vadd.f32 %v1686, %v1695
        %v1697 = vsel %vm747, %v1638, 0.0
        %v1698 = vsel %vm797, %v1697, 0.0
        %1699 = vadd.xlane.f32.xlu0 %v1698
        %v1700 = vpop.xlane.xlu0 %1699
        %v1701 = vmul.f32 %v1700, %v884
        %v1702 = vadd.f32 %v1696, %v1701
        %v1703 = vsel %vm754, %v1638, 0.0
        %v1704 = vsel %vm797, %v1703, 0.0
        %1705 = vadd.xlane.f32.xlu0 %v1704
        %v1706 = vpop.xlane.xlu0 %1705
        %v1707 = vmul.f32 %v1706, %v894
        %v1708 = vadd.f32 %v1702, %v1707
        %v1709 = vsel %vm761, %v1638, 0.0
        %v1710 = vsel %vm797, %v1709, 0.0
        %1711 = vadd.xlane.f32.xlu0 %v1710
        %v1712 = vpop.xlane.xlu0 %1711
        %v1713 = vmul.f32 %v1712, %v904
        %v1714 = vadd.f32 %v1708, %v1713
        %v1715 = vsel %vm768, %v1638, 0.0
        %v1716 = vsel %vm797, %v1715, 0.0
        %1717 = vadd.xlane.f32.xlu0 %v1716
        %v1718 = vpop.xlane.xlu0 %1717
        %v1719 = vmul.f32 %v1718, %v914
        %v1720 = vadd.f32 %v1714, %v1719
        %v1721 = vsel %vm775, %v1638, 0.0
        %v1722 = vsel %vm797, %v1721, 0.0
        %1723 = vadd.xlane.f32.xlu0 %v1722
        %v1724 = vpop.xlane.xlu0 %1723
        %v1725 = vmul.f32 %v1724, %v924
        %v1726 = vadd.f32 %v1720, %v1725
        %v1727 = vsel %vm782, %v1638, 0.0
        %v1728 = vsel %vm797, %v1727, 0.0
        %1729 = vadd.xlane.f32.xlu0 %v1728
        %v1730 = vpop.xlane.xlu0 %1729
        %v1731 = vmul.f32 %v1730, %v934
        %v1732 = vadd.f32 %v1726, %v1731
        %v1733 = vsel %vm789, %v1638, 0.0
        %v1734 = vsel %vm797, %v1733, 0.0
        %1735 = vadd.xlane.f32.xlu0 %v1734
        %v1736 = vpop.xlane.xlu0 %1735
        %v1737 = vmul.f32 %v1736, %v944
        %v1738 = vadd.f32 %v1732, %v1737
        %v1739 = vpack.c.bf16 %v1738, %v1738
        %v1741 = vsel %vm694, %v1739, 0
        %v1744 = vsel %vm1169, %v686, 0
        %1746 = vmatprep.subr.bf16.mxu0 0
        %1747 = vmatpush1.bf16.msra.mxu0 %v1744
        %1748 = vmatprep.subr.bf16.mxu0 0
        %1749 = vmatpush1.bf16.msra.mxu0 0
        %1750 = vmatprep.subr.bf16.mxu0 0
        %1751 = vmatpush1.bf16.msra.mxu0 0
        %1752 = vmatprep.subr.bf16.mxu0 0
        %1753 = vmatpush1.bf16.msra.mxu0 0
        %1754 = vmatprep.subr.bf16.mxu0 0
        %1755 = vmatpush1.bf16.msra.mxu0 0
        %1756 = vmatprep.subr.bf16.mxu0 0
        %1757 = vmatpush1.bf16.msra.mxu0 0
        %1758 = vmatprep.subr.bf16.mxu0 0
        %1759 = vmatpush1.bf16.msra.mxu0 0
        %1760 = vmatprep.subr.bf16.mxu0 0
        %1761 = vmatpush1.bf16.msra.mxu0 0
        %1762 = vmatprep.subr.bf16.mxu0 0
        %1763 = vmatpush1.bf16.msra.mxu0 0
        %1764 = vmatprep.subr.bf16.mxu0 0
        %1765 = vmatpush1.bf16.msra.mxu0 0
        %1766 = vmatprep.subr.bf16.mxu0 0
        %1767 = vmatpush1.bf16.msra.mxu0 0
        %1768 = vmatprep.subr.bf16.mxu0 0
        %1769 = vmatpush1.bf16.msra.mxu0 0
        %1770 = vmatprep.subr.bf16.mxu0 0
        %1771 = vmatpush1.bf16.msra.mxu0 0
        %1772 = vmatprep.subr.bf16.mxu0 0
        %1773 = vmatpush1.bf16.msra.mxu0 0
        %1774 = vmatprep.subr.bf16.mxu0 0
        %1775 = vmatpush1.bf16.msra.mxu0 0
        %1776 = vmatprep.subr.bf16.mxu0 0
        %1777 = vmatpush1.bf16.msra.mxu0 0
        %1778 = vmatprep.mubr.bf16.mxu0 0
        %1779 = vmatmul.mubr.bf16.gmra.mrb[0].mxu0 %v1741
        %v1780 = vpop.f32.mrb[0].mxu0
        %v1781 = vadd.f32 0.0, %v1780
        %v1782 = vpop.f32.mrb[0].mxu0
        %v1783 = vpop.f32.mrb[0].mxu0
        %v1784 = vpop.f32.mrb[0].mxu0
        %1785 = vdwg.mxu0
        %v1786 = vadd.f32 %v1522, %v1781
        %v1787 = vadd.f32 %v471, %v1786
        %v1788 = vld [vmem:[#allocation10] sm:$0x1]
        %v1790 = vlaneseq
        %v1791 = vshrl.u32 %v1790, 7
        %v1792 = vsub.s32 0, %v1791
        %v1793 = vrot.slane %v1788, %v1792
        %v1795 = vadd.f32 %v1787, %v1793
        %v1796 = vsel %vm497, %v1795, 0.0
        %1797 = vadd.xlane.f32.xlu0 %v1796
        %v1798 = vpop.xlane.xlu0 %1797
        %v1799 = vrcp.pop 32.0
        %v1800 = vmul.f32 %v1798, %v1799
        %v1801 = vsub.f32 %v1795, %v1800
        %v1802 = vmul.f32 %v1801, %v1801
        %v1803 = vsel %vm497, %v1802, 0.0
        %1804 = vadd.xlane.f32.xlu0 %v1803
        %v1805 = vpop.xlane.xlu0 %1804
        %v1806 = vmul.f32 %v1805, %v1799
        %v1807 = vadd.f32 %v1806, 1e-05
        %v1808 = vrsqrt.pop %v1807
        %v1809 = vmul.f32 %v1801, %v1808
        %v1810 = vld [vmem:[%s10] sm:$0x1]
        %v1812 = vlaneseq
        %v1813 = vshrl.u32 %v1812, 7
        %v1814 = vsub.s32 0, %v1813
        %v1815 = vrot.slane %v1810, %v1814
        %v1817 = vmul.f32 %v1809, %v1815
        %v1818 = vld [vmem:[%s11] sm:$0x1]
        %v1820 = vlaneseq
        %v1821 = vshrl.u32 %v1820, 7
        %v1822 = vsub.s32 0, %v1821
        %v1823 = vrot.slane %v1818, %v1822
        %v1825 = vadd.f32 %v1817, %v1823
        %1826 = vst.msk [vmem:[%s465] sm:$0xff] %vm497, %v1825
        %s1827 = sand.u32 %s295, 1
        %s1828 = scalar_lea.sflag [#allocation6], %s1827
        %s1829 = sand.u32 %s295, 1
        %s1830 = smul.addr %s1829, 8
        %s1831 = scalar_lea.vmem [#allocation12], %s1830
        // Predicated region
        $region81: #{tpu_custom_call.1} parent=63 // pred_check
          %p1832 = pneg %p305
        $region82: #{tpu_custom_call.1} parent=63 // pred_check_branch
          %1834 = sbr.rel (%p1832) target = $region84
        $region83: #{tpu_custom_call.1} parent=63 // pred_region
          %s1836 = ssub.s32 128, 128
          %1837 = vsyncadd %s1828, %s1836
          %s1838 = smul.addr %s41, 2
          %s1839 = sadd.s32 %s42, %s1838
          %s1840 = smul.addr %s1839, 128
          %s1841 = scalar_lea.hbm %s12, %s1840
          %s1843 = sshll.u32 %s1831, 4
          %s1844 = int_to_ptr.vmem [resolvable:$true] %s1843
          %1846 = dma.vmem_to_hbm [thread:$0]  %s1844, 128, %s1841, %s1828
        $region84: #{tpu_custom_call.1} parent=63 // pred_fallthru
          _
      $region64: #{tpu_custom_call.1} parent=5 // pred_fallthru
        _
      %p1847 = scmp.le.s32.totalorder 2, %s32
      // Predicated region
      $region85: #{tpu_custom_call.1} parent=5 // pred_check
        %p1848 = pneg %p1847
      $region86: #{tpu_custom_call.1} parent=5 // pred_check_branch
        %1850 = sbr.rel (%p1848) target = $region88
      $region87: #{tpu_custom_call.1} parent=5 // pred_region
        %s1851 = ssub.s32 %s32, 2
        // Predicated region
        $region89: #{tpu_custom_call.1} parent=87 // pred_check
          %p1852 = pneg %p311
        $region90: #{tpu_custom_call.1} parent=87 // pred_check_branch
          %1854 = sbr.rel (%p1852) target = $region92
        $region91: #{tpu_custom_call.1} parent=87 // pred_region
          %s1855 = sand.u32 %s296, 1
          %s1856 = scalar_lea.sflag [#allocation6], %s1855
          %s1857 = sand.u32 %s296, 1
          %s1858 = smul.addr %s1857, 8
          %s1859 = scalar_lea.vmem [#allocation12], %s1858
          %1860 = dma.done %s1856, 128
        $region92: #{tpu_custom_call.1} parent=87 // pred_fallthru
          _
      $region88: #{tpu_custom_call.1} parent=5 // pred_fallthru
        _
    $region6: #{tpu_custom_call.1} parent=1 // loop_footer
      %s36 = sadd.s32 1, %s32
    $region7: #{tpu_custom_call.1} parent=1 // loop_footer_branch
      %31 = sbr.rel target = $region3
    $region8: #{tpu_custom_call.1} parent=1 // loop_exit
      _
    %1861 = vsyncpa [#allocation5], 1
    %s1862 = scalar_lea.sflag [#allocation5], 1
    %1863 = vsyncpa %s1862, 1
    %1864 = vsyncpa [#allocation8], 1
    %1865 = vsyncpa [#allocation11], 1
    %1866 = vsyncpa [#allocation6], 1
    %s1867 = scalar_lea.sflag [#allocation6], 1
    %1868 = vsyncpa %s1867, 1

</llo_original>
